<compile_context>
chip_gen: v7x
topology: tpu7x:2x2x1
jax: 0.10.0
libtpu: 0.0.40
codegen_flags: <defaults>
</compile_context>

<pallas_src>
import functools

import jax
import jax.numpy as jnp
import numpy as np
from jax import lax
from jax.experimental import pallas as pl
from jax.experimental.pallas import tpu as pltpu


def _round_up(x, m):
    return (x + m - 1) // m * m


def _choose_tile_h(H, W, C, out_cols, out_itemsize):
    """Pick the H tile: matmul M-dim big enough to feed the MXU, while the
    double-buffered working set stays within a v7x-safe VMEM budget."""
    Wp = W + 2
    th = max(1, min(H, max(8, 1024 // Wp)))

    def working_set_bytes(t):
        m_in = (t + 3) * Wp
        m_out = t * Wp
        in_b = m_in * C * 2                        # bf16 input tile
        out_b = m_out * out_cols * out_itemsize    # output tile
        acc_b = m_out * C * 4                      # f32 accumulator scratch
        w_b = 9 * C * C * 2 + C * out_cols * 2     # bf16 weights
        return 2 * (in_b + out_b) + acc_b + w_b    # x2 for double buffering

    budget = 20 * 1024 * 1024
    while th > 1 and working_set_bytes(th) > budget:
        th = max(1, th // 2)
    return th


def _rpn_head_kernel(x_ref, wc_ref, bc_ref, wh_ref, bh_ref, out_ref, acc_ref, *, Wp):
    # x_ref:   ((TH+3)*Wp, C)  bf16 flattened zero-padded row tile (Wp = W + 2)
    # wc_ref:  (9, C, C)       bf16 3x3 conv weights, tap-major, [C_in, C_out]
    # bc_ref:  (1, C)          f32 conv bias
    # wh_ref:  (C, OP)         bf16 fused 1x1 heads (cls | bbox | zero pad), OP % 128 == 0
    # bh_ref:  (1, OP)         f32 fused head bias
    # out_ref: (TH*Wp, OP)     fused head output (pad-column rows are garbage, cropped outside)
    # acc_ref: (TH*Wp, C)      f32 conv accumulator scratch
    M, C = acc_ref.shape

    # 3x3 conv (padding=1) as 9 contiguous-offset matmuls over the flattened tile.
    acc_ref[...] = jnp.broadcast_to(bc_ref[...], (M, C)).astype(jnp.float32)
    for k in range(9):
        ky, kx = divmod(k, 3)
        off = ky * Wp + kx
        acc_ref[...] += jnp.dot(x_ref[off:off + M, :], wc_ref[k],
                                preferred_element_type=jnp.float32)

    # Conv2dNormActivation(norm_layer=None) -> bias (already in acc) + ReLU.
    t = jnp.maximum(acc_ref[...], 0.0).astype(jnp.bfloat16)

    # Fused, lane-dense 1x1 heads (single MXU pass, unmasked full-lane store).
    out = jnp.dot(t, wh_ref[...], preferred_element_type=jnp.float32) + bh_ref[...]
    out_ref[...] = out.astype(out_ref.dtype)


def rpn_head_single_level(feature_nchw, params):
    """RPN head on one feature map (NCHW in / NCHW out, like PyTorch)."""
    w_conv, b_conv, w_cls, b_cls, w_bbox, b_bbox = params
    N, C, H, W = feature_nchw.shape
    A = w_cls.shape[1]
    Wp = W + 2
    OP = _round_up(5 * A, 128)           # lane-dense fused head width
    out_dtype = feature_nchw.dtype
    out_itemsize = jnp.dtype(out_dtype).itemsize

    TH = _choose_tile_h(H, W, C, OP, out_itemsize)
    nH = -(-H // TH)                     # cdiv
    Hp = nH * TH

    # ---- wrapper glue (XLA fuses this into one gather pass) -----------------
    # NCHW -> NHWC, bf16 for the MXU (halves input DMA traffic).
    x = jnp.transpose(feature_nchw, (0, 2, 3, 1)).astype(jnp.bfloat16)
    # rows: 1 top halo + H real + (Hp-H) alignment + 1 bottom halo + 1 spare;
    # cols: 1 left + 1 right halo.  All padding is zeros.
    x_pad = jnp.pad(x, ((0, 0), (1, Hp - H + 2), (1, 1), (0, 0)))
    # Overlapping H tiles (1-row halo + spare), flattened so every 3x3 tap is a
    # contiguous row window of length TH*Wp at static offset ky*Wp + kx.
    tiles = jnp.stack([x_pad[:, i * TH: i * TH + TH + 3] for i in range(nH)], axis=1)
    x_tiles = tiles.reshape(N, nH, (TH + 3) * Wp, C)

    wc = w_conv.astype(jnp.bfloat16)
    bc = b_conv.reshape(1, C).astype(jnp.float32)
    w_heads = jnp.zeros((C, OP), jnp.float32)
    w_heads = w_heads.at[:, :A].set(w_cls).at[:, A:5 * A].set(w_bbox)
    w_heads = w_heads.astype(jnp.bfloat16)
    b_heads = jnp.zeros((1, OP), jnp.float32)
    b_heads = b_heads.at[0, :A].set(b_cls.reshape(-1))
    b_heads = b_heads.at[0, A:5 * A].set(b_bbox.reshape(-1))

    M_in = (TH + 3) * Wp
    M_out = TH * Wp

    out = pl.pallas_call(
        functools.partial(_rpn_head_kernel, Wp=Wp),
        out_shape=jax.ShapeDtypeStruct((N, nH, M_out, OP), out_dtype),
        grid_spec=pltpu.PrefetchScalarGridSpec(
            num_scalar_prefetch=0,
            grid=(N, nH),
            in_specs=[
                pl.BlockSpec((None, None, M_in, C), lambda n, i: (n, i, 0, 0)),
                pl.BlockSpec((9, C, C), lambda n, i: (0, 0, 0)),
                pl.BlockSpec((1, C), lambda n, i: (0, 0)),
                pl.BlockSpec((C, OP), lambda n, i: (0, 0)),
                pl.BlockSpec((1, OP), lambda n, i: (0, 0)),
            ],
            out_specs=pl.BlockSpec((None, None, M_out, OP), lambda n, i: (n, i, 0, 0)),
            scratch_shapes=[pltpu.VMEM((M_out, C), jnp.float32)],
        ),
        compiler_params=pltpu.CompilerParams(
            dimension_semantics=("parallel", "parallel"),
            vmem_limit_bytes=32 * 1024 * 1024,
        ),
    )(x_tiles, wc, bc, w_heads, b_heads)

    # (N, nH, TH*Wp, OP) -> (N, Hp, Wp, OP); crop alignment rows / pad columns.
    out = out.reshape(N, Hp, Wp, OP)[:, :H, :W, :]
    logits = jnp.transpose(out[..., :A], (0, 3, 1, 2))       # (N, A, H, W)
    bbox = jnp.transpose(out[..., A:5 * A], (0, 3, 1, 2))    # (N, 4A, H, W)
    return logits, bbox


_rpn_head_single_level_jit = jax.jit(rpn_head_single_level)


def rpn_head_forward(features, params):
    """features: list of NCHW tensors -> (list of logits, list of bbox_reg)."""
    logits, bbox_reg = [], []
    for feat in features:
        l, b = _rpn_head_single_level_jit(feat, params)
        logits.append(l)
        bbox_reg.append(b)
    return logits, bbox_reg


def init_rpn_head_params(key, in_channels, num_anchors):
    """Deterministic init mirroring the module: normal(std=0.01) weights, zero bias."""
    k1, k2, k3 = jax.random.split(key, 3)
    C, A = in_channels, num_anchors
    w_conv = 0.01 * jax.random.normal(k1, (9, C, C), jnp.float32)   # (tap, Cin, Cout)
    b_conv = jnp.zeros((C,), jnp.float32)
    w_cls = 0.01 * jax.random.normal(k2, (C, A), jnp.float32)
    b_cls = jnp.zeros((A,), jnp.float32)
    w_bbox = 0.01 * jax.random.normal(k3, (C, 4 * A), jnp.float32)
    b_bbox = jnp.zeros((4 * A,), jnp.float32)
    return (w_conv, b_conv, w_cls, b_cls, w_bbox, b_bbox)


def _reference_forward(features, params):
    """Pure-JAX reference (lax conv) with the same bf16-operand / f32-accum
    precision policy as the kernel."""
    w_conv, b_conv, w_cls, b_cls, w_bbox, b_bbox = params
    C = w_conv.shape[1]
    A = w_cls.shape[1]
    w3 = jnp.transpose(w_conv.reshape(3, 3, C, C), (3, 2, 0, 1)).astype(jnp.bfloat16)
    wcls = jnp.transpose(w_cls, (1, 0)).reshape(A, C, 1, 1).astype(jnp.bfloat16)
    wbb = jnp.transpose(w_bbox, (1, 0)).reshape(4 * A, C, 1, 1).astype(jnp.bfloat16)
    logits, bboxes = [], []
    for f in features:
        fb = f.astype(jnp.bfloat16)
        t = lax.conv_general_dilated(fb, w3, (1, 1), ((1, 1), (1, 1)),
                                     dimension_numbers=("NCHW", "OIHW", "NCHW"),
                                     preferred_element_type=jnp.float32)
        t = jnp.maximum(t + b_conv.reshape(1, C, 1, 1), 0.0)
        tb = t.astype(jnp.bfloat16)
        lg = lax.conv_general_dilated(tb, wcls, (1, 1), ((0, 0), (0, 0)),
                                      dimension_numbers=("NCHW", "OIHW", "NCHW"),
                                      preferred_element_type=jnp.float32)
        lg = lg + b_cls.reshape(1, A, 1, 1)
        bb = lax.conv_general_dilated(tb, wbb, (1, 1), ((0, 0), (0, 0)),
                                      dimension_numbers=("NCHW", "OIHW", "NCHW"),
                                      preferred_element_type=jnp.float32)
        bb = bb + b_bbox.reshape(1, 4 * A, 1, 1)
        logits.append(lg)
        bboxes.append(bb)
    return logits, bboxes


if __name__ == "__main__":
    key = jax.random.PRNGKey(0)
    kf1, kf2, kp = jax.random.split(key, 3)

    in_channels = 4
    num_anchors = 3

    # Two FPN-like feature levels, NCHW like PyTorch.
    feat0 = jax.random.normal(kf1, (2, in_channels, 16, 16), jnp.float32)
    feat1 = jax.random.normal(kf2, (2, in_channels, 8, 8), jnp.float32)
    features = [feat0, feat1]

    params = init_rpn_head_params(kp, in_channels, num_anchors)

    logits, bbox_reg = rpn_head_forward(features, params)
    for l in logits:
        jax.block_until_ready(l)
    for b in bbox_reg:
        jax.block_until_ready(b)

    # Correctness check vs pure-JAX reference (same bf16/f32 precision policy).
    ref_logits, ref_bbox = _reference_forward(features, params)
    for got, ref in zip(logits + bbox_reg, ref_logits + ref_bbox):
        assert got.shape == ref.shape, (got.shape, ref.shape)
        np.testing.assert_allclose(np.asarray(got), np.asarray(ref),
                                   rtol=1e-3, atol=2e-5)

    print("KERNEL_OK")
</pallas_src>

<mosaic_0001>
module attributes {stable_mosaic.version = 11 : i64} {
  func.func @_rpn_head_kernel(%arg0: i32, %arg1: i32, %arg2: memref<1x1x342x4xbf16, #tpu.memory_space<vmem>>, %arg3: memref<9x4x4xbf16, #tpu.memory_space<vmem>>, %arg4: memref<1x4xf32, #tpu.memory_space<vmem>>, %arg5: memref<4x128xbf16, #tpu.memory_space<vmem>>, %arg6: memref<1x128xf32, #tpu.memory_space<vmem>>, %arg7: memref<1x1x288x128xf32, #tpu.memory_space<vmem>>, %arg8: memref<288x4xf32, #tpu.memory_space<vmem>>) attributes {dimension_semantics = [#tpu.dimension_semantics<parallel>, #tpu.dimension_semantics<parallel>], iteration_bounds = array<i64: 2, 1>, scalar_prefetch = 0 : i64, scratch_operands = 1 : i64, tpu.core_type = #tpu.core_type<tc>, window_params = [{transform_indices = @transform_0, window_bounds = array<i64: 1, 1, 342, 4>}, {pipeline_mode = #tpu.pipeline_mode<synchronous>, transform_indices = @transform_1, window_bounds = array<i64: 9, 4, 4>}, {pipeline_mode = #tpu.pipeline_mode<synchronous>, transform_indices = @transform_2, window_bounds = array<i64: 1, 4>}, {pipeline_mode = #tpu.pipeline_mode<synchronous>, transform_indices = @transform_3, window_bounds = array<i64: 4, 128>}, {pipeline_mode = #tpu.pipeline_mode<synchronous>, transform_indices = @transform_4, window_bounds = array<i64: 1, 128>}, {transform_indices = @transform_5, window_bounds = array<i64: 1, 1, 288, 128>}]} {
    %c0 = arith.constant 0 : index
    %c0_0 = arith.constant 0 : index
    %0 = vector.load %arg4[%c0, %c0_0] : memref<1x4xf32, #tpu.memory_space<vmem>>, vector<1x4xf32>
    %1 = vector.shape_cast %0 : vector<1x4xf32> to vector<1x4xf32>
    %2 = vector.broadcast %1 : vector<1x4xf32> to vector<288x4xf32>
    %c0_1 = arith.constant 0 : index
    %c0_2 = arith.constant 0 : index
    %3 = vector.load %arg8[%c0_1, %c0_2] : memref<288x4xf32, #tpu.memory_space<vmem>>, vector<288x4xf32>
    tpu.vector_store %arg8[%c0_1, %c0_2], %2 {strides = array<i32>} : memref<288x4xf32, #tpu.memory_space<vmem>>, vector<288x4xf32>,
    %c0_3 = arith.constant 0 : index
    %c0_4 = arith.constant 0 : index
    %4 = vector.load %arg8[%c0_3, %c0_4] : memref<288x4xf32, #tpu.memory_space<vmem>>, vector<288x4xf32>
    %c0_5 = arith.constant 0 : index
    %c0_6 = arith.constant 0 : index
    %c0_7 = arith.constant 0 : index
    %c0_8 = arith.constant 0 : index
    %5 = vector.load %arg2[%c0_5, %c0_6, %c0_7, %c0_8] : memref<1x1x342x4xbf16, #tpu.memory_space<vmem>>, vector<1x1x288x4xbf16>
    %6 = vector.shape_cast %5 : vector<1x1x288x4xbf16> to vector<288x4xbf16>
    %c0_9 = arith.constant 0 : index
    %c0_10 = arith.constant 0 : index
    %c0_11 = arith.constant 0 : index
    %7 = vector.load %arg3[%c0_9, %c0_10, %c0_11] : memref<9x4x4xbf16, #tpu.memory_space<vmem>>, vector<1x4x4xbf16>
    %8 = vector.shape_cast %7 : vector<1x4x4xbf16> to vector<4x4xbf16>
    %cst = arith.constant dense<0.000000e+00> : vector<288x4xf32>
    %9 = tpu.matmul %6, %8, %cst {dimension_numbers = #tpu.dot_dimension_numbers<[1], [0], [0], [1], [0, 0, 1, 1], [], []>} : vector<288x4xbf16>, vector<4x4xbf16>, vector<288x4xf32> -> vector<288x4xf32>
    %10 = arith.addf %4, %9 : vector<288x4xf32>
    %c0_12 = arith.constant 0 : index
    %c0_13 = arith.constant 0 : index
    %11 = vector.load %arg8[%c0_12, %c0_13] : memref<288x4xf32, #tpu.memory_space<vmem>>, vector<288x4xf32>
    tpu.vector_store %arg8[%c0_12, %c0_13], %10 {strides = array<i32>} : memref<288x4xf32, #tpu.memory_space<vmem>>, vector<288x4xf32>,
    %c0_14 = arith.constant 0 : index
    %c0_15 = arith.constant 0 : index
    %12 = vector.load %arg8[%c0_14, %c0_15] : memref<288x4xf32, #tpu.memory_space<vmem>>, vector<288x4xf32>
    %c0_16 = arith.constant 0 : index
    %c0_17 = arith.constant 0 : index
    %c1 = arith.constant 1 : index
    %c0_18 = arith.constant 0 : index
    %13 = vector.load %arg2[%c0_16, %c0_17, %c1, %c0_18] : memref<1x1x342x4xbf16, #tpu.memory_space<vmem>>, vector<1x1x288x4xbf16>
    %14 = vector.shape_cast %13 : vector<1x1x288x4xbf16> to vector<288x4xbf16>
    %c1_19 = arith.constant 1 : index
    %c0_20 = arith.constant 0 : index
    %c0_21 = arith.constant 0 : index
    %15 = vector.load %arg3[%c1_19, %c0_20, %c0_21] : memref<9x4x4xbf16, #tpu.memory_space<vmem>>, vector<1x4x4xbf16>
    %16 = vector.shape_cast %15 : vector<1x4x4xbf16> to vector<4x4xbf16>
    %cst_22 = arith.constant dense<0.000000e+00> : vector<288x4xf32>
    %17 = tpu.matmul %14, %16, %cst_22 {dimension_numbers = #tpu.dot_dimension_numbers<[1], [0], [0], [1], [0, 0, 1, 1], [], []>} : vector<288x4xbf16>, vector<4x4xbf16>, vector<288x4xf32> -> vector<288x4xf32>
    %18 = arith.addf %12, %17 : vector<288x4xf32>
    %c0_23 = arith.constant 0 : index
    %c0_24 = arith.constant 0 : index
    %19 = vector.load %arg8[%c0_23, %c0_24] : memref<288x4xf32, #tpu.memory_space<vmem>>, vector<288x4xf32>
    tpu.vector_store %arg8[%c0_23, %c0_24], %18 {strides = array<i32>} : memref<288x4xf32, #tpu.memory_space<vmem>>, vector<288x4xf32>,
    %c0_25 = arith.constant 0 : index
    %c0_26 = arith.constant 0 : index
    %20 = vector.load %arg8[%c0_25, %c0_26] : memref<288x4xf32, #tpu.memory_space<vmem>>, vector<288x4xf32>
    %c0_27 = arith.constant 0 : index
    %c0_28 = arith.constant 0 : index
    %c2 = arith.constant 2 : index
    %c0_29 = arith.constant 0 : index
    %21 = vector.load %arg2[%c0_27, %c0_28, %c2, %c0_29] : memref<1x1x342x4xbf16, #tpu.memory_space<vmem>>, vector<1x1x288x4xbf16>
    %22 = vector.shape_cast %21 : vector<1x1x288x4xbf16> to vector<288x4xbf16>
    %c2_30 = arith.constant 2 : index
    %c0_31 = arith.constant 0 : index
    %c0_32 = arith.constant 0 : index
    %23 = vector.load %arg3[%c2_30, %c0_31, %c0_32] : memref<9x4x4xbf16, #tpu.memory_space<vmem>>, vector<1x4x4xbf16>
    %24 = vector.shape_cast %23 : vector<1x4x4xbf16> to vector<4x4xbf16>
    %cst_33 = arith.constant dense<0.000000e+00> : vector<288x4xf32>
    %25 = tpu.matmul %22, %24, %cst_33 {dimension_numbers = #tpu.dot_dimension_numbers<[1], [0], [0], [1], [0, 0, 1, 1], [], []>} : vector<288x4xbf16>, vector<4x4xbf16>, vector<288x4xf32> -> vector<288x4xf32>
    %26 = arith.addf %20, %25 : vector<288x4xf32>
    %c0_34 = arith.constant 0 : index
    %c0_35 = arith.constant 0 : index
    %27 = vector.load %arg8[%c0_34, %c0_35] : memref<288x4xf32, #tpu.memory_space<vmem>>, vector<288x4xf32>
    tpu.vector_store %arg8[%c0_34, %c0_35], %26 {strides = array<i32>} : memref<288x4xf32, #tpu.memory_space<vmem>>, vector<288x4xf32>,
    %c0_36 = arith.constant 0 : index
    %c0_37 = arith.constant 0 : index
    %28 = vector.load %arg8[%c0_36, %c0_37] : memref<288x4xf32, #tpu.memory_space<vmem>>, vector<288x4xf32>
    %c0_38 = arith.constant 0 : index
    %c0_39 = arith.constant 0 : index
    %c18 = arith.constant 18 : index
    %c0_40 = arith.constant 0 : index
    %29 = vector.load %arg2[%c0_38, %c0_39, %c18, %c0_40] : memref<1x1x342x4xbf16, #tpu.memory_space<vmem>>, vector<1x1x288x4xbf16>
    %30 = vector.shape_cast %29 : vector<1x1x288x4xbf16> to vector<288x4xbf16>
    %c3 = arith.constant 3 : index
    %c0_41 = arith.constant 0 : index
    %c0_42 = arith.constant 0 : index
    %31 = vector.load %arg3[%c3, %c0_41, %c0_42] : memref<9x4x4xbf16, #tpu.memory_space<vmem>>, vector<1x4x4xbf16>
    %32 = vector.shape_cast %31 : vector<1x4x4xbf16> to vector<4x4xbf16>
    %cst_43 = arith.constant dense<0.000000e+00> : vector<288x4xf32>
    %33 = tpu.matmul %30, %32, %cst_43 {dimension_numbers = #tpu.dot_dimension_numbers<[1], [0], [0], [1], [0, 0, 1, 1], [], []>} : vector<288x4xbf16>, vector<4x4xbf16>, vector<288x4xf32> -> vector<288x4xf32>
    %34 = arith.addf %28, %33 : vector<288x4xf32>
    %c0_44 = arith.constant 0 : index
    %c0_45 = arith.constant 0 : index
    %35 = vector.load %arg8[%c0_44, %c0_45] : memref<288x4xf32, #tpu.memory_space<vmem>>, vector<288x4xf32>
    tpu.vector_store %arg8[%c0_44, %c0_45], %34 {strides = array<i32>} : memref<288x4xf32, #tpu.memory_space<vmem>>, vector<288x4xf32>,
    %c0_46 = arith.constant 0 : index
    %c0_47 = arith.constant 0 : index
    %36 = vector.load %arg8[%c0_46, %c0_47] : memref<288x4xf32, #tpu.memory_space<vmem>>, vector<288x4xf32>
    %c0_48 = arith.constant 0 : index
    %c0_49 = arith.constant 0 : index
    %c19 = arith.constant 19 : index
    %c0_50 = arith.constant 0 : index
    %37 = vector.load %arg2[%c0_48, %c0_49, %c19, %c0_50] : memref<1x1x342x4xbf16, #tpu.memory_space<vmem>>, vector<1x1x288x4xbf16>
    %38 = vector.shape_cast %37 : vector<1x1x288x4xbf16> to vector<288x4xbf16>
    %c4 = arith.constant 4 : index
    %c0_51 = arith.constant 0 : index
    %c0_52 = arith.constant 0 : index
    %39 = vector.load %arg3[%c4, %c0_51, %c0_52] : memref<9x4x4xbf16, #tpu.memory_space<vmem>>, vector<1x4x4xbf16>
    %40 = vector.shape_cast %39 : vector<1x4x4xbf16> to vector<4x4xbf16>
    %cst_53 = arith.constant dense<0.000000e+00> : vector<288x4xf32>
    %41 = tpu.matmul %38, %40, %cst_53 {dimension_numbers = #tpu.dot_dimension_numbers<[1], [0], [0], [1], [0, 0, 1, 1], [], []>} : vector<288x4xbf16>, vector<4x4xbf16>, vector<288x4xf32> -> vector<288x4xf32>
    %42 = arith.addf %36, %41 : vector<288x4xf32>
    %c0_54 = arith.constant 0 : index
    %c0_55 = arith.constant 0 : index
    %43 = vector.load %arg8[%c0_54, %c0_55] : memref<288x4xf32, #tpu.memory_space<vmem>>, vector<288x4xf32>
    tpu.vector_store %arg8[%c0_54, %c0_55], %42 {strides = array<i32>} : memref<288x4xf32, #tpu.memory_space<vmem>>, vector<288x4xf32>,
    %c0_56 = arith.constant 0 : index
    %c0_57 = arith.constant 0 : index
    %44 = vector.load %arg8[%c0_56, %c0_57] : memref<288x4xf32, #tpu.memory_space<vmem>>, vector<288x4xf32>
    %c0_58 = arith.constant 0 : index
    %c0_59 = arith.constant 0 : index
    %c20 = arith.constant 20 : index
    %c0_60 = arith.constant 0 : index
    %45 = vector.load %arg2[%c0_58, %c0_59, %c20, %c0_60] : memref<1x1x342x4xbf16, #tpu.memory_space<vmem>>, vector<1x1x288x4xbf16>
    %46 = vector.shape_cast %45 : vector<1x1x288x4xbf16> to vector<288x4xbf16>
    %c5 = arith.constant 5 : index
    %c0_61 = arith.constant 0 : index
    %c0_62 = arith.constant 0 : index
    %47 = vector.load %arg3[%c5, %c0_61, %c0_62] : memref<9x4x4xbf16, #tpu.memory_space<vmem>>, vector<1x4x4xbf16>
    %48 = vector.shape_cast %47 : vector<1x4x4xbf16> to vector<4x4xbf16>
    %cst_63 = arith.constant dense<0.000000e+00> : vector<288x4xf32>
    %49 = tpu.matmul %46, %48, %cst_63 {dimension_numbers = #tpu.dot_dimension_numbers<[1], [0], [0], [1], [0, 0, 1, 1], [], []>} : vector<288x4xbf16>, vector<4x4xbf16>, vector<288x4xf32> -> vector<288x4xf32>
    %50 = arith.addf %44, %49 : vector<288x4xf32>
    %c0_64 = arith.constant 0 : index
    %c0_65 = arith.constant 0 : index
    %51 = vector.load %arg8[%c0_64, %c0_65] : memref<288x4xf32, #tpu.memory_space<vmem>>, vector<288x4xf32>
    tpu.vector_store %arg8[%c0_64, %c0_65], %50 {strides = array<i32>} : memref<288x4xf32, #tpu.memory_space<vmem>>, vector<288x4xf32>,
    %c0_66 = arith.constant 0 : index
    %c0_67 = arith.constant 0 : index
    %52 = vector.load %arg8[%c0_66, %c0_67] : memref<288x4xf32, #tpu.memory_space<vmem>>, vector<288x4xf32>
    %c0_68 = arith.constant 0 : index
    %c0_69 = arith.constant 0 : index
    %c36 = arith.constant 36 : index
    %c0_70 = arith.constant 0 : index
    %53 = vector.load %arg2[%c0_68, %c0_69, %c36, %c0_70] : memref<1x1x342x4xbf16, #tpu.memory_space<vmem>>, vector<1x1x288x4xbf16>
    %54 = vector.shape_cast %53 : vector<1x1x288x4xbf16> to vector<288x4xbf16>
    %c6 = arith.constant 6 : index
    %c0_71 = arith.constant 0 : index
    %c0_72 = arith.constant 0 : index
    %55 = vector.load %arg3[%c6, %c0_71, %c0_72] : memref<9x4x4xbf16, #tpu.memory_space<vmem>>, vector<1x4x4xbf16>
    %56 = vector.shape_cast %55 : vector<1x4x4xbf16> to vector<4x4xbf16>
    %cst_73 = arith.constant dense<0.000000e+00> : vector<288x4xf32>
    %57 = tpu.matmul %54, %56, %cst_73 {dimension_numbers = #tpu.dot_dimension_numbers<[1], [0], [0], [1], [0, 0, 1, 1], [], []>} : vector<288x4xbf16>, vector<4x4xbf16>, vector<288x4xf32> -> vector<288x4xf32>
    %58 = arith.addf %52, %57 : vector<288x4xf32>
    %c0_74 = arith.constant 0 : index
    %c0_75 = arith.constant 0 : index
    %59 = vector.load %arg8[%c0_74, %c0_75] : memref<288x4xf32, #tpu.memory_space<vmem>>, vector<288x4xf32>
    tpu.vector_store %arg8[%c0_74, %c0_75], %58 {strides = array<i32>} : memref<288x4xf32, #tpu.memory_space<vmem>>, vector<288x4xf32>,
    %c0_76 = arith.constant 0 : index
    %c0_77 = arith.constant 0 : index
    %60 = vector.load %arg8[%c0_76, %c0_77] : memref<288x4xf32, #tpu.memory_space<vmem>>, vector<288x4xf32>
    %c0_78 = arith.constant 0 : index
    %c0_79 = arith.constant 0 : index
    %c37 = arith.constant 37 : index
    %c0_80 = arith.constant 0 : index
    %61 = vector.load %arg2[%c0_78, %c0_79, %c37, %c0_80] : memref<1x1x342x4xbf16, #tpu.memory_space<vmem>>, vector<1x1x288x4xbf16>
    %62 = vector.shape_cast %61 : vector<1x1x288x4xbf16> to vector<288x4xbf16>
    %c7 = arith.constant 7 : index
    %c0_81 = arith.constant 0 : index
    %c0_82 = arith.constant 0 : index
    %63 = vector.load %arg3[%c7, %c0_81, %c0_82] : memref<9x4x4xbf16, #tpu.memory_space<vmem>>, vector<1x4x4xbf16>
    %64 = vector.shape_cast %63 : vector<1x4x4xbf16> to vector<4x4xbf16>
    %cst_83 = arith.constant dense<0.000000e+00> : vector<288x4xf32>
    %65 = tpu.matmul %62, %64, %cst_83 {dimension_numbers = #tpu.dot_dimension_numbers<[1], [0], [0], [1], [0, 0, 1, 1], [], []>} : vector<288x4xbf16>, vector<4x4xbf16>, vector<288x4xf32> -> vector<288x4xf32>
    %66 = arith.addf %60, %65 : vector<288x4xf32>
    %c0_84 = arith.constant 0 : index
    %c0_85 = arith.constant 0 : index
    %67 = vector.load %arg8[%c0_84, %c0_85] : memref<288x4xf32, #tpu.memory_space<vmem>>, vector<288x4xf32>
    tpu.vector_store %arg8[%c0_84, %c0_85], %66 {strides = array<i32>} : memref<288x4xf32, #tpu.memory_space<vmem>>, vector<288x4xf32>,
    %c0_86 = arith.constant 0 : index
    %c0_87 = arith.constant 0 : index
    %68 = vector.load %arg8[%c0_86, %c0_87] : memref<288x4xf32, #tpu.memory_space<vmem>>, vector<288x4xf32>
    %c0_88 = arith.constant 0 : index
    %c0_89 = arith.constant 0 : index
    %c38 = arith.constant 38 : index
    %c0_90 = arith.constant 0 : index
    %69 = vector.load %arg2[%c0_88, %c0_89, %c38, %c0_90] : memref<1x1x342x4xbf16, #tpu.memory_space<vmem>>, vector<1x1x288x4xbf16>
    %70 = vector.shape_cast %69 : vector<1x1x288x4xbf16> to vector<288x4xbf16>
    %c8 = arith.constant 8 : index
    %c0_91 = arith.constant 0 : index
    %c0_92 = arith.constant 0 : index
    %71 = vector.load %arg3[%c8, %c0_91, %c0_92] : memref<9x4x4xbf16, #tpu.memory_space<vmem>>, vector<1x4x4xbf16>
    %72 = vector.shape_cast %71 : vector<1x4x4xbf16> to vector<4x4xbf16>
    %cst_93 = arith.constant dense<0.000000e+00> : vector<288x4xf32>
    %73 = tpu.matmul %70, %72, %cst_93 {dimension_numbers = #tpu.dot_dimension_numbers<[1], [0], [0], [1], [0, 0, 1, 1], [], []>} : vector<288x4xbf16>, vector<4x4xbf16>, vector<288x4xf32> -> vector<288x4xf32>
    %74 = arith.addf %68, %73 : vector<288x4xf32>
    %c0_94 = arith.constant 0 : index
    %c0_95 = arith.constant 0 : index
    %75 = vector.load %arg8[%c0_94, %c0_95] : memref<288x4xf32, #tpu.memory_space<vmem>>, vector<288x4xf32>
    tpu.vector_store %arg8[%c0_94, %c0_95], %74 {strides = array<i32>} : memref<288x4xf32, #tpu.memory_space<vmem>>, vector<288x4xf32>,
    %c0_96 = arith.constant 0 : index
    %c0_97 = arith.constant 0 : index
    %76 = vector.load %arg8[%c0_96, %c0_97] : memref<288x4xf32, #tpu.memory_space<vmem>>, vector<288x4xf32>
    %cst_98 = arith.constant 0.000000e+00 : f32
    %77 = vector.broadcast %cst_98 : f32 to vector<288x4xf32>
    %78 = arith.maximumf %76, %77 : vector<288x4xf32>
    %79 = arith.truncf %78 : vector<288x4xf32> to vector<288x4xbf16>
    %c0_99 = arith.constant 0 : index
    %c0_100 = arith.constant 0 : index
    %80 = vector.load %arg5[%c0_99, %c0_100] : memref<4x128xbf16, #tpu.memory_space<vmem>>, vector<4x128xbf16>
    %cst_101 = arith.constant dense<0.000000e+00> : vector<288x128xf32>
    %81 = tpu.matmul %79, %80, %cst_101 {dimension_numbers = #tpu.dot_dimension_numbers<[1], [0], [0], [1], [0, 0, 1, 1], [], []>} : vector<288x4xbf16>, vector<4x128xbf16>, vector<288x128xf32> -> vector<288x128xf32>
    %c0_102 = arith.constant 0 : index
    %c0_103 = arith.constant 0 : index
    %82 = vector.load %arg6[%c0_102, %c0_103] : memref<1x128xf32, #tpu.memory_space<vmem>>, vector<1x128xf32>
    %83 = vector.broadcast %82 : vector<1x128xf32> to vector<288x128xf32>
    %84 = arith.addf %81, %83 : vector<288x128xf32>
    %c0_104 = arith.constant 0 : index
    %c0_105 = arith.constant 0 : index
    %c0_106 = arith.constant 0 : index
    %c0_107 = arith.constant 0 : index
    %85 = vector.load %arg7[%c0_104, %c0_105, %c0_106, %c0_107] : memref<1x1x288x128xf32, #tpu.memory_space<vmem>>, vector<1x1x288x128xf32>
    %86 = vector.shape_cast %85 : vector<1x1x288x128xf32> to vector<288x128xf32>
    %87 = vector.shape_cast %84 : vector<288x128xf32> to vector<1x1x288x128xf32>
    tpu.vector_store %arg7[%c0_104, %c0_105, %c0_106, %c0_107], %87 {strides = array<i32>} : memref<1x1x288x128xf32, #tpu.memory_space<vmem>>, vector<1x1x288x128xf32>,
    return
  }
  func.func @transform_0(%arg0: i32, %arg1: i32) -> (i32, i32, i32, i32) {
    %c0_i32 = arith.constant 0 : i32
    %c0_i32_0 = arith.constant 0 : i32
    %c0_i32_1 = arith.constant 0 : i32
    return %arg0, %arg1, %c0_i32, %c0_i32_0 : i32, i32, i32, i32
  }
  func.func @transform_1(%arg0: i32, %arg1: i32) -> (i32, i32, i32) {
    %c0_i32 = arith.constant 0 : i32
    %c0_i32_0 = arith.constant 0 : i32
    %c0_i32_1 = arith.constant 0 : i32
    %c0_i32_2 = arith.constant 0 : i32
    return %c0_i32, %c0_i32_0, %c0_i32_1 : i32, i32, i32
  }
  func.func @transform_2(%arg0: i32, %arg1: i32) -> (i32, i32) {
    %c0_i32 = arith.constant 0 : i32
    %c0_i32_0 = arith.constant 0 : i32
    %c0_i32_1 = arith.constant 0 : i32
    return %c0_i32, %c0_i32_0 : i32, i32
  }
  func.func @transform_3(%arg0: i32, %arg1: i32) -> (i32, i32) {
    %c0_i32 = arith.constant 0 : i32
    %c0_i32_0 = arith.constant 0 : i32
    %c0_i32_1 = arith.constant 0 : i32
    return %c0_i32, %c0_i32_0 : i32, i32
  }
  func.func @transform_4(%arg0: i32, %arg1: i32) -> (i32, i32) {
    %c0_i32 = arith.constant 0 : i32
    %c0_i32_0 = arith.constant 0 : i32
    %c0_i32_1 = arith.constant 0 : i32
    return %c0_i32, %c0_i32_0 : i32, i32
  }
  func.func @transform_5(%arg0: i32, %arg1: i32) -> (i32, i32, i32, i32) {
    %c0_i32 = arith.constant 0 : i32
    %c0_i32_0 = arith.constant 0 : i32
    %c0_i32_1 = arith.constant 0 : i32
    return %arg0, %arg1, %c0_i32, %c0_i32_0 : i32, i32, i32, i32
  }
}

</mosaic_0001>

<llo_original>
// kernel: rpn_head_single_level.1
$region0: #{rpn_head_single_level.1}
  #allocation0 [shape = 'u32[]', space=smem, size = 0x4, offset = 0x4, fixed_abs, tag = 'smem constant byte address 0x4 - core index']
  #allocation1 [shape = 'u32[144,128]{1,0:T(1,128)}', space=vmem, size = 0x12000, scoped, tag = 'internal scratch']
  #allocation2 [shape = 'f32[288,4]{1,0:T(8,128)}', space=vmem, size = 0x24000, scoped, tag = 'scratch operand']
  %s0 = inlined_call_operand.vmem [shape: bf16[2,1,342,4], index: 0, kind: input, shape index: {}]
  %s1 = inlined_call_operand.vmem [shape: bf16[9,4,4], index: 1, kind: input, shape index: {}]
  %s2 = inlined_call_operand.vmem [shape: f32[1,4], index: 2, kind: input, shape index: {}]
  %s3 = inlined_call_operand.vmem [shape: bf16[4,128], index: 3, kind: input, shape index: {}]
  %s4 = inlined_call_operand.vmem [shape: f32[1,128], index: 4, kind: input, shape index: {}]
  %s5 = inlined_call_operand.vmem [shape: f32[2,1,288,128], index: 5, kind: output, shape index: {}]
  %s6 = sld [smem:[#allocation0]]
  $region53: #{rpn_head_single_level.1} parent=0
    _
  %s8 = ssub.s32 1, %s6
  %s9 = scalar_select 0, %s8, %s6
  loop: start=0, step=1, limit=4
  $region2: #{rpn_head_single_level.1} parent=0 // loop_pre_header
    _
  $region3: #{rpn_head_single_level.1} parent=0 // loop_header
    %s11 = sphi 0, %s15
    %p12 = scmp.ge.s32.totalorder %s11, 4
    %s18 = sphi 0, %s30
    %s19 = sphi 0, %s26
    %s20 = sphi 0, %s18
    %s21 = sphi 0, %s19
    %s22 = sphi 0, %s20
    %s23 = sphi 0, %s21
    %s35 = sphi 0, %s37
    %s38 = sphi 0, %s35
    %s39 = sphi 0, %s38
    %s55 = sphi 0, %s39
    %s59 = sphi 0, %s59
    %s61 = sphi 0, %s59
    %s62 = sphi 0, %s61
    %s76 = sphi 0, %s62
    %s80 = sphi 0, %s80
    %s82 = sphi 0, %s80
    %s83 = sphi 0, %s82
    %s97 = sphi 0, %s83
    %s101 = sphi 0, %s101
    %s103 = sphi 0, %s101
    %s104 = sphi 0, %s103
    %s118 = sphi 0, %s104
    %s122 = sphi 0, %s122
    %s124 = sphi 0, %s122
    %s125 = sphi 0, %s124
    %s139 = sphi 0, %s125
    %s147 = sphi 0, %s149
    %s150 = sphi 0, %s147
    %s151 = sphi 0, %s150
    %s167 = sphi 0, %s151
  $region4: #{rpn_head_single_level.1} parent=0 // loop_header_branch
    %14 = sbr.rel (%p12) target = $region8
  $region5: #{rpn_head_single_level.1} parent=0 // loop_body
    %s16 = ssub.s32 %s11, 1
    %s17 = ssub.s32 %s11, 2
    %s24 = sadd.s32 1, %s19
    %p25 = scmp.ge.s32.totalorder %s24, 1
    %s26 = scalar_select %p25, 0, %s24
    %s27 = sadd.s32 1, %s18
    %s28 = scalar_select %p25, %s27, %s18
    %p29 = scmp.ge.s32.totalorder %s28, 2
    %s30 = scalar_select %p29, 0, %s28
    %s31 = ssub.s32 %s18, %s30
    %s32 = ssub.s32 %s19, %s26
    %s33 = sor.u32 %s31, %s32
    %p34 = scmp.eq.s32.totalorder %s33, 0
    %s36 = sadd.s32 %s35, 1
    %s37 = scalar_select %p34, %s35, %s36
    %p40 = pneg %p34
    %p41 = scmp.eq.s32.totalorder %s11, 1
    %p42 = por %p40, %p41
    %p43 = scmp.ne.s32.totalorder %s35, %s38
    %p44 = scmp.eq.s32.totalorder %s11, 0
    %p45 = por %p43, %p44
    %p46 = scmp.ne.s32.totalorder %s35, %s38
    %p47 = scmp.eq.s32.totalorder %s16, 1
    %p48 = por %p46, %p47
    %p49 = scmp.ne.s32.totalorder %s38, %s39
    %p50 = scmp.eq.s32.totalorder %s16, 0
    %p51 = por %p49, %p50
    %p52 = scmp.ne.s32.totalorder %s38, %s39
    %p53 = scmp.eq.s32.totalorder %s17, 1
    %p54 = por %p52, %p53
    %p56 = scmp.ne.s32.totalorder %s39, %s55
    %p57 = scmp.eq.s32.totalorder %s17, 0
    %p58 = por %p56, %p57
    %s60 = sadd.s32 %s59, 1
    %p63 = scmp.eq.s32.totalorder %s11, 1
    %p64 = scmp.ne.s32.totalorder %s59, %s61
    %p65 = scmp.eq.s32.totalorder %s11, 0
    %p66 = por %p64, %p65
    %p67 = scmp.ne.s32.totalorder %s59, %s61
    %p68 = scmp.eq.s32.totalorder %s16, 1
    %p69 = por %p67, %p68
    %p70 = scmp.ne.s32.totalorder %s61, %s62
    %p71 = scmp.eq.s32.totalorder %s16, 0
    %p72 = por %p70, %p71
    %p73 = scmp.ne.s32.totalorder %s61, %s62
    %p74 = scmp.eq.s32.totalorder %s17, 1
    %p75 = por %p73, %p74
    %p77 = scmp.ne.s32.totalorder %s62, %s76
    %p78 = scmp.eq.s32.totalorder %s17, 0
    %p79 = por %p77, %p78
    %s81 = sadd.s32 %s80, 1
    %p84 = scmp.eq.s32.totalorder %s11, 1
    %p85 = scmp.ne.s32.totalorder %s80, %s82
    %p86 = scmp.eq.s32.totalorder %s11, 0
    %p87 = por %p85, %p86
    %p88 = scmp.ne.s32.totalorder %s80, %s82
    %p89 = scmp.eq.s32.totalorder %s16, 1
    %p90 = por %p88, %p89
    %p91 = scmp.ne.s32.totalorder %s82, %s83
    %p92 = scmp.eq.s32.totalorder %s16, 0
    %p93 = por %p91, %p92
    %p94 = scmp.ne.s32.totalorder %s82, %s83
    %p95 = scmp.eq.s32.totalorder %s17, 1
    %p96 = por %p94, %p95
    %p98 = scmp.ne.s32.totalorder %s83, %s97
    %p99 = scmp.eq.s32.totalorder %s17, 0
    %p100 = por %p98, %p99
    %s102 = sadd.s32 %s101, 1
    %p105 = scmp.eq.s32.totalorder %s11, 1
    %p106 = scmp.ne.s32.totalorder %s101, %s103
    %p107 = scmp.eq.s32.totalorder %s11, 0
    %p108 = por %p106, %p107
    %p109 = scmp.ne.s32.totalorder %s101, %s103
    %p110 = scmp.eq.s32.totalorder %s16, 1
    %p111 = por %p109, %p110
    %p112 = scmp.ne.s32.totalorder %s103, %s104
    %p113 = scmp.eq.s32.totalorder %s16, 0
    %p114 = por %p112, %p113
    %p115 = scmp.ne.s32.totalorder %s103, %s104
    %p116 = scmp.eq.s32.totalorder %s17, 1
    %p117 = por %p115, %p116
    %p119 = scmp.ne.s32.totalorder %s104, %s118
    %p120 = scmp.eq.s32.totalorder %s17, 0
    %p121 = por %p119, %p120
    %s123 = sadd.s32 %s122, 1
    %p126 = scmp.eq.s32.totalorder %s11, 1
    %p127 = scmp.ne.s32.totalorder %s122, %s124
    %p128 = scmp.eq.s32.totalorder %s11, 0
    %p129 = por %p127, %p128
    %p130 = scmp.ne.s32.totalorder %s122, %s124
    %p131 = scmp.eq.s32.totalorder %s16, 1
    %p132 = por %p130, %p131
    %p133 = scmp.ne.s32.totalorder %s124, %s125
    %p134 = scmp.eq.s32.totalorder %s16, 0
    %p135 = por %p133, %p134
    %p136 = scmp.ne.s32.totalorder %s124, %s125
    %p137 = scmp.eq.s32.totalorder %s17, 1
    %p138 = por %p136, %p137
    %p140 = scmp.ne.s32.totalorder %s125, %s139
    %p141 = scmp.eq.s32.totalorder %s17, 0
    %p142 = por %p140, %p141
    %s143 = ssub.s32 %s18, %s30
    %s144 = ssub.s32 %s19, %s26
    %s145 = sor.u32 %s143, %s144
    %p146 = scmp.eq.s32.totalorder %s145, 0
    %s148 = sadd.s32 %s147, 1
    %s149 = scalar_select %p146, %s147, %s148
    %p152 = pneg %p146
    %p153 = scmp.eq.s32.totalorder %s11, 1
    %p154 = por %p152, %p153
    %p155 = scmp.ne.s32.totalorder %s147, %s150
    %p156 = scmp.eq.s32.totalorder %s11, 0
    %p157 = por %p155, %p156
    %p158 = scmp.ne.s32.totalorder %s147, %s150
    %p159 = scmp.eq.s32.totalorder %s16, 1
    %p160 = por %p158, %p159
    %p161 = scmp.ne.s32.totalorder %s150, %s151
    %p162 = scmp.eq.s32.totalorder %s16, 0
    %p163 = por %p161, %p162
    %p164 = scmp.ne.s32.totalorder %s150, %s151
    %p165 = scmp.eq.s32.totalorder %s17, 1
    %p166 = por %p164, %p165
    %p168 = scmp.ne.s32.totalorder %s151, %s167
    %p169 = scmp.eq.s32.totalorder %s17, 0
    %p170 = por %p168, %p169
    %p171 = scmp.le.s32.totalorder 1, %s11
    %p172 = scmp.lt.s32.totalorder %s11, 3
    %p173 = pnand %p171, %p172
    %p174 = pneg %p173
    // Predicated region
    $region9: #{rpn_head_single_level.1} parent=5 // pred_check
      _
    $region10: #{rpn_head_single_level.1} parent=5 // pred_check_branch
      %176 = sbr.rel (%p173) target = $region12
    $region11: #{rpn_head_single_level.1} parent=5 // pred_region
      %s177 = ssub.s32 %s11, 1
      // Predicated region
      $region13: #{rpn_head_single_level.1} parent=11 // pred_check
        %p178 = pneg %p72
      $region14: #{rpn_head_single_level.1} parent=11 // pred_check_branch
        %180 = sbr.rel (%p178) target = $region16
      $region15: #{rpn_head_single_level.1} parent=11 // pred_region
        _
      $region16: #{rpn_head_single_level.1} parent=11 // pred_fallthru
        _
      // Predicated region
      $region17: #{rpn_head_single_level.1} parent=11 // pred_check
        %p181 = pneg %p93
      $region18: #{rpn_head_single_level.1} parent=11 // pred_check_branch
        %183 = sbr.rel (%p181) target = $region20
      $region19: #{rpn_head_single_level.1} parent=11 // pred_region
        _
      $region20: #{rpn_head_single_level.1} parent=11 // pred_fallthru
        _
      // Predicated region
      $region21: #{rpn_head_single_level.1} parent=11 // pred_check
        %p184 = pneg %p114
      $region22: #{rpn_head_single_level.1} parent=11 // pred_check_branch
        %186 = sbr.rel (%p184) target = $region24
      $region23: #{rpn_head_single_level.1} parent=11 // pred_region
        _
      $region24: #{rpn_head_single_level.1} parent=11 // pred_fallthru
        _
      // Predicated region
      $region25: #{rpn_head_single_level.1} parent=11 // pred_check
        %p187 = pneg %p135
      $region26: #{rpn_head_single_level.1} parent=11 // pred_check_branch
        %189 = sbr.rel (%p187) target = $region28
      $region27: #{rpn_head_single_level.1} parent=11 // pred_region
        _
      $region28: #{rpn_head_single_level.1} parent=11 // pred_fallthru
        _
    $region12: #{rpn_head_single_level.1} parent=5 // pred_fallthru
      _
    %p190 = scmp.lt.s32.totalorder %s11, 2
    // Predicated region
    $region29: #{rpn_head_single_level.1} parent=5 // pred_check
      %p191 = pneg %p190
    $region30: #{rpn_head_single_level.1} parent=5 // pred_check_branch
      %193 = sbr.rel (%p191) target = $region32
    $region31: #{rpn_head_single_level.1} parent=5 // pred_region
      // Predicated region
      $region33: #{rpn_head_single_level.1} parent=31 // pred_check
        %p194 = pneg %p45
      $region34: #{rpn_head_single_level.1} parent=31 // pred_check_branch
        %196 = sbr.rel (%p194) target = $region36
      $region35: #{rpn_head_single_level.1} parent=31 // pred_region
        %p197 = scmp.lt.s32.totalorder %s18, 1
        %s198 = scalar_select %p197, %s18, 1
        %p199 = scmp.lt.s32.totalorder %s19, 0
        %s200 = scalar_select %p199, %s19, 0
        %s201 = smul.addr %s200, 43
        %s202 = smul.addr %s198, 43
        %s203 = sadd.s32 %s201, %s202
        %s204 = smul.addr %s203, 4
        %s205 = scalar_lea.vmem %s0, %s204
      $region36: #{rpn_head_single_level.1} parent=31 // pred_fallthru
        _
    $region32: #{rpn_head_single_level.1} parent=5 // pred_fallthru
      _
    %p206 = scmp.le.s32.totalorder 1, %s11
    %p207 = scmp.lt.s32.totalorder %s11, 3
    %p208 = pnand %p206, %p207
    %p209 = pneg %p208
    // Predicated region
    $region37: #{rpn_head_single_level.1} parent=5 // pred_check
      _
    $region38: #{rpn_head_single_level.1} parent=5 // pred_check_branch
      %211 = sbr.rel (%p208) target = $region40
    $region39: #{rpn_head_single_level.1} parent=5 // pred_region
      %s212 = ssub.s32 %s11, 1
      %p213 = scmp.lt.s32.totalorder %s20, 1
      %s214 = scalar_select %p213, %s20, 1
      %p215 = scmp.lt.s32.totalorder %s21, 0
      %s216 = scalar_select %p215, %s21, 0
      %s217 = smul.addr %s216, 43
      %s218 = smul.addr %s214, 43
      %s219 = sadd.s32 %s217, %s218
      %s220 = smul.addr %s219, 4
      %s221 = scalar_lea.vmem %s0, %s220
      %p222 = pneg %p51
      %p223 = pneg %p48
      %p224 = pneg %p72
      %p225 = pneg %p69
      %p226 = pneg %p93
      %p227 = pneg %p90
      %p228 = pneg %p114
      %p229 = pneg %p111
      %p230 = pneg %p135
      %p231 = pneg %p132
      %p232 = pneg %p163
      %p233 = pneg %p160
      %p234 = scmp.lt.s32.totalorder %s20, 1
      %s235 = scalar_select %p234, %s20, 1
      %p236 = scmp.lt.s32.totalorder %s21, 0
      %s237 = scalar_select %p236, %s21, 0
      %s238 = smul.addr %s237, 36
      %s239 = smul.addr %s235, 36
      %s240 = sadd.s32 %s238, %s239
      %s241 = smul.addr %s240, 8
      %s242 = scalar_lea.vmem %s5, %s241
      %p243 = scmp.lt.s32.totalorder %s20, 1
      %s244 = scalar_select %p243, %s20, 1
      %p245 = scmp.lt.s32.totalorder %s21, 0
      %s246 = scalar_select %p245, %s21, 0
      %s247 = smul.addr %s246, 43
      %s248 = smul.addr %s244, 43
      %s249 = sadd.s32 %s247, %s248
      %s250 = smul.addr %s249, 4
      %s251 = scalar_lea.vmem %s0, %s250
      %p252 = scmp.lt.s32.totalorder %s20, 1
      %s253 = scalar_select %p252, %s20, 1
      %p254 = scmp.lt.s32.totalorder %s21, 0
      %s255 = scalar_select %p254, %s21, 0
      %s256 = smul.addr %s255, 36
      %s257 = smul.addr %s253, 36
      %s258 = sadd.s32 %s256, %s257
      %s259 = smul.addr %s258, 8
      %s260 = scalar_lea.vmem %s5, %s259
      %v262 = vld [vmem:[%s2] sm:$0x1]
      %v264 = vlaneseq
      %v265 = vshrl.u32 %v264, 7
      %v266 = vsub.s32 0, %v265
      %v267 = vrot.slane %v262, %v266
      %vm269 = vcmask 31744
      %270 = vst.msk [vmem:[#allocation2] sm:$0xff] %vm269, %v267
      %271 = vst.msk [vmem:[#allocation2 + $0x8] sm:$0xff] %vm269, %v267
      %272 = vst.msk [vmem:[#allocation2 + $0x10] sm:$0xff] %vm269, %v267
      %273 = vst.msk [vmem:[#allocation2 + $0x18] sm:$0xff] %vm269, %v267
      %274 = vst.msk [vmem:[#allocation2 + $0x20] sm:$0xff] %vm269, %v267
      %275 = vst.msk [vmem:[#allocation2 + $0x28] sm:$0xff] %vm269, %v267
      %276 = vst.msk [vmem:[#allocation2 + $0x30] sm:$0xff] %vm269, %v267
      %277 = vst.msk [vmem:[#allocation2 + $0x38] sm:$0xff] %vm269, %v267
      %278 = vst.msk [vmem:[#allocation2 + $0x40] sm:$0xff] %vm269, %v267
      %279 = vst.msk [vmem:[#allocation2 + $0x48] sm:$0xff] %vm269, %v267
      %280 = vst.msk [vmem:[#allocation2 + $0x50] sm:$0xff] %vm269, %v267
      %281 = vst.msk [vmem:[#allocation2 + $0x58] sm:$0xff] %vm269, %v267
      %282 = vst.msk [vmem:[#allocation2 + $0x60] sm:$0xff] %vm269, %v267
      %283 = vst.msk [vmem:[#allocation2 + $0x68] sm:$0xff] %vm269, %v267
      %284 = vst.msk [vmem:[#allocation2 + $0x70] sm:$0xff] %vm269, %v267
      %285 = vst.msk [vmem:[#allocation2 + $0x78] sm:$0xff] %vm269, %v267
      %286 = vst.msk [vmem:[#allocation2 + $0x80] sm:$0xff] %vm269, %v267
      %287 = vst.msk [vmem:[#allocation2 + $0x88] sm:$0xff] %vm269, %v267
      %288 = vst.msk [vmem:[#allocation2 + $0x90] sm:$0xff] %vm269, %v267
      %289 = vst.msk [vmem:[#allocation2 + $0x98] sm:$0xff] %vm269, %v267
      %290 = vst.msk [vmem:[#allocation2 + $0xa0] sm:$0xff] %vm269, %v267
      %291 = vst.msk [vmem:[#allocation2 + $0xa8] sm:$0xff] %vm269, %v267
      %292 = vst.msk [vmem:[#allocation2 + $0xb0] sm:$0xff] %vm269, %v267
      %293 = vst.msk [vmem:[#allocation2 + $0xb8] sm:$0xff] %vm269, %v267
      %294 = vst.msk [vmem:[#allocation2 + $0xc0] sm:$0xff] %vm269, %v267
      %295 = vst.msk [vmem:[#allocation2 + $0xc8] sm:$0xff] %vm269, %v267
      %296 = vst.msk [vmem:[#allocation2 + $0xd0] sm:$0xff] %vm269, %v267
      %297 = vst.msk [vmem:[#allocation2 + $0xd8] sm:$0xff] %vm269, %v267
      %298 = vst.msk [vmem:[#allocation2 + $0xe0] sm:$0xff] %vm269, %v267
      %299 = vst.msk [vmem:[#allocation2 + $0xe8] sm:$0xff] %vm269, %v267
      %300 = vst.msk [vmem:[#allocation2 + $0xf0] sm:$0xff] %vm269, %v267
      %301 = vst.msk [vmem:[#allocation2 + $0xf8] sm:$0xff] %vm269, %v267
      %302 = vst.msk [vmem:[#allocation2 + $0x100] sm:$0xff] %vm269, %v267
      %303 = vst.msk [vmem:[#allocation2 + $0x108] sm:$0xff] %vm269, %v267
      %304 = vst.msk [vmem:[#allocation2 + $0x110] sm:$0xff] %vm269, %v267
      %305 = vst.msk [vmem:[#allocation2 + $0x118] sm:$0xff] %vm269, %v267
      %v306 = vld [vmem:[#allocation2] sm:$0xff]
      %v307 = vld [vmem:[#allocation2 + $0x8] sm:$0xff]
      %v308 = vld [vmem:[#allocation2 + $0x10] sm:$0xff]
      %v309 = vld [vmem:[#allocation2 + $0x18] sm:$0xff]
      %v310 = vld [vmem:[#allocation2 + $0x20] sm:$0xff]
      %v311 = vld [vmem:[#allocation2 + $0x28] sm:$0xff]
      %v312 = vld [vmem:[#allocation2 + $0x30] sm:$0xff]
      %v313 = vld [vmem:[#allocation2 + $0x38] sm:$0xff]
      %v314 = vld [vmem:[#allocation2 + $0x40] sm:$0xff]
      %v315 = vld [vmem:[#allocation2 + $0x48] sm:$0xff]
      %v316 = vld [vmem:[#allocation2 + $0x50] sm:$0xff]
      %v317 = vld [vmem:[#allocation2 + $0x58] sm:$0xff]
      %v318 = vld [vmem:[#allocation2 + $0x60] sm:$0xff]
      %v319 = vld [vmem:[#allocation2 + $0x68] sm:$0xff]
      %v320 = vld [vmem:[#allocation2 + $0x70] sm:$0xff]
      %v321 = vld [vmem:[#allocation2 + $0x78] sm:$0xff]
      %v322 = vld [vmem:[#allocation2 + $0x80] sm:$0xff]
      %v323 = vld [vmem:[#allocation2 + $0x88] sm:$0xff]
      %v324 = vld [vmem:[#allocation2 + $0x90] sm:$0xff]
      %v325 = vld [vmem:[#allocation2 + $0x98] sm:$0xff]
      %v326 = vld [vmem:[#allocation2 + $0xa0] sm:$0xff]
      %v327 = vld [vmem:[#allocation2 + $0xa8] sm:$0xff]
      %v328 = vld [vmem:[#allocation2 + $0xb0] sm:$0xff]
      %v329 = vld [vmem:[#allocation2 + $0xb8] sm:$0xff]
      %v330 = vld [vmem:[#allocation2 + $0xc0] sm:$0xff]
      %v331 = vld [vmem:[#allocation2 + $0xc8] sm:$0xff]
      %v332 = vld [vmem:[#allocation2 + $0xd0] sm:$0xff]
      %v333 = vld [vmem:[#allocation2 + $0xd8] sm:$0xff]
      %v334 = vld [vmem:[#allocation2 + $0xe0] sm:$0xff]
      %v335 = vld [vmem:[#allocation2 + $0xe8] sm:$0xff]
      %v336 = vld [vmem:[#allocation2 + $0xf0] sm:$0xff]
      %v337 = vld [vmem:[#allocation2 + $0xf8] sm:$0xff]
      %v338 = vld [vmem:[#allocation2 + $0x100] sm:$0xff]
      %v339 = vld [vmem:[#allocation2 + $0x108] sm:$0xff]
      %v340 = vld [vmem:[#allocation2 + $0x110] sm:$0xff]
      %v341 = vld [vmem:[#allocation2 + $0x118] sm:$0xff]
      %v342 = vld [vmem:[%s251] sm:$0xf]
      %v343 = vld [vmem:[%s251 + $0x4] sm:$0xf]
      %v344 = vld [vmem:[%s251 + $0x8] sm:$0xf]
      %v345 = vld [vmem:[%s251 + $0xc] sm:$0xf]
      %v346 = vld [vmem:[%s251 + $0x10] sm:$0xf]
      %v347 = vld [vmem:[%s251 + $0x14] sm:$0xf]
      %v348 = vld [vmem:[%s251 + $0x18] sm:$0xf]
      %v349 = vld [vmem:[%s251 + $0x1c] sm:$0xf]
      %v350 = vld [vmem:[%s251 + $0x20] sm:$0xf]
      %v351 = vld [vmem:[%s251 + $0x24] sm:$0xf]
      %v352 = vld [vmem:[%s251 + $0x28] sm:$0xf]
      %v353 = vld [vmem:[%s251 + $0x2c] sm:$0xf]
      %v354 = vld [vmem:[%s251 + $0x30] sm:$0xf]
      %v355 = vld [vmem:[%s251 + $0x34] sm:$0xf]
      %v356 = vld [vmem:[%s251 + $0x38] sm:$0xf]
      %v357 = vld [vmem:[%s251 + $0x3c] sm:$0xf]
      %v358 = vld [vmem:[%s251 + $0x40] sm:$0xf]
      %v359 = vld [vmem:[%s251 + $0x44] sm:$0xf]
      %v360 = vld [vmem:[%s251 + $0x48] sm:$0xf]
      %v361 = vld [vmem:[%s251 + $0x4c] sm:$0xf]
      %v362 = vld [vmem:[%s251 + $0x50] sm:$0xf]
      %v363 = vld [vmem:[%s251 + $0x54] sm:$0xf]
      %v364 = vld [vmem:[%s251 + $0x58] sm:$0xf]
      %v365 = vld [vmem:[%s251 + $0x5c] sm:$0xf]
      %v366 = vld [vmem:[%s251 + $0x60] sm:$0xf]
      %v367 = vld [vmem:[%s251 + $0x64] sm:$0xf]
      %v368 = vld [vmem:[%s251 + $0x68] sm:$0xf]
      %v369 = vld [vmem:[%s251 + $0x6c] sm:$0xf]
      %v370 = vld [vmem:[%s251 + $0x70] sm:$0xf]
      %v371 = vld [vmem:[%s251 + $0x74] sm:$0xf]
      %v372 = vld [vmem:[%s251 + $0x78] sm:$0xf]
      %v373 = vld [vmem:[%s251 + $0x7c] sm:$0xf]
      %v374 = vld [vmem:[%s251 + $0x80] sm:$0xf]
      %v375 = vld [vmem:[%s251 + $0x84] sm:$0xf]
      %v376 = vld [vmem:[%s251 + $0x88] sm:$0xf]
      %v377 = vld [vmem:[%s251 + $0x8c] sm:$0xf]
      %v378 = vld [vmem:[%s1] sm:$0x3]
      %v415 = vunpack.c.l.b16 %v342
      %v416 = vunpack.c.l.b16 %v343
      %v417 = vunpack.c.l.b16 %v344
      %v418 = vunpack.c.l.b16 %v345
      %v419 = vunpack.c.l.b16 %v346
      %v420 = vunpack.c.l.b16 %v347
      %v421 = vunpack.c.l.b16 %v348
      %v422 = vunpack.c.l.b16 %v349
      %v423 = vunpack.c.l.b16 %v350
      %v424 = vunpack.c.l.b16 %v351
      %v425 = vunpack.c.l.b16 %v352
      %v426 = vunpack.c.l.b16 %v353
      %v427 = vunpack.c.l.b16 %v354
      %v428 = vunpack.c.l.b16 %v355
      %v429 = vunpack.c.l.b16 %v356
      %v430 = vunpack.c.l.b16 %v357
      %v431 = vunpack.c.l.b16 %v358
      %v432 = vunpack.c.l.b16 %v359
      %v433 = vunpack.c.l.b16 %v360
      %v434 = vunpack.c.l.b16 %v361
      %v435 = vunpack.c.l.b16 %v362
      %v436 = vunpack.c.l.b16 %v363
      %v437 = vunpack.c.l.b16 %v364
      %v438 = vunpack.c.l.b16 %v365
      %v439 = vunpack.c.l.b16 %v366
      %v440 = vunpack.c.l.b16 %v367
      %v441 = vunpack.c.l.b16 %v368
      %v442 = vunpack.c.l.b16 %v369
      %v443 = vunpack.c.l.b16 %v370
      %v444 = vunpack.c.l.b16 %v371
      %v445 = vunpack.c.l.b16 %v372
      %v446 = vunpack.c.l.b16 %v373
      %v447 = vunpack.c.l.b16 %v374
      %v448 = vunpack.c.l.b16 %v375
      %v449 = vunpack.c.l.b16 %v376
      %v450 = vunpack.c.l.b16 %v377
      %v451 = vpack.c.b16 %v416, %v415
      %v452 = vpack.c.b16 %v418, %v417
      %v453 = vpack.c.b16 %v420, %v419
      %v454 = vpack.c.b16 %v422, %v421
      %v455 = vpack.c.b16 %v424, %v423
      %v456 = vpack.c.b16 %v426, %v425
      %v457 = vpack.c.b16 %v428, %v427
      %v458 = vpack.c.b16 %v430, %v429
      %v459 = vpack.c.b16 %v432, %v431
      %v460 = vpack.c.b16 %v434, %v433
      %v461 = vpack.c.b16 %v436, %v435
      %v462 = vpack.c.b16 %v438, %v437
      %v463 = vpack.c.b16 %v440, %v439
      %v464 = vpack.c.b16 %v442, %v441
      %v465 = vpack.c.b16 %v444, %v443
      %v466 = vpack.c.b16 %v446, %v445
      %v467 = vpack.c.b16 %v448, %v447
      %v468 = vpack.c.b16 %v450, %v449
      %v470 = vsel %vm269, %v451, 0
      %v473 = vsel %vm269, %v452, 0
      %v476 = vsel %vm269, %v453, 0
      %v479 = vsel %vm269, %v454, 0
      %v482 = vsel %vm269, %v455, 0
      %v485 = vsel %vm269, %v456, 0
      %v488 = vsel %vm269, %v457, 0
      %v491 = vsel %vm269, %v458, 0
      %v494 = vsel %vm269, %v459, 0
      %v497 = vsel %vm269, %v460, 0
      %v500 = vsel %vm269, %v461, 0
      %v503 = vsel %vm269, %v462, 0
      %v506 = vsel %vm269, %v463, 0
      %v509 = vsel %vm269, %v464, 0
      %v512 = vsel %vm269, %v465, 0
      %v515 = vsel %vm269, %v466, 0
      %v518 = vsel %vm269, %v467, 0
      %v521 = vsel %vm269, %v468, 0
      %vm523 = vcmask 1041408
      %v525 = vsel %vm523, %v378, 0
      %527 = vmatprep.subr.bf16.mxu0 0
      %528 = vmatpush1.bf16.msra.mxu0 %v525
      %529 = vmatprep.subr.bf16.mxu0 0
      %530 = vmatpush1.bf16.msra.mxu0 0
      %531 = vmatprep.subr.bf16.mxu0 0
      %532 = vmatpush1.bf16.msra.mxu0 0
      %533 = vmatprep.subr.bf16.mxu0 0
      %534 = vmatpush1.bf16.msra.mxu0 0
      %535 = vmatprep.subr.bf16.mxu0 0
      %536 = vmatpush1.bf16.msra.mxu0 0
      %537 = vmatprep.subr.bf16.mxu0 0
      %538 = vmatpush1.bf16.msra.mxu0 0
      %539 = vmatprep.subr.bf16.mxu0 0
      %540 = vmatpush1.bf16.msra.mxu0 0
      %541 = vmatprep.subr.bf16.mxu0 0
      %542 = vmatpush1.bf16.msra.mxu0 0
      %543 = vmatprep.subr.bf16.mxu0 0
      %544 = vmatpush1.bf16.msra.mxu0 0
      %545 = vmatprep.subr.bf16.mxu0 0
      %546 = vmatpush1.bf16.msra.mxu0 0
      %547 = vmatprep.subr.bf16.mxu0 0
      %548 = vmatpush1.bf16.msra.mxu0 0
      %549 = vmatprep.subr.bf16.mxu0 0
      %550 = vmatpush1.bf16.msra.mxu0 0
      %551 = vmatprep.subr.bf16.mxu0 0
      %552 = vmatpush1.bf16.msra.mxu0 0
      %553 = vmatprep.subr.bf16.mxu0 0
      %554 = vmatpush1.bf16.msra.mxu0 0
      %555 = vmatprep.subr.bf16.mxu0 0
      %556 = vmatpush1.bf16.msra.mxu0 0
      %557 = vmatprep.subr.bf16.mxu0 0
      %558 = vmatpush1.bf16.msra.mxu0 0
      %559 = vmatprep.mubr.bf16.mxu0 0
      %560 = vmatmul.mubr.bf16.gmra.mrb[0].mxu0 %v470
      %v561 = vpop.f32.mrb[0].mxu0
      %v562 = vadd.f32 0.0, %v561
      %v563 = vpop.f32.mrb[0].mxu0
      %v564 = vpop.f32.mrb[0].mxu0
      %v565 = vadd.f32 0.0, %v564
      %v566 = vpop.f32.mrb[0].mxu0
      %567 = vmatprep.mubr.bf16.mxu0 0
      %568 = vmatmul.mubr.bf16.gmra.mrb[0].mxu0 %v473
      %v569 = vpop.f32.mrb[0].mxu0
      %v570 = vadd.f32 0.0, %v569
      %v571 = vpop.f32.mrb[0].mxu0
      %v572 = vpop.f32.mrb[0].mxu0
      %v573 = vadd.f32 0.0, %v572
      %v574 = vpop.f32.mrb[0].mxu0
      %575 = vmatprep.mubr.bf16.mxu0 0
      %576 = vmatmul.mubr.bf16.gmra.mrb[0].mxu0 %v476
      %v577 = vpop.f32.mrb[0].mxu0
      %v578 = vadd.f32 0.0, %v577
      %v579 = vpop.f32.mrb[0].mxu0
      %v580 = vpop.f32.mrb[0].mxu0
      %v581 = vadd.f32 0.0, %v580
      %v582 = vpop.f32.mrb[0].mxu0
      %583 = vmatprep.mubr.bf16.mxu0 0
      %584 = vmatmul.mubr.bf16.gmra.mrb[0].mxu0 %v479
      %v585 = vpop.f32.mrb[0].mxu0
      %v586 = vadd.f32 0.0, %v585
      %v587 = vpop.f32.mrb[0].mxu0
      %v588 = vpop.f32.mrb[0].mxu0
      %v589 = vadd.f32 0.0, %v588
      %v590 = vpop.f32.mrb[0].mxu0
      %591 = vmatprep.mubr.bf16.mxu0 0
      %592 = vmatmul.mubr.bf16.gmra.mrb[0].mxu0 %v482
      %v593 = vpop.f32.mrb[0].mxu0
      %v594 = vadd.f32 0.0, %v593
      %v595 = vpop.f32.mrb[0].mxu0
      %v596 = vpop.f32.mrb[0].mxu0
      %v597 = vadd.f32 0.0, %v596
      %v598 = vpop.f32.mrb[0].mxu0
      %599 = vmatprep.mubr.bf16.mxu0 0
      %600 = vmatmul.mubr.bf16.gmra.mrb[0].mxu0 %v485
      %v601 = vpop.f32.mrb[0].mxu0
      %v602 = vadd.f32 0.0, %v601
      %v603 = vpop.f32.mrb[0].mxu0
      %v604 = vpop.f32.mrb[0].mxu0
      %v605 = vadd.f32 0.0, %v604
      %v606 = vpop.f32.mrb[0].mxu0
      %607 = vmatprep.mubr.bf16.mxu0 0
      %608 = vmatmul.mubr.bf16.gmra.mrb[0].mxu0 %v488
      %v609 = vpop.f32.mrb[0].mxu0
      %v610 = vadd.f32 0.0, %v609
      %v611 = vpop.f32.mrb[0].mxu0
      %v612 = vpop.f32.mrb[0].mxu0
      %v613 = vadd.f32 0.0, %v612
      %v614 = vpop.f32.mrb[0].mxu0
      %615 = vmatprep.mubr.bf16.mxu0 0
      %616 = vmatmul.mubr.bf16.gmra.mrb[0].mxu0 %v491
      %v617 = vpop.f32.mrb[0].mxu0
      %v618 = vadd.f32 0.0, %v617
      %v619 = vpop.f32.mrb[0].mxu0
      %v620 = vpop.f32.mrb[0].mxu0
      %v621 = vadd.f32 0.0, %v620
      %v622 = vpop.f32.mrb[0].mxu0
      %623 = vmatprep.mubr.bf16.mxu0 0
      %624 = vmatmul.mubr.bf16.gmra.mrb[0].mxu0 %v494
      %v625 = vpop.f32.mrb[0].mxu0
      %v626 = vadd.f32 0.0, %v625
      %v627 = vpop.f32.mrb[0].mxu0
      %v628 = vpop.f32.mrb[0].mxu0
      %v629 = vadd.f32 0.0, %v628
      %v630 = vpop.f32.mrb[0].mxu0
      %631 = vmatprep.mubr.bf16.mxu0 0
      %632 = vmatmul.mubr.bf16.gmra.mrb[0].mxu0 %v497
      %v633 = vpop.f32.mrb[0].mxu0
      %v634 = vadd.f32 0.0, %v633
      %v635 = vpop.f32.mrb[0].mxu0
      %v636 = vpop.f32.mrb[0].mxu0
      %v637 = vadd.f32 0.0, %v636
      %v638 = vpop.f32.mrb[0].mxu0
      %639 = vmatprep.mubr.bf16.mxu0 0
      %640 = vmatmul.mubr.bf16.gmra.mrb[0].mxu0 %v500
      %v641 = vpop.f32.mrb[0].mxu0
      %v642 = vadd.f32 0.0, %v641
      %v643 = vpop.f32.mrb[0].mxu0
      %v644 = vpop.f32.mrb[0].mxu0
      %v645 = vadd.f32 0.0, %v644
      %v646 = vpop.f32.mrb[0].mxu0
      %647 = vmatprep.mubr.bf16.mxu0 0
      %648 = vmatmul.mubr.bf16.gmra.mrb[0].mxu0 %v503
      %v649 = vpop.f32.mrb[0].mxu0
      %v650 = vadd.f32 0.0, %v649
      %v651 = vpop.f32.mrb[0].mxu0
      %v652 = vpop.f32.mrb[0].mxu0
      %v653 = vadd.f32 0.0, %v652
      %v654 = vpop.f32.mrb[0].mxu0
      %655 = vmatprep.mubr.bf16.mxu0 0
      %656 = vmatmul.mubr.bf16.gmra.mrb[0].mxu0 %v506
      %v657 = vpop.f32.mrb[0].mxu0
      %v658 = vadd.f32 0.0, %v657
      %v659 = vpop.f32.mrb[0].mxu0
      %v660 = vpop.f32.mrb[0].mxu0
      %v661 = vadd.f32 0.0, %v660
      %v662 = vpop.f32.mrb[0].mxu0
      %663 = vmatprep.mubr.bf16.mxu0 0
      %664 = vmatmul.mubr.bf16.gmra.mrb[0].mxu0 %v509
      %v665 = vpop.f32.mrb[0].mxu0
      %v666 = vadd.f32 0.0, %v665
      %v667 = vpop.f32.mrb[0].mxu0
      %v668 = vpop.f32.mrb[0].mxu0
      %v669 = vadd.f32 0.0, %v668
      %v670 = vpop.f32.mrb[0].mxu0
      %671 = vmatprep.mubr.bf16.mxu0 0
      %672 = vmatmul.mubr.bf16.gmra.mrb[0].mxu0 %v512
      %v673 = vpop.f32.mrb[0].mxu0
      %v674 = vadd.f32 0.0, %v673
      %v675 = vpop.f32.mrb[0].mxu0
      %v676 = vpop.f32.mrb[0].mxu0
      %v677 = vadd.f32 0.0, %v676
      %v678 = vpop.f32.mrb[0].mxu0
      %679 = vmatprep.mubr.bf16.mxu0 0
      %680 = vmatmul.mubr.bf16.gmra.mrb[0].mxu0 %v515
      %v681 = vpop.f32.mrb[0].mxu0
      %v682 = vadd.f32 0.0, %v681
      %v683 = vpop.f32.mrb[0].mxu0
      %v684 = vpop.f32.mrb[0].mxu0
      %v685 = vadd.f32 0.0, %v684
      %v686 = vpop.f32.mrb[0].mxu0
      %687 = vmatprep.mubr.bf16.mxu0 0
      %688 = vmatmul.mubr.bf16.gmra.mrb[0].mxu0 %v518
      %v689 = vpop.f32.mrb[0].mxu0
      %v690 = vadd.f32 0.0, %v689
      %v691 = vpop.f32.mrb[0].mxu0
      %v692 = vpop.f32.mrb[0].mxu0
      %v693 = vadd.f32 0.0, %v692
      %v694 = vpop.f32.mrb[0].mxu0
      %695 = vmatprep.mubr.bf16.mxu0 0
      %696 = vmatmul.mubr.bf16.gmra.mrb[0].mxu0 %v521
      %v697 = vpop.f32.mrb[0].mxu0
      %v698 = vadd.f32 0.0, %v697
      %v699 = vpop.f32.mrb[0].mxu0
      %v700 = vpop.f32.mrb[0].mxu0
      %v701 = vadd.f32 0.0, %v700
      %v702 = vpop.f32.mrb[0].mxu0
      %703 = vdwg.mxu0
      %v704 = vadd.f32 %v306, %v562
      %v705 = vadd.f32 %v307, %v565
      %v706 = vadd.f32 %v308, %v570
      %v707 = vadd.f32 %v309, %v573
      %v708 = vadd.f32 %v310, %v578
      %v709 = vadd.f32 %v311, %v581
      %v710 = vadd.f32 %v312, %v586
      %v711 = vadd.f32 %v313, %v589
      %v712 = vadd.f32 %v314, %v594
      %v713 = vadd.f32 %v315, %v597
      %v714 = vadd.f32 %v316, %v602
      %v715 = vadd.f32 %v317, %v605
      %v716 = vadd.f32 %v318, %v610
      %v717 = vadd.f32 %v319, %v613
      %v718 = vadd.f32 %v320, %v618
      %v719 = vadd.f32 %v321, %v621
      %v720 = vadd.f32 %v322, %v626
      %v721 = vadd.f32 %v323, %v629
      %v722 = vadd.f32 %v324, %v634
      %v723 = vadd.f32 %v325, %v637
      %v724 = vadd.f32 %v326, %v642
      %v725 = vadd.f32 %v327, %v645
      %v726 = vadd.f32 %v328, %v650
      %v727 = vadd.f32 %v329, %v653
      %v728 = vadd.f32 %v330, %v658
      %v729 = vadd.f32 %v331, %v661
      %v730 = vadd.f32 %v332, %v666
      %v731 = vadd.f32 %v333, %v669
      %v732 = vadd.f32 %v334, %v674
      %v733 = vadd.f32 %v335, %v677
      %v734 = vadd.f32 %v336, %v682
      %v735 = vadd.f32 %v337, %v685
      %v736 = vadd.f32 %v338, %v690
      %v737 = vadd.f32 %v339, %v693
      %v738 = vadd.f32 %v340, %v698
      %v739 = vadd.f32 %v341, %v701
      %740 = vst.msk [vmem:[#allocation2] sm:$0xff] %vm269, %v704
      %741 = vst.msk [vmem:[#allocation2 + $0x8] sm:$0xff] %vm269, %v705
      %742 = vst.msk [vmem:[#allocation2 + $0x10] sm:$0xff] %vm269, %v706
      %743 = vst.msk [vmem:[#allocation2 + $0x18] sm:$0xff] %vm269, %v707
      %744 = vst.msk [vmem:[#allocation2 + $0x20] sm:$0xff] %vm269, %v708
      %745 = vst.msk [vmem:[#allocation2 + $0x28] sm:$0xff] %vm269, %v709
      %746 = vst.msk [vmem:[#allocation2 + $0x30] sm:$0xff] %vm269, %v710
      %747 = vst.msk [vmem:[#allocation2 + $0x38] sm:$0xff] %vm269, %v711
      %748 = vst.msk [vmem:[#allocation2 + $0x40] sm:$0xff] %vm269, %v712
      %749 = vst.msk [vmem:[#allocation2 + $0x48] sm:$0xff] %vm269, %v713
      %750 = vst.msk [vmem:[#allocation2 + $0x50] sm:$0xff] %vm269, %v714
      %751 = vst.msk [vmem:[#allocation2 + $0x58] sm:$0xff] %vm269, %v715
      %752 = vst.msk [vmem:[#allocation2 + $0x60] sm:$0xff] %vm269, %v716
      %753 = vst.msk [vmem:[#allocation2 + $0x68] sm:$0xff] %vm269, %v717
      %754 = vst.msk [vmem:[#allocation2 + $0x70] sm:$0xff] %vm269, %v718
      %755 = vst.msk [vmem:[#allocation2 + $0x78] sm:$0xff] %vm269, %v719
      %756 = vst.msk [vmem:[#allocation2 + $0x80] sm:$0xff] %vm269, %v720
      %757 = vst.msk [vmem:[#allocation2 + $0x88] sm:$0xff] %vm269, %v721
      %758 = vst.msk [vmem:[#allocation2 + $0x90] sm:$0xff] %vm269, %v722
      %759 = vst.msk [vmem:[#allocation2 + $0x98] sm:$0xff] %vm269, %v723
      %760 = vst.msk [vmem:[#allocation2 + $0xa0] sm:$0xff] %vm269, %v724
      %761 = vst.msk [vmem:[#allocation2 + $0xa8] sm:$0xff] %vm269, %v725
      %762 = vst.msk [vmem:[#allocation2 + $0xb0] sm:$0xff] %vm269, %v726
      %763 = vst.msk [vmem:[#allocation2 + $0xb8] sm:$0xff] %vm269, %v727
      %764 = vst.msk [vmem:[#allocation2 + $0xc0] sm:$0xff] %vm269, %v728
      %765 = vst.msk [vmem:[#allocation2 + $0xc8] sm:$0xff] %vm269, %v729
      %766 = vst.msk [vmem:[#allocation2 + $0xd0] sm:$0xff] %vm269, %v730
      %767 = vst.msk [vmem:[#allocation2 + $0xd8] sm:$0xff] %vm269, %v731
      %768 = vst.msk [vmem:[#allocation2 + $0xe0] sm:$0xff] %vm269, %v732
      %769 = vst.msk [vmem:[#allocation2 + $0xe8] sm:$0xff] %vm269, %v733
      %770 = vst.msk [vmem:[#allocation2 + $0xf0] sm:$0xff] %vm269, %v734
      %771 = vst.msk [vmem:[#allocation2 + $0xf8] sm:$0xff] %vm269, %v735
      %772 = vst.msk [vmem:[#allocation2 + $0x100] sm:$0xff] %vm269, %v736
      %773 = vst.msk [vmem:[#allocation2 + $0x108] sm:$0xff] %vm269, %v737
      %774 = vst.msk [vmem:[#allocation2 + $0x110] sm:$0xff] %vm269, %v738
      %775 = vst.msk [vmem:[#allocation2 + $0x118] sm:$0xff] %vm269, %v739
      %v776 = vld [vmem:[#allocation2] sm:$0xff]
      %v777 = vld [vmem:[#allocation2 + $0x8] sm:$0xff]
      %v778 = vld [vmem:[#allocation2 + $0x10] sm:$0xff]
      %v779 = vld [vmem:[#allocation2 + $0x18] sm:$0xff]
      %v780 = vld [vmem:[#allocation2 + $0x20] sm:$0xff]
      %v781 = vld [vmem:[#allocation2 + $0x28] sm:$0xff]
      %v782 = vld [vmem:[#allocation2 + $0x30] sm:$0xff]
      %v783 = vld [vmem:[#allocation2 + $0x38] sm:$0xff]
      %v784 = vld [vmem:[#allocation2 + $0x40] sm:$0xff]
      %v785 = vld [vmem:[#allocation2 + $0x48] sm:$0xff]
      %v786 = vld [vmem:[#allocation2 + $0x50] sm:$0xff]
      %v787 = vld [vmem:[#allocation2 + $0x58] sm:$0xff]
      %v788 = vld [vmem:[#allocation2 + $0x60] sm:$0xff]
      %v789 = vld [vmem:[#allocation2 + $0x68] sm:$0xff]
      %v790 = vld [vmem:[#allocation2 + $0x70] sm:$0xff]
      %v791 = vld [vmem:[#allocation2 + $0x78] sm:$0xff]
      %v792 = vld [vmem:[#allocation2 + $0x80] sm:$0xff]
      %v793 = vld [vmem:[#allocation2 + $0x88] sm:$0xff]
      %v794 = vld [vmem:[#allocation2 + $0x90] sm:$0xff]
      %v795 = vld [vmem:[#allocation2 + $0x98] sm:$0xff]
      %v796 = vld [vmem:[#allocation2 + $0xa0] sm:$0xff]
      %v797 = vld [vmem:[#allocation2 + $0xa8] sm:$0xff]
      %v798 = vld [vmem:[#allocation2 + $0xb0] sm:$0xff]
      %v799 = vld [vmem:[#allocation2 + $0xb8] sm:$0xff]
      %v800 = vld [vmem:[#allocation2 + $0xc0] sm:$0xff]
      %v801 = vld [vmem:[#allocation2 + $0xc8] sm:$0xff]
      %v802 = vld [vmem:[#allocation2 + $0xd0] sm:$0xff]
      %v803 = vld [vmem:[#allocation2 + $0xd8] sm:$0xff]
      %v804 = vld [vmem:[#allocation2 + $0xe0] sm:$0xff]
      %v805 = vld [vmem:[#allocation2 + $0xe8] sm:$0xff]
      %v806 = vld [vmem:[#allocation2 + $0xf0] sm:$0xff]
      %v807 = vld [vmem:[#allocation2 + $0xf8] sm:$0xff]
      %v808 = vld [vmem:[#allocation2 + $0x100] sm:$0xff]
      %v809 = vld [vmem:[#allocation2 + $0x108] sm:$0xff]
      %v810 = vld [vmem:[#allocation2 + $0x110] sm:$0xff]
      %v811 = vld [vmem:[#allocation2 + $0x118] sm:$0xff]
      %v812 = vld [vmem:[%s251] sm:$0xf]
      %v813 = vld [vmem:[%s251 + $0x4] sm:$0xf]
      %v814 = vld [vmem:[%s251 + $0x8] sm:$0xf]
      %v815 = vld [vmem:[%s251 + $0xc] sm:$0xf]
      %v816 = vld [vmem:[%s251 + $0x10] sm:$0xf]
      %v817 = vld [vmem:[%s251 + $0x14] sm:$0xf]
      %v818 = vld [vmem:[%s251 + $0x18] sm:$0xf]
      %v819 = vld [vmem:[%s251 + $0x1c] sm:$0xf]
      %v820 = vld [vmem:[%s251 + $0x20] sm:$0xf]
      %v821 = vld [vmem:[%s251 + $0x24] sm:$0xf]
      %v822 = vld [vmem:[%s251 + $0x28] sm:$0xf]
      %v823 = vld [vmem:[%s251 + $0x2c] sm:$0xf]
      %v824 = vld [vmem:[%s251 + $0x30] sm:$0xf]
      %v825 = vld [vmem:[%s251 + $0x34] sm:$0xf]
      %v826 = vld [vmem:[%s251 + $0x38] sm:$0xf]
      %v827 = vld [vmem:[%s251 + $0x3c] sm:$0xf]
      %v828 = vld [vmem:[%s251 + $0x40] sm:$0xf]
      %v829 = vld [vmem:[%s251 + $0x44] sm:$0xf]
      %v830 = vld [vmem:[%s251 + $0x48] sm:$0xf]
      %v831 = vld [vmem:[%s251 + $0x4c] sm:$0xf]
      %v832 = vld [vmem:[%s251 + $0x50] sm:$0xf]
      %v833 = vld [vmem:[%s251 + $0x54] sm:$0xf]
      %v834 = vld [vmem:[%s251 + $0x58] sm:$0xf]
      %v835 = vld [vmem:[%s251 + $0x5c] sm:$0xf]
      %v836 = vld [vmem:[%s251 + $0x60] sm:$0xf]
      %v837 = vld [vmem:[%s251 + $0x64] sm:$0xf]
      %v838 = vld [vmem:[%s251 + $0x68] sm:$0xf]
      %v839 = vld [vmem:[%s251 + $0x6c] sm:$0xf]
      %v840 = vld [vmem:[%s251 + $0x70] sm:$0xf]
      %v841 = vld [vmem:[%s251 + $0x74] sm:$0xf]
      %v842 = vld [vmem:[%s251 + $0x78] sm:$0xf]
      %v843 = vld [vmem:[%s251 + $0x7c] sm:$0xf]
      %v844 = vld [vmem:[%s251 + $0x80] sm:$0xf]
      %v845 = vld [vmem:[%s251 + $0x84] sm:$0xf]
      %v846 = vld [vmem:[%s251 + $0x88] sm:$0xf]
      %v847 = vld [vmem:[%s251 + $0x8c] sm:$0xf]
      %v848 = vld [vmem:[%s251 + $0x90] sm:$0x1]
      %s849 = scalar_lea.vmem %s1, 2
      %v850 = vld [vmem:[%s849] sm:$0x3]
      %v888 = vunpack.c.l.b16 %v812
      %v889 = vunpack.c.l.b16 %v813
      %v890 = vunpack.c.l.b16 %v814
      %v891 = vunpack.c.l.b16 %v815
      %v892 = vunpack.c.l.b16 %v816
      %v893 = vunpack.c.l.b16 %v817
      %v894 = vunpack.c.l.b16 %v818
      %v895 = vunpack.c.l.b16 %v819
      %v896 = vunpack.c.l.b16 %v820
      %v897 = vunpack.c.l.b16 %v821
      %v898 = vunpack.c.l.b16 %v822
      %v899 = vunpack.c.l.b16 %v823
      %v900 = vunpack.c.l.b16 %v824
      %v901 = vunpack.c.l.b16 %v825
      %v902 = vunpack.c.l.b16 %v826
      %v903 = vunpack.c.l.b16 %v827
      %v904 = vunpack.c.l.b16 %v828
      %v905 = vunpack.c.l.b16 %v829
      %v906 = vunpack.c.l.b16 %v830
      %v907 = vunpack.c.l.b16 %v831
      %v908 = vunpack.c.l.b16 %v832
      %v909 = vunpack.c.l.b16 %v833
      %v910 = vunpack.c.l.b16 %v834
      %v911 = vunpack.c.l.b16 %v835
      %v912 = vunpack.c.l.b16 %v836
      %v913 = vunpack.c.l.b16 %v837
      %v914 = vunpack.c.l.b16 %v838
      %v915 = vunpack.c.l.b16 %v839
      %v916 = vunpack.c.l.b16 %v840
      %v917 = vunpack.c.l.b16 %v841
      %v918 = vunpack.c.l.b16 %v842
      %v919 = vunpack.c.l.b16 %v843
      %v920 = vunpack.c.l.b16 %v844
      %v921 = vunpack.c.l.b16 %v845
      %v922 = vunpack.c.l.b16 %v846
      %v923 = vunpack.c.l.b16 %v847
      %v924 = vunpack.c.l.b16 %v848
      %v925 = vpack.c.b16 %v889, %v888
      %v926 = vpack.c.b16 %v891, %v890
      %v927 = vpack.c.b16 %v893, %v892
      %v928 = vpack.c.b16 %v895, %v894
      %v929 = vpack.c.b16 %v897, %v896
      %v930 = vpack.c.b16 %v899, %v898
      %v931 = vpack.c.b16 %v901, %v900
      %v932 = vpack.c.b16 %v903, %v902
      %v933 = vpack.c.b16 %v905, %v904
      %v934 = vpack.c.b16 %v907, %v906
      %v935 = vpack.c.b16 %v909, %v908
      %v936 = vpack.c.b16 %v911, %v910
      %v937 = vpack.c.b16 %v913, %v912
      %v938 = vpack.c.b16 %v915, %v914
      %v939 = vpack.c.b16 %v917, %v916
      %v940 = vpack.c.b16 %v919, %v918
      %v941 = vpack.c.b16 %v921, %v920
      %v942 = vpack.c.b16 %v923, %v922
      %v943 = vpack.c.b16 %v924, %v924
      %vm944 = vsmask.f32 7424
      %v946 = vshrl.u32 %v925, 16
      %v948 = vshll.u32 %v925, 16
      %v950 = vrot.slane %v948, 1
      %v951 = vor.u32 %v946, %v950
      %v953 = vshll.u32 %v926, 16
      %v955 = vrot.slane %v953, 1
      %v956 = vsel %vm944, %v951, %v955
      %v957 = vshrl.u32 %v926, 16
      %v959 = vor.u32 %v957, %v955
      %v961 = vshll.u32 %v927, 16
      %v963 = vrot.slane %v961, 1
      %v964 = vsel %vm944, %v959, %v963
      %v965 = vshrl.u32 %v927, 16
      %v967 = vor.u32 %v965, %v963
      %v969 = vshll.u32 %v928, 16
      %v971 = vrot.slane %v969, 1
      %v972 = vsel %vm944, %v967, %v971
      %v973 = vshrl.u32 %v928, 16
      %v975 = vor.u32 %v973, %v971
      %v977 = vshll.u32 %v929, 16
      %v979 = vrot.slane %v977, 1
      %v980 = vsel %vm944, %v975, %v979
      %v981 = vshrl.u32 %v929, 16
      %v983 = vor.u32 %v981, %v979
      %v985 = vshll.u32 %v930, 16
      %v987 = vrot.slane %v985, 1
      %v988 = vsel %vm944, %v983, %v987
      %v989 = vshrl.u32 %v930, 16
      %v991 = vor.u32 %v989, %v987
      %v993 = vshll.u32 %v931, 16
      %v995 = vrot.slane %v993, 1
      %v996 = vsel %vm944, %v991, %v995
      %v997 = vshrl.u32 %v931, 16
      %v999 = vor.u32 %v997, %v995
      %v1001 = vshll.u32 %v932, 16
      %v1003 = vrot.slane %v1001, 1
      %v1004 = vsel %vm944, %v999, %v1003
      %v1005 = vshrl.u32 %v932, 16
      %v1007 = vor.u32 %v1005, %v1003
      %v1009 = vshll.u32 %v933, 16
      %v1011 = vrot.slane %v1009, 1
      %v1012 = vsel %vm944, %v1007, %v1011
      %v1013 = vshrl.u32 %v933, 16
      %v1015 = vor.u32 %v1013, %v1011
      %v1017 = vshll.u32 %v934, 16
      %v1019 = vrot.slane %v1017, 1
      %v1020 = vsel %vm944, %v1015, %v1019
      %v1021 = vshrl.u32 %v934, 16
      %v1023 = vor.u32 %v1021, %v1019
      %v1025 = vshll.u32 %v935, 16
      %v1027 = vrot.slane %v1025, 1
      %v1028 = vsel %vm944, %v1023, %v1027
      %v1029 = vshrl.u32 %v935, 16
      %v1031 = vor.u32 %v1029, %v1027
      %v1033 = vshll.u32 %v936, 16
      %v1035 = vrot.slane %v1033, 1
      %v1036 = vsel %vm944, %v1031, %v1035
      %v1037 = vshrl.u32 %v936, 16
      %v1039 = vor.u32 %v1037, %v1035
      %v1041 = vshll.u32 %v937, 16
      %v1043 = vrot.slane %v1041, 1
      %v1044 = vsel %vm944, %v1039, %v1043
      %v1045 = vshrl.u32 %v937, 16
      %v1047 = vor.u32 %v1045, %v1043
      %v1049 = vshll.u32 %v938, 16
      %v1051 = vrot.slane %v1049, 1
      %v1052 = vsel %vm944, %v1047, %v1051
      %v1053 = vshrl.u32 %v938, 16
      %v1055 = vor.u32 %v1053, %v1051
      %v1057 = vshll.u32 %v939, 16
      %v1059 = vrot.slane %v1057, 1
      %v1060 = vsel %vm944, %v1055, %v1059
      %v1061 = vshrl.u32 %v939, 16
      %v1063 = vor.u32 %v1061, %v1059
      %v1065 = vshll.u32 %v940, 16
      %v1067 = vrot.slane %v1065, 1
      %v1068 = vsel %vm944, %v1063, %v1067
      %v1069 = vshrl.u32 %v940, 16
      %v1071 = vor.u32 %v1069, %v1067
      %v1073 = vshll.u32 %v941, 16
      %v1075 = vrot.slane %v1073, 1
      %v1076 = vsel %vm944, %v1071, %v1075
      %v1077 = vshrl.u32 %v941, 16
      %v1079 = vor.u32 %v1077, %v1075
      %v1081 = vshll.u32 %v942, 16
      %v1083 = vrot.slane %v1081, 1
      %v1084 = vsel %vm944, %v1079, %v1083
      %v1085 = vshrl.u32 %v942, 16
      %v1087 = vor.u32 %v1085, %v1083
      %v1089 = vshll.u32 %v943, 16
      %v1091 = vrot.slane %v1089, 1
      %v1092 = vsel %vm944, %v1087, %v1091
      %v1094 = vsel %vm269, %v956, 0
      %v1097 = vsel %vm269, %v964, 0
      %v1100 = vsel %vm269, %v972, 0
      %v1103 = vsel %vm269, %v980, 0
      %v1106 = vsel %vm269, %v988, 0
      %v1109 = vsel %vm269, %v996, 0
      %v1112 = vsel %vm269, %v1004, 0
      %v1115 = vsel %vm269, %v1012, 0
      %v1118 = vsel %vm269, %v1020, 0
      %v1121 = vsel %vm269, %v1028, 0
      %v1124 = vsel %vm269, %v1036, 0
      %v1127 = vsel %vm269, %v1044, 0
      %v1130 = vsel %vm269, %v1052, 0
      %v1133 = vsel %vm269, %v1060, 0
      %v1136 = vsel %vm269, %v1068, 0
      %v1139 = vsel %vm269, %v1076, 0
      %v1142 = vsel %vm269, %v1084, 0
      %v1145 = vsel %vm269, %v1092, 0
      %v1148 = vsel %vm523, %v850, 0
      %1150 = vmatprep.subr.bf16.mxu0 0
      %1151 = vmatpush1.bf16.msra.mxu0 %v1148
      %1152 = vmatprep.subr.bf16.mxu0 0
      %1153 = vmatpush1.bf16.msra.mxu0 0
      %1154 = vmatprep.subr.bf16.mxu0 0
      %1155 = vmatpush1.bf16.msra.mxu0 0
      %1156 = vmatprep.subr.bf16.mxu0 0
      %1157 = vmatpush1.bf16.msra.mxu0 0
      %1158 = vmatprep.subr.bf16.mxu0 0
      %1159 = vmatpush1.bf16.msra.mxu0 0
      %1160 = vmatprep.subr.bf16.mxu0 0
      %1161 = vmatpush1.bf16.msra.mxu0 0
      %1162 = vmatprep.subr.bf16.mxu0 0
      %1163 = vmatpush1.bf16.msra.mxu0 0
      %1164 = vmatprep.subr.bf16.mxu0 0
      %1165 = vmatpush1.bf16.msra.mxu0 0
      %1166 = vmatprep.subr.bf16.mxu0 0
      %1167 = vmatpush1.bf16.msra.mxu0 0
      %1168 = vmatprep.subr.bf16.mxu0 0
      %1169 = vmatpush1.bf16.msra.mxu0 0
      %1170 = vmatprep.subr.bf16.mxu0 0
      %1171 = vmatpush1.bf16.msra.mxu0 0
      %1172 = vmatprep.subr.bf16.mxu0 0
      %1173 = vmatpush1.bf16.msra.mxu0 0
      %1174 = vmatprep.subr.bf16.mxu0 0
      %1175 = vmatpush1.bf16.msra.mxu0 0
      %1176 = vmatprep.subr.bf16.mxu0 0
      %1177 = vmatpush1.bf16.msra.mxu0 0
      %1178 = vmatprep.subr.bf16.mxu0 0
      %1179 = vmatpush1.bf16.msra.mxu0 0
      %1180 = vmatprep.subr.bf16.mxu0 0
      %1181 = vmatpush1.bf16.msra.mxu0 0
      %1182 = vmatprep.mubr.bf16.mxu0 0
      %1183 = vmatmul.mubr.bf16.gmra.mrb[0].mxu0 %v1094
      %v1184 = vpop.f32.mrb[0].mxu0
      %v1185 = vadd.f32 0.0, %v1184
      %v1186 = vpop.f32.mrb[0].mxu0
      %v1187 = vpop.f32.mrb[0].mxu0
      %v1188 = vadd.f32 0.0, %v1187
      %v1189 = vpop.f32.mrb[0].mxu0
      %1190 = vmatprep.mubr.bf16.mxu0 0
      %1191 = vmatmul.mubr.bf16.gmra.mrb[0].mxu0 %v1097
      %v1192 = vpop.f32.mrb[0].mxu0
      %v1193 = vadd.f32 0.0, %v1192
      %v1194 = vpop.f32.mrb[0].mxu0
      %v1195 = vpop.f32.mrb[0].mxu0
      %v1196 = vadd.f32 0.0, %v1195
      %v1197 = vpop.f32.mrb[0].mxu0
      %1198 = vmatprep.mubr.bf16.mxu0 0
      %1199 = vmatmul.mubr.bf16.gmra.mrb[0].mxu0 %v1100
      %v1200 = vpop.f32.mrb[0].mxu0
      %v1201 = vadd.f32 0.0, %v1200
      %v1202 = vpop.f32.mrb[0].mxu0
      %v1203 = vpop.f32.mrb[0].mxu0
      %v1204 = vadd.f32 0.0, %v1203
      %v1205 = vpop.f32.mrb[0].mxu0
      %1206 = vmatprep.mubr.bf16.mxu0 0
      %1207 = vmatmul.mubr.bf16.gmra.mrb[0].mxu0 %v1103
      %v1208 = vpop.f32.mrb[0].mxu0
      %v1209 = vadd.f32 0.0, %v1208
      %v1210 = vpop.f32.mrb[0].mxu0
      %v1211 = vpop.f32.mrb[0].mxu0
      %v1212 = vadd.f32 0.0, %v1211
      %v1213 = vpop.f32.mrb[0].mxu0
      %1214 = vmatprep.mubr.bf16.mxu0 0
      %1215 = vmatmul.mubr.bf16.gmra.mrb[0].mxu0 %v1106
      %v1216 = vpop.f32.mrb[0].mxu0
      %v1217 = vadd.f32 0.0, %v1216
      %v1218 = vpop.f32.mrb[0].mxu0
      %v1219 = vpop.f32.mrb[0].mxu0
      %v1220 = vadd.f32 0.0, %v1219
      %v1221 = vpop.f32.mrb[0].mxu0
      %1222 = vmatprep.mubr.bf16.mxu0 0
      %1223 = vmatmul.mubr.bf16.gmra.mrb[0].mxu0 %v1109
      %v1224 = vpop.f32.mrb[0].mxu0
      %v1225 = vadd.f32 0.0, %v1224
      %v1226 = vpop.f32.mrb[0].mxu0
      %v1227 = vpop.f32.mrb[0].mxu0
      %v1228 = vadd.f32 0.0, %v1227
      %v1229 = vpop.f32.mrb[0].mxu0
      %1230 = vmatprep.mubr.bf16.mxu0 0
      %1231 = vmatmul.mubr.bf16.gmra.mrb[0].mxu0 %v1112
      %v1232 = vpop.f32.mrb[0].mxu0
      %v1233 = vadd.f32 0.0, %v1232
      %v1234 = vpop.f32.mrb[0].mxu0
      %v1235 = vpop.f32.mrb[0].mxu0
      %v1236 = vadd.f32 0.0, %v1235
      %v1237 = vpop.f32.mrb[0].mxu0
      %1238 = vmatprep.mubr.bf16.mxu0 0
      %1239 = vmatmul.mubr.bf16.gmra.mrb[0].mxu0 %v1115
      %v1240 = vpop.f32.mrb[0].mxu0
      %v1241 = vadd.f32 0.0, %v1240
      %v1242 = vpop.f32.mrb[0].mxu0
      %v1243 = vpop.f32.mrb[0].mxu0
      %v1244 = vadd.f32 0.0, %v1243
      %v1245 = vpop.f32.mrb[0].mxu0
      %1246 = vmatprep.mubr.bf16.mxu0 0
      %1247 = vmatmul.mubr.bf16.gmra.mrb[0].mxu0 %v1118
      %v1248 = vpop.f32.mrb[0].mxu0
      %v1249 = vadd.f32 0.0, %v1248
      %v1250 = vpop.f32.mrb[0].mxu0
      %v1251 = vpop.f32.mrb[0].mxu0
      %v1252 = vadd.f32 0.0, %v1251
      %v1253 = vpop.f32.mrb[0].mxu0
      %1254 = vmatprep.mubr.bf16.mxu0 0
      %1255 = vmatmul.mubr.bf16.gmra.mrb[0].mxu0 %v1121
      %v1256 = vpop.f32.mrb[0].mxu0
      %v1257 = vadd.f32 0.0, %v1256
      %v1258 = vpop.f32.mrb[0].mxu0
      %v1259 = vpop.f32.mrb[0].mxu0
      %v1260 = vadd.f32 0.0, %v1259
      %v1261 = vpop.f32.mrb[0].mxu0
      %1262 = vmatprep.mubr.bf16.mxu0 0
      %1263 = vmatmul.mubr.bf16.gmra.mrb[0].mxu0 %v1124
      %v1264 = vpop.f32.mrb[0].mxu0
      %v1265 = vadd.f32 0.0, %v1264
      %v1266 = vpop.f32.mrb[0].mxu0
      %v1267 = vpop.f32.mrb[0].mxu0
      %v1268 = vadd.f32 0.0, %v1267
      %v1269 = vpop.f32.mrb[0].mxu0
      %1270 = vmatprep.mubr.bf16.mxu0 0
      %1271 = vmatmul.mubr.bf16.gmra.mrb[0].mxu0 %v1127
      %v1272 = vpop.f32.mrb[0].mxu0
      %v1273 = vadd.f32 0.0, %v1272
      %v1274 = vpop.f32.mrb[0].mxu0
      %v1275 = vpop.f32.mrb[0].mxu0
      %v1276 = vadd.f32 0.0, %v1275
      %v1277 = vpop.f32.mrb[0].mxu0
      %1278 = vmatprep.mubr.bf16.mxu0 0
      %1279 = vmatmul.mubr.bf16.gmra.mrb[0].mxu0 %v1130
      %v1280 = vpop.f32.mrb[0].mxu0
      %v1281 = vadd.f32 0.0, %v1280
      %v1282 = vpop.f32.mrb[0].mxu0
      %v1283 = vpop.f32.mrb[0].mxu0
      %v1284 = vadd.f32 0.0, %v1283
      %v1285 = vpop.f32.mrb[0].mxu0
      %1286 = vmatprep.mubr.bf16.mxu0 0
      %1287 = vmatmul.mubr.bf16.gmra.mrb[0].mxu0 %v1133
      %v1288 = vpop.f32.mrb[0].mxu0
      %v1289 = vadd.f32 0.0, %v1288
      %v1290 = vpop.f32.mrb[0].mxu0
      %v1291 = vpop.f32.mrb[0].mxu0
      %v1292 = vadd.f32 0.0, %v1291
      %v1293 = vpop.f32.mrb[0].mxu0
      %1294 = vmatprep.mubr.bf16.mxu0 0
      %1295 = vmatmul.mubr.bf16.gmra.mrb[0].mxu0 %v1136
      %v1296 = vpop.f32.mrb[0].mxu0
      %v1297 = vadd.f32 0.0, %v1296
      %v1298 = vpop.f32.mrb[0].mxu0
      %v1299 = vpop.f32.mrb[0].mxu0
      %v1300 = vadd.f32 0.0, %v1299
      %v1301 = vpop.f32.mrb[0].mxu0
      %1302 = vmatprep.mubr.bf16.mxu0 0
      %1303 = vmatmul.mubr.bf16.gmra.mrb[0].mxu0 %v1139
      %v1304 = vpop.f32.mrb[0].mxu0
      %v1305 = vadd.f32 0.0, %v1304
      %v1306 = vpop.f32.mrb[0].mxu0
      %v1307 = vpop.f32.mrb[0].mxu0
      %v1308 = vadd.f32 0.0, %v1307
      %v1309 = vpop.f32.mrb[0].mxu0
      %1310 = vmatprep.mubr.bf16.mxu0 0
      %1311 = vmatmul.mubr.bf16.gmra.mrb[0].mxu0 %v1142
      %v1312 = vpop.f32.mrb[0].mxu0
      %v1313 = vadd.f32 0.0, %v1312
      %v1314 = vpop.f32.mrb[0].mxu0
      %v1315 = vpop.f32.mrb[0].mxu0
      %v1316 = vadd.f32 0.0, %v1315
      %v1317 = vpop.f32.mrb[0].mxu0
      %1318 = vmatprep.mubr.bf16.mxu0 0
      %1319 = vmatmul.mubr.bf16.gmra.mrb[0].mxu0 %v1145
      %v1320 = vpop.f32.mrb[0].mxu0
      %v1321 = vadd.f32 0.0, %v1320
      %v1322 = vpop.f32.mrb[0].mxu0
      %v1323 = vpop.f32.mrb[0].mxu0
      %v1324 = vadd.f32 0.0, %v1323
      %v1325 = vpop.f32.mrb[0].mxu0
      %1326 = vdwg.mxu0
      %v1327 = vadd.f32 %v776, %v1185
      %v1328 = vadd.f32 %v777, %v1188
      %v1329 = vadd.f32 %v778, %v1193
      %v1330 = vadd.f32 %v779, %v1196
      %v1331 = vadd.f32 %v780, %v1201
      %v1332 = vadd.f32 %v781, %v1204
      %v1333 = vadd.f32 %v782, %v1209
      %v1334 = vadd.f32 %v783, %v1212
      %v1335 = vadd.f32 %v784, %v1217
      %v1336 = vadd.f32 %v785, %v1220
      %v1337 = vadd.f32 %v786, %v1225
      %v1338 = vadd.f32 %v787, %v1228
      %v1339 = vadd.f32 %v788, %v1233
      %v1340 = vadd.f32 %v789, %v1236
      %v1341 = vadd.f32 %v790, %v1241
      %v1342 = vadd.f32 %v791, %v1244
      %v1343 = vadd.f32 %v792, %v1249
      %v1344 = vadd.f32 %v793, %v1252
      %v1345 = vadd.f32 %v794, %v1257
      %v1346 = vadd.f32 %v795, %v1260
      %v1347 = vadd.f32 %v796, %v1265
      %v1348 = vadd.f32 %v797, %v1268
      %v1349 = vadd.f32 %v798, %v1273
      %v1350 = vadd.f32 %v799, %v1276
      %v1351 = vadd.f32 %v800, %v1281
      %v1352 = vadd.f32 %v801, %v1284
      %v1353 = vadd.f32 %v802, %v1289
      %v1354 = vadd.f32 %v803, %v1292
      %v1355 = vadd.f32 %v804, %v1297
      %v1356 = vadd.f32 %v805, %v1300
      %v1357 = vadd.f32 %v806, %v1305
      %v1358 = vadd.f32 %v807, %v1308
      %v1359 = vadd.f32 %v808, %v1313
      %v1360 = vadd.f32 %v809, %v1316
      %v1361 = vadd.f32 %v810, %v1321
      %v1362 = vadd.f32 %v811, %v1324
      %1363 = vst.msk [vmem:[#allocation2] sm:$0xff] %vm269, %v1327
      %1364 = vst.msk [vmem:[#allocation2 + $0x8] sm:$0xff] %vm269, %v1328
      %1365 = vst.msk [vmem:[#allocation2 + $0x10] sm:$0xff] %vm269, %v1329
      %1366 = vst.msk [vmem:[#allocation2 + $0x18] sm:$0xff] %vm269, %v1330
      %1367 = vst.msk [vmem:[#allocation2 + $0x20] sm:$0xff] %vm269, %v1331
      %1368 = vst.msk [vmem:[#allocation2 + $0x28] sm:$0xff] %vm269, %v1332
      %1369 = vst.msk [vmem:[#allocation2 + $0x30] sm:$0xff] %vm269, %v1333
      %1370 = vst.msk [vmem:[#allocation2 + $0x38] sm:$0xff] %vm269, %v1334
      %1371 = vst.msk [vmem:[#allocation2 + $0x40] sm:$0xff] %vm269, %v1335
      %1372 = vst.msk [vmem:[#allocation2 + $0x48] sm:$0xff] %vm269, %v1336
      %1373 = vst.msk [vmem:[#allocation2 + $0x50] sm:$0xff] %vm269, %v1337
      %1374 = vst.msk [vmem:[#allocation2 + $0x58] sm:$0xff] %vm269, %v1338
      %1375 = vst.msk [vmem:[#allocation2 + $0x60] sm:$0xff] %vm269, %v1339
      %1376 = vst.msk [vmem:[#allocation2 + $0x68] sm:$0xff] %vm269, %v1340
      %1377 = vst.msk [vmem:[#allocation2 + $0x70] sm:$0xff] %vm269, %v1341
      %1378 = vst.msk [vmem:[#allocation2 + $0x78] sm:$0xff] %vm269, %v1342
      %1379 = vst.msk [vmem:[#allocation2 + $0x80] sm:$0xff] %vm269, %v1343
      %1380 = vst.msk [vmem:[#allocation2 + $0x88] sm:$0xff] %vm269, %v1344
      %1381 = vst.msk [vmem:[#allocation2 + $0x90] sm:$0xff] %vm269, %v1345
      %1382 = vst.msk [vmem:[#allocation2 + $0x98] sm:$0xff] %vm269, %v1346
      %1383 = vst.msk [vmem:[#allocation2 + $0xa0] sm:$0xff] %vm269, %v1347
      %1384 = vst.msk [vmem:[#allocation2 + $0xa8] sm:$0xff] %vm269, %v1348
      %1385 = vst.msk [vmem:[#allocation2 + $0xb0] sm:$0xff] %vm269, %v1349
      %1386 = vst.msk [vmem:[#allocation2 + $0xb8] sm:$0xff] %vm269, %v1350
      %1387 = vst.msk [vmem:[#allocation2 + $0xc0] sm:$0xff] %vm269, %v1351
      %1388 = vst.msk [vmem:[#allocation2 + $0xc8] sm:$0xff] %vm269, %v1352
      %1389 = vst.msk [vmem:[#allocation2 + $0xd0] sm:$0xff] %vm269, %v1353
      %1390 = vst.msk [vmem:[#allocation2 + $0xd8] sm:$0xff] %vm269, %v1354
      %1391 = vst.msk [vmem:[#allocation2 + $0xe0] sm:$0xff] %vm269, %v1355
      %1392 = vst.msk [vmem:[#allocation2 + $0xe8] sm:$0xff] %vm269, %v1356
      %1393 = vst.msk [vmem:[#allocation2 + $0xf0] sm:$0xff] %vm269, %v1357
      %1394 = vst.msk [vmem:[#allocation2 + $0xf8] sm:$0xff] %vm269, %v1358
      %1395 = vst.msk [vmem:[#allocation2 + $0x100] sm:$0xff] %vm269, %v1359
      %1396 = vst.msk [vmem:[#allocation2 + $0x108] sm:$0xff] %vm269, %v1360
      %1397 = vst.msk [vmem:[#allocation2 + $0x110] sm:$0xff] %vm269, %v1361
      %1398 = vst.msk [vmem:[#allocation2 + $0x118] sm:$0xff] %vm269, %v1362
      %v1399 = vld [vmem:[#allocation2] sm:$0xff]
      %v1400 = vld [vmem:[#allocation2 + $0x8] sm:$0xff]
      %v1401 = vld [vmem:[#allocation2 + $0x10] sm:$0xff]
      %v1402 = vld [vmem:[#allocation2 + $0x18] sm:$0xff]
      %v1403 = vld [vmem:[#allocation2 + $0x20] sm:$0xff]
      %v1404 = vld [vmem:[#allocation2 + $0x28] sm:$0xff]
      %v1405 = vld [vmem:[#allocation2 + $0x30] sm:$0xff]
      %v1406 = vld [vmem:[#allocation2 + $0x38] sm:$0xff]
      %v1407 = vld [vmem:[#allocation2 + $0x40] sm:$0xff]
      %v1408 = vld [vmem:[#allocation2 + $0x48] sm:$0xff]
      %v1409 = vld [vmem:[#allocation2 + $0x50] sm:$0xff]
      %v1410 = vld [vmem:[#allocation2 + $0x58] sm:$0xff]
      %v1411 = vld [vmem:[#allocation2 + $0x60] sm:$0xff]
      %v1412 = vld [vmem:[#allocation2 + $0x68] sm:$0xff]
      %v1413 = vld [vmem:[#allocation2 + $0x70] sm:$0xff]
      %v1414 = vld [vmem:[#allocation2 + $0x78] sm:$0xff]
      %v1415 = vld [vmem:[#allocation2 + $0x80] sm:$0xff]
      %v1416 = vld [vmem:[#allocation2 + $0x88] sm:$0xff]
      %v1417 = vld [vmem:[#allocation2 + $0x90] sm:$0xff]
      %v1418 = vld [vmem:[#allocation2 + $0x98] sm:$0xff]
      %v1419 = vld [vmem:[#allocation2 + $0xa0] sm:$0xff]
      %v1420 = vld [vmem:[#allocation2 + $0xa8] sm:$0xff]
      %v1421 = vld [vmem:[#allocation2 + $0xb0] sm:$0xff]
      %v1422 = vld [vmem:[#allocation2 + $0xb8] sm:$0xff]
      %v1423 = vld [vmem:[#allocation2 + $0xc0] sm:$0xff]
      %v1424 = vld [vmem:[#allocation2 + $0xc8] sm:$0xff]
      %v1425 = vld [vmem:[#allocation2 + $0xd0] sm:$0xff]
      %v1426 = vld [vmem:[#allocation2 + $0xd8] sm:$0xff]
      %v1427 = vld [vmem:[#allocation2 + $0xe0] sm:$0xff]
      %v1428 = vld [vmem:[#allocation2 + $0xe8] sm:$0xff]
      %v1429 = vld [vmem:[#allocation2 + $0xf0] sm:$0xff]
      %v1430 = vld [vmem:[#allocation2 + $0xf8] sm:$0xff]
      %v1431 = vld [vmem:[#allocation2 + $0x100] sm:$0xff]
      %v1432 = vld [vmem:[#allocation2 + $0x108] sm:$0xff]
      %v1433 = vld [vmem:[#allocation2 + $0x110] sm:$0xff]
      %v1434 = vld [vmem:[#allocation2 + $0x118] sm:$0xff]
      %v1435 = vld [vmem:[%s251] sm:$0xe]
      %v1436 = vld [vmem:[%s251 + $0x4] sm:$0xf]
      %v1437 = vld [vmem:[%s251 + $0x8] sm:$0xf]
      %v1438 = vld [vmem:[%s251 + $0xc] sm:$0xf]
      %v1439 = vld [vmem:[%s251 + $0x10] sm:$0xf]
      %v1440 = vld [vmem:[%s251 + $0x14] sm:$0xf]
      %v1441 = vld [vmem:[%s251 + $0x18] sm:$0xf]
      %v1442 = vld [vmem:[%s251 + $0x1c] sm:$0xf]
      %v1443 = vld [vmem:[%s251 + $0x20] sm:$0xf]
      %v1444 = vld [vmem:[%s251 + $0x24] sm:$0xf]
      %v1445 = vld [vmem:[%s251 + $0x28] sm:$0xf]
      %v1446 = vld [vmem:[%s251 + $0x2c] sm:$0xf]
      %v1447 = vld [vmem:[%s251 + $0x30] sm:$0xf]
      %v1448 = vld [vmem:[%s251 + $0x34] sm:$0xf]
      %v1449 = vld [vmem:[%s251 + $0x38] sm:$0xf]
      %v1450 = vld [vmem:[%s251 + $0x3c] sm:$0xf]
      %v1451 = vld [vmem:[%s251 + $0x40] sm:$0xf]
      %v1452 = vld [vmem:[%s251 + $0x44] sm:$0xf]
      %v1453 = vld [vmem:[%s251 + $0x48] sm:$0xf]
      %v1454 = vld [vmem:[%s251 + $0x4c] sm:$0xf]
      %v1455 = vld [vmem:[%s251 + $0x50] sm:$0xf]
      %v1456 = vld [vmem:[%s251 + $0x54] sm:$0xf]
      %v1457 = vld [vmem:[%s251 + $0x58] sm:$0xf]
      %v1458 = vld [vmem:[%s251 + $0x5c] sm:$0xf]
      %v1459 = vld [vmem:[%s251 + $0x60] sm:$0xf]
      %v1460 = vld [vmem:[%s251 + $0x64] sm:$0xf]
      %v1461 = vld [vmem:[%s251 + $0x68] sm:$0xf]
      %v1462 = vld [vmem:[%s251 + $0x6c] sm:$0xf]
      %v1463 = vld [vmem:[%s251 + $0x70] sm:$0xf]
      %v1464 = vld [vmem:[%s251 + $0x74] sm:$0xf]
      %v1465 = vld [vmem:[%s251 + $0x78] sm:$0xf]
      %v1466 = vld [vmem:[%s251 + $0x7c] sm:$0xf]
      %v1467 = vld [vmem:[%s251 + $0x80] sm:$0xf]
      %v1468 = vld [vmem:[%s251 + $0x84] sm:$0xf]
      %v1469 = vld [vmem:[%s251 + $0x88] sm:$0xf]
      %v1470 = vld [vmem:[%s251 + $0x8c] sm:$0xf]
      %v1471 = vld [vmem:[%s251 + $0x90] sm:$0x1]
      %s1472 = scalar_lea.vmem %s1, 4
      %v1473 = vld [vmem:[%s1472] sm:$0x3]
      %v1511 = vunpack.c.l.b16 %v1435
      %v1512 = vunpack.c.l.b16 %v1436
      %v1513 = vunpack.c.l.b16 %v1437
      %v1514 = vunpack.c.l.b16 %v1438
      %v1515 = vunpack.c.l.b16 %v1439
      %v1516 = vunpack.c.l.b16 %v1440
      %v1517 = vunpack.c.l.b16 %v1441
      %v1518 = vunpack.c.l.b16 %v1442
      %v1519 = vunpack.c.l.b16 %v1443
      %v1520 = vunpack.c.l.b16 %v1444
      %v1521 = vunpack.c.l.b16 %v1445
      %v1522 = vunpack.c.l.b16 %v1446
      %v1523 = vunpack.c.l.b16 %v1447
      %v1524 = vunpack.c.l.b16 %v1448
      %v1525 = vunpack.c.l.b16 %v1449
      %v1526 = vunpack.c.l.b16 %v1450
      %v1527 = vunpack.c.l.b16 %v1451
      %v1528 = vunpack.c.l.b16 %v1452
      %v1529 = vunpack.c.l.b16 %v1453
      %v1530 = vunpack.c.l.b16 %v1454
      %v1531 = vunpack.c.l.b16 %v1455
      %v1532 = vunpack.c.l.b16 %v1456
      %v1533 = vunpack.c.l.b16 %v1457
      %v1534 = vunpack.c.l.b16 %v1458
      %v1535 = vunpack.c.l.b16 %v1459
      %v1536 = vunpack.c.l.b16 %v1460
      %v1537 = vunpack.c.l.b16 %v1461
      %v1538 = vunpack.c.l.b16 %v1462
      %v1539 = vunpack.c.l.b16 %v1463
      %v1540 = vunpack.c.l.b16 %v1464
      %v1541 = vunpack.c.l.b16 %v1465
      %v1542 = vunpack.c.l.b16 %v1466
      %v1543 = vunpack.c.l.b16 %v1467
      %v1544 = vunpack.c.l.b16 %v1468
      %v1545 = vunpack.c.l.b16 %v1469
      %v1546 = vunpack.c.l.b16 %v1470
      %v1547 = vunpack.c.l.b16 %v1471
      %v1548 = vpack.c.b16 %v1512, %v1511
      %v1549 = vpack.c.b16 %v1514, %v1513
      %v1550 = vpack.c.b16 %v1516, %v1515
      %v1551 = vpack.c.b16 %v1518, %v1517
      %v1552 = vpack.c.b16 %v1520, %v1519
      %v1553 = vpack.c.b16 %v1522, %v1521
      %v1554 = vpack.c.b16 %v1524, %v1523
      %v1555 = vpack.c.b16 %v1526, %v1525
      %v1556 = vpack.c.b16 %v1528, %v1527
      %v1557 = vpack.c.b16 %v1530, %v1529
      %v1558 = vpack.c.b16 %v1532, %v1531
      %v1559 = vpack.c.b16 %v1534, %v1533
      %v1560 = vpack.c.b16 %v1536, %v1535
      %v1561 = vpack.c.b16 %v1538, %v1537
      %v1562 = vpack.c.b16 %v1540, %v1539
      %v1563 = vpack.c.b16 %v1542, %v1541
      %v1564 = vpack.c.b16 %v1544, %v1543
      %v1565 = vpack.c.b16 %v1546, %v1545
      %v1566 = vpack.c.b16 %v1547, %v1547
      %vm1567 = vcmask 1046528
      %v1568 = vrot.slane %v1548, 1
      %v1569 = vrot.slane %v1549, 1
      %v1570 = vsel %vm1567, %v1568, %v1569
      %v1571 = vrot.slane %v1550, 1
      %v1572 = vsel %vm1567, %v1569, %v1571
      %v1573 = vrot.slane %v1551, 1
      %v1574 = vsel %vm1567, %v1571, %v1573
      %v1575 = vrot.slane %v1552, 1
      %v1576 = vsel %vm1567, %v1573, %v1575
      %v1577 = vrot.slane %v1553, 1
      %v1578 = vsel %vm1567, %v1575, %v1577
      %v1579 = vrot.slane %v1554, 1
      %v1580 = vsel %vm1567, %v1577, %v1579
      %v1581 = vrot.slane %v1555, 1
      %v1582 = vsel %vm1567, %v1579, %v1581
      %v1583 = vrot.slane %v1556, 1
      %v1584 = vsel %vm1567, %v1581, %v1583
      %v1585 = vrot.slane %v1557, 1
      %v1586 = vsel %vm1567, %v1583, %v1585
      %v1587 = vrot.slane %v1558, 1
      %v1588 = vsel %vm1567, %v1585, %v1587
      %v1589 = vrot.slane %v1559, 1
      %v1590 = vsel %vm1567, %v1587, %v1589
      %v1591 = vrot.slane %v1560, 1
      %v1592 = vsel %vm1567, %v1589, %v1591
      %v1593 = vrot.slane %v1561, 1
      %v1594 = vsel %vm1567, %v1591, %v1593
      %v1595 = vrot.slane %v1562, 1
      %v1596 = vsel %vm1567, %v1593, %v1595
      %v1597 = vrot.slane %v1563, 1
      %v1598 = vsel %vm1567, %v1595, %v1597
      %v1599 = vrot.slane %v1564, 1
      %v1600 = vsel %vm1567, %v1597, %v1599
      %v1601 = vrot.slane %v1565, 1
      %v1602 = vsel %vm1567, %v1599, %v1601
      %v1603 = vrot.slane %v1566, 1
      %v1604 = vsel %vm1567, %v1601, %v1603
      %v1606 = vsel %vm269, %v1570, 0
      %v1609 = vsel %vm269, %v1572, 0
      %v1612 = vsel %vm269, %v1574, 0
      %v1615 = vsel %vm269, %v1576, 0
      %v1618 = vsel %vm269, %v1578, 0
      %v1621 = vsel %vm269, %v1580, 0
      %v1624 = vsel %vm269, %v1582, 0
      %v1627 = vsel %vm269, %v1584, 0
      %v1630 = vsel %vm269, %v1586, 0
      %v1633 = vsel %vm269, %v1588, 0
      %v1636 = vsel %vm269, %v1590, 0
      %v1639 = vsel %vm269, %v1592, 0
      %v1642 = vsel %vm269, %v1594, 0
      %v1645 = vsel %vm269, %v1596, 0
      %v1648 = vsel %vm269, %v1598, 0
      %v1651 = vsel %vm269, %v1600, 0
      %v1654 = vsel %vm269, %v1602, 0
      %v1657 = vsel %vm269, %v1604, 0
      %v1660 = vsel %vm523, %v1473, 0
      %1662 = vmatprep.subr.bf16.mxu0 0
      %1663 = vmatpush1.bf16.msra.mxu0 %v1660
      %1664 = vmatprep.subr.bf16.mxu0 0
      %1665 = vmatpush1.bf16.msra.mxu0 0
      %1666 = vmatprep.subr.bf16.mxu0 0
      %1667 = vmatpush1.bf16.msra.mxu0 0
      %1668 = vmatprep.subr.bf16.mxu0 0
      %1669 = vmatpush1.bf16.msra.mxu0 0
      %1670 = vmatprep.subr.bf16.mxu0 0
      %1671 = vmatpush1.bf16.msra.mxu0 0
      %1672 = vmatprep.subr.bf16.mxu0 0
      %1673 = vmatpush1.bf16.msra.mxu0 0
      %1674 = vmatprep.subr.bf16.mxu0 0
      %1675 = vmatpush1.bf16.msra.mxu0 0
      %1676 = vmatprep.subr.bf16.mxu0 0
      %1677 = vmatpush1.bf16.msra.mxu0 0
      %1678 = vmatprep.subr.bf16.mxu0 0
      %1679 = vmatpush1.bf16.msra.mxu0 0
      %1680 = vmatprep.subr.bf16.mxu0 0
      %1681 = vmatpush1.bf16.msra.mxu0 0
      %1682 = vmatprep.subr.bf16.mxu0 0
      %1683 = vmatpush1.bf16.msra.mxu0 0
      %1684 = vmatprep.subr.bf16.mxu0 0
      %1685 = vmatpush1.bf16.msra.mxu0 0
      %1686 = vmatprep.subr.bf16.mxu0 0
      %1687 = vmatpush1.bf16.msra.mxu0 0
      %1688 = vmatprep.subr.bf16.mxu0 0
      %1689 = vmatpush1.bf16.msra.mxu0 0
      %1690 = vmatprep.subr.bf16.mxu0 0
      %1691 = vmatpush1.bf16.msra.mxu0 0
      %1692 = vmatprep.subr.bf16.mxu0 0
      %1693 = vmatpush1.bf16.msra.mxu0 0
      %1694 = vmatprep.mubr.bf16.mxu0 0
      %1695 = vmatmul.mubr.bf16.gmra.mrb[0].mxu0 %v1606
      %v1696 = vpop.f32.mrb[0].mxu0
      %v1697 = vadd.f32 0.0, %v1696
      %v1698 = vpop.f32.mrb[0].mxu0
      %v1699 = vpop.f32.mrb[0].mxu0
      %v1700 = vadd.f32 0.0, %v1699
      %v1701 = vpop.f32.mrb[0].mxu0
      %1702 = vmatprep.mubr.bf16.mxu0 0
      %1703 = vmatmul.mubr.bf16.gmra.mrb[0].mxu0 %v1609
      %v1704 = vpop.f32.mrb[0].mxu0
      %v1705 = vadd.f32 0.0, %v1704
      %v1706 = vpop.f32.mrb[0].mxu0
      %v1707 = vpop.f32.mrb[0].mxu0
      %v1708 = vadd.f32 0.0, %v1707
      %v1709 = vpop.f32.mrb[0].mxu0
      %1710 = vmatprep.mubr.bf16.mxu0 0
      %1711 = vmatmul.mubr.bf16.gmra.mrb[0].mxu0 %v1612
      %v1712 = vpop.f32.mrb[0].mxu0
      %v1713 = vadd.f32 0.0, %v1712
      %v1714 = vpop.f32.mrb[0].mxu0
      %v1715 = vpop.f32.mrb[0].mxu0
      %v1716 = vadd.f32 0.0, %v1715
      %v1717 = vpop.f32.mrb[0].mxu0
      %1718 = vmatprep.mubr.bf16.mxu0 0
      %1719 = vmatmul.mubr.bf16.gmra.mrb[0].mxu0 %v1615
      %v1720 = vpop.f32.mrb[0].mxu0
      %v1721 = vadd.f32 0.0, %v1720
      %v1722 = vpop.f32.mrb[0].mxu0
      %v1723 = vpop.f32.mrb[0].mxu0
      %v1724 = vadd.f32 0.0, %v1723
      %v1725 = vpop.f32.mrb[0].mxu0
      %1726 = vmatprep.mubr.bf16.mxu0 0
      %1727 = vmatmul.mubr.bf16.gmra.mrb[0].mxu0 %v1618
      %v1728 = vpop.f32.mrb[0].mxu0
      %v1729 = vadd.f32 0.0, %v1728
      %v1730 = vpop.f32.mrb[0].mxu0
      %v1731 = vpop.f32.mrb[0].mxu0
      %v1732 = vadd.f32 0.0, %v1731
      %v1733 = vpop.f32.mrb[0].mxu0
      %1734 = vmatprep.mubr.bf16.mxu0 0
      %1735 = vmatmul.mubr.bf16.gmra.mrb[0].mxu0 %v1621
      %v1736 = vpop.f32.mrb[0].mxu0
      %v1737 = vadd.f32 0.0, %v1736
      %v1738 = vpop.f32.mrb[0].mxu0
      %v1739 = vpop.f32.mrb[0].mxu0
      %v1740 = vadd.f32 0.0, %v1739
      %v1741 = vpop.f32.mrb[0].mxu0
      %1742 = vmatprep.mubr.bf16.mxu0 0
      %1743 = vmatmul.mubr.bf16.gmra.mrb[0].mxu0 %v1624
      %v1744 = vpop.f32.mrb[0].mxu0
      %v1745 = vadd.f32 0.0, %v1744
      %v1746 = vpop.f32.mrb[0].mxu0
      %v1747 = vpop.f32.mrb[0].mxu0
      %v1748 = vadd.f32 0.0, %v1747
      %v1749 = vpop.f32.mrb[0].mxu0
      %1750 = vmatprep.mubr.bf16.mxu0 0
      %1751 = vmatmul.mubr.bf16.gmra.mrb[0].mxu0 %v1627
      %v1752 = vpop.f32.mrb[0].mxu0
      %v1753 = vadd.f32 0.0, %v1752
      %v1754 = vpop.f32.mrb[0].mxu0
      %v1755 = vpop.f32.mrb[0].mxu0
      %v1756 = vadd.f32 0.0, %v1755
      %v1757 = vpop.f32.mrb[0].mxu0
      %1758 = vmatprep.mubr.bf16.mxu0 0
      %1759 = vmatmul.mubr.bf16.gmra.mrb[0].mxu0 %v1630
      %v1760 = vpop.f32.mrb[0].mxu0
      %v1761 = vadd.f32 0.0, %v1760
      %v1762 = vpop.f32.mrb[0].mxu0
      %v1763 = vpop.f32.mrb[0].mxu0
      %v1764 = vadd.f32 0.0, %v1763
      %v1765 = vpop.f32.mrb[0].mxu0
      %1766 = vmatprep.mubr.bf16.mxu0 0
      %1767 = vmatmul.mubr.bf16.gmra.mrb[0].mxu0 %v1633
      %v1768 = vpop.f32.mrb[0].mxu0
      %v1769 = vadd.f32 0.0, %v1768
      %v1770 = vpop.f32.mrb[0].mxu0
      %v1771 = vpop.f32.mrb[0].mxu0
      %v1772 = vadd.f32 0.0, %v1771
      %v1773 = vpop.f32.mrb[0].mxu0
      %1774 = vmatprep.mubr.bf16.mxu0 0
      %1775 = vmatmul.mubr.bf16.gmra.mrb[0].mxu0 %v1636
      %v1776 = vpop.f32.mrb[0].mxu0
      %v1777 = vadd.f32 0.0, %v1776
      %v1778 = vpop.f32.mrb[0].mxu0
      %v1779 = vpop.f32.mrb[0].mxu0
      %v1780 = vadd.f32 0.0, %v1779
      %v1781 = vpop.f32.mrb[0].mxu0
      %1782 = vmatprep.mubr.bf16.mxu0 0
      %1783 = vmatmul.mubr.bf16.gmra.mrb[0].mxu0 %v1639
      %v1784 = vpop.f32.mrb[0].mxu0
      %v1785 = vadd.f32 0.0, %v1784
      %v1786 = vpop.f32.mrb[0].mxu0
      %v1787 = vpop.f32.mrb[0].mxu0
      %v1788 = vadd.f32 0.0, %v1787
      %v1789 = vpop.f32.mrb[0].mxu0
      %1790 = vmatprep.mubr.bf16.mxu0 0
      %1791 = vmatmul.mubr.bf16.gmra.mrb[0].mxu0 %v1642
      %v1792 = vpop.f32.mrb[0].mxu0
      %v1793 = vadd.f32 0.0, %v1792
      %v1794 = vpop.f32.mrb[0].mxu0
      %v1795 = vpop.f32.mrb[0].mxu0
      %v1796 = vadd.f32 0.0, %v1795
      %v1797 = vpop.f32.mrb[0].mxu0
      %1798 = vmatprep.mubr.bf16.mxu0 0
      %1799 = vmatmul.mubr.bf16.gmra.mrb[0].mxu0 %v1645
      %v1800 = vpop.f32.mrb[0].mxu0
      %v1801 = vadd.f32 0.0, %v1800
      %v1802 = vpop.f32.mrb[0].mxu0
      %v1803 = vpop.f32.mrb[0].mxu0
      %v1804 = vadd.f32 0.0, %v1803
      %v1805 = vpop.f32.mrb[0].mxu0
      %1806 = vmatprep.mubr.bf16.mxu0 0
      %1807 = vmatmul.mubr.bf16.gmra.mrb[0].mxu0 %v1648
      %v1808 = vpop.f32.mrb[0].mxu0
      %v1809 = vadd.f32 0.0, %v1808
      %v1810 = vpop.f32.mrb[0].mxu0
      %v1811 = vpop.f32.mrb[0].mxu0
      %v1812 = vadd.f32 0.0, %v1811
      %v1813 = vpop.f32.mrb[0].mxu0
      %1814 = vmatprep.mubr.bf16.mxu0 0
      %1815 = vmatmul.mubr.bf16.gmra.mrb[0].mxu0 %v1651
      %v1816 = vpop.f32.mrb[0].mxu0
      %v1817 = vadd.f32 0.0, %v1816
      %v1818 = vpop.f32.mrb[0].mxu0
      %v1819 = vpop.f32.mrb[0].mxu0
      %v1820 = vadd.f32 0.0, %v1819
      %v1821 = vpop.f32.mrb[0].mxu0
      %1822 = vmatprep.mubr.bf16.mxu0 0
      %1823 = vmatmul.mubr.bf16.gmra.mrb[0].mxu0 %v1654
      %v1824 = vpop.f32.mrb[0].mxu0
      %v1825 = vadd.f32 0.0, %v1824
      %v1826 = vpop.f32.mrb[0].mxu0
      %v1827 = vpop.f32.mrb[0].mxu0
      %v1828 = vadd.f32 0.0, %v1827
      %v1829 = vpop.f32.mrb[0].mxu0
      %1830 = vmatprep.mubr.bf16.mxu0 0
      %1831 = vmatmul.mubr.bf16.gmra.mrb[0].mxu0 %v1657
      %v1832 = vpop.f32.mrb[0].mxu0
      %v1833 = vadd.f32 0.0, %v1832
      %v1834 = vpop.f32.mrb[0].mxu0
      %v1835 = vpop.f32.mrb[0].mxu0
      %v1836 = vadd.f32 0.0, %v1835
      %v1837 = vpop.f32.mrb[0].mxu0
      %1838 = vdwg.mxu0
      %v1839 = vadd.f32 %v1399, %v1697
      %v1840 = vadd.f32 %v1400, %v1700
      %v1841 = vadd.f32 %v1401, %v1705
      %v1842 = vadd.f32 %v1402, %v1708
      %v1843 = vadd.f32 %v1403, %v1713
      %v1844 = vadd.f32 %v1404, %v1716
      %v1845 = vadd.f32 %v1405, %v1721
      %v1846 = vadd.f32 %v1406, %v1724
      %v1847 = vadd.f32 %v1407, %v1729
      %v1848 = vadd.f32 %v1408, %v1732
      %v1849 = vadd.f32 %v1409, %v1737
      %v1850 = vadd.f32 %v1410, %v1740
      %v1851 = vadd.f32 %v1411, %v1745
      %v1852 = vadd.f32 %v1412, %v1748
      %v1853 = vadd.f32 %v1413, %v1753
      %v1854 = vadd.f32 %v1414, %v1756
      %v1855 = vadd.f32 %v1415, %v1761
      %v1856 = vadd.f32 %v1416, %v1764
      %v1857 = vadd.f32 %v1417, %v1769
      %v1858 = vadd.f32 %v1418, %v1772
      %v1859 = vadd.f32 %v1419, %v1777
      %v1860 = vadd.f32 %v1420, %v1780
      %v1861 = vadd.f32 %v1421, %v1785
      %v1862 = vadd.f32 %v1422, %v1788
      %v1863 = vadd.f32 %v1423, %v1793
      %v1864 = vadd.f32 %v1424, %v1796
      %v1865 = vadd.f32 %v1425, %v1801
      %v1866 = vadd.f32 %v1426, %v1804
      %v1867 = vadd.f32 %v1427, %v1809
      %v1868 = vadd.f32 %v1428, %v1812
      %v1869 = vadd.f32 %v1429, %v1817
      %v1870 = vadd.f32 %v1430, %v1820
      %v1871 = vadd.f32 %v1431, %v1825
      %v1872 = vadd.f32 %v1432, %v1828
      %v1873 = vadd.f32 %v1433, %v1833
      %v1874 = vadd.f32 %v1434, %v1836
      %1875 = vst.msk [vmem:[#allocation2] sm:$0xff] %vm269, %v1839
      %1876 = vst.msk [vmem:[#allocation2 + $0x8] sm:$0xff] %vm269, %v1840
      %1877 = vst.msk [vmem:[#allocation2 + $0x10] sm:$0xff] %vm269, %v1841
      %1878 = vst.msk [vmem:[#allocation2 + $0x18] sm:$0xff] %vm269, %v1842
      %1879 = vst.msk [vmem:[#allocation2 + $0x20] sm:$0xff] %vm269, %v1843
      %1880 = vst.msk [vmem:[#allocation2 + $0x28] sm:$0xff] %vm269, %v1844
      %1881 = vst.msk [vmem:[#allocation2 + $0x30] sm:$0xff] %vm269, %v1845
      %1882 = vst.msk [vmem:[#allocation2 + $0x38] sm:$0xff] %vm269, %v1846
      %1883 = vst.msk [vmem:[#allocation2 + $0x40] sm:$0xff] %vm269, %v1847
      %1884 = vst.msk [vmem:[#allocation2 + $0x48] sm:$0xff] %vm269, %v1848
      %1885 = vst.msk [vmem:[#allocation2 + $0x50] sm:$0xff] %vm269, %v1849
      %1886 = vst.msk [vmem:[#allocation2 + $0x58] sm:$0xff] %vm269, %v1850
      %1887 = vst.msk [vmem:[#allocation2 + $0x60] sm:$0xff] %vm269, %v1851
      %1888 = vst.msk [vmem:[#allocation2 + $0x68] sm:$0xff] %vm269, %v1852
      %1889 = vst.msk [vmem:[#allocation2 + $0x70] sm:$0xff] %vm269, %v1853
      %1890 = vst.msk [vmem:[#allocation2 + $0x78] sm:$0xff] %vm269, %v1854
      %1891 = vst.msk [vmem:[#allocation2 + $0x80] sm:$0xff] %vm269, %v1855
      %1892 = vst.msk [vmem:[#allocation2 + $0x88] sm:$0xff] %vm269, %v1856
      %1893 = vst.msk [vmem:[#allocation2 + $0x90] sm:$0xff] %vm269, %v1857
      %1894 = vst.msk [vmem:[#allocation2 + $0x98] sm:$0xff] %vm269, %v1858
      %1895 = vst.msk [vmem:[#allocation2 + $0xa0] sm:$0xff] %vm269, %v1859
      %1896 = vst.msk [vmem:[#allocation2 + $0xa8] sm:$0xff] %vm269, %v1860
      %1897 = vst.msk [vmem:[#allocation2 + $0xb0] sm:$0xff] %vm269, %v1861
      %1898 = vst.msk [vmem:[#allocation2 + $0xb8] sm:$0xff] %vm269, %v1862
      %1899 = vst.msk [vmem:[#allocation2 + $0xc0] sm:$0xff] %vm269, %v1863
      %1900 = vst.msk [vmem:[#allocation2 + $0xc8] sm:$0xff] %vm269, %v1864
      %1901 = vst.msk [vmem:[#allocation2 + $0xd0] sm:$0xff] %vm269, %v1865
      %1902 = vst.msk [vmem:[#allocation2 + $0xd8] sm:$0xff] %vm269, %v1866
      %1903 = vst.msk [vmem:[#allocation2 + $0xe0] sm:$0xff] %vm269, %v1867
      %1904 = vst.msk [vmem:[#allocation2 + $0xe8] sm:$0xff] %vm269, %v1868
      %1905 = vst.msk [vmem:[#allocation2 + $0xf0] sm:$0xff] %vm269, %v1869
      %1906 = vst.msk [vmem:[#allocation2 + $0xf8] sm:$0xff] %vm269, %v1870
      %1907 = vst.msk [vmem:[#allocation2 + $0x100] sm:$0xff] %vm269, %v1871
      %1908 = vst.msk [vmem:[#allocation2 + $0x108] sm:$0xff] %vm269, %v1872
      %1909 = vst.msk [vmem:[#allocation2 + $0x110] sm:$0xff] %vm269, %v1873
      %1910 = vst.msk [vmem:[#allocation2 + $0x118] sm:$0xff] %vm269, %v1874
      %v1911 = vld [vmem:[#allocation2] sm:$0xff]
      %v1912 = vld [vmem:[#allocation2 + $0x8] sm:$0xff]
      %v1913 = vld [vmem:[#allocation2 + $0x10] sm:$0xff]
      %v1914 = vld [vmem:[#allocation2 + $0x18] sm:$0xff]
      %v1915 = vld [vmem:[#allocation2 + $0x20] sm:$0xff]
      %v1916 = vld [vmem:[#allocation2 + $0x28] sm:$0xff]
      %v1917 = vld [vmem:[#allocation2 + $0x30] sm:$0xff]
      %v1918 = vld [vmem:[#allocation2 + $0x38] sm:$0xff]
      %v1919 = vld [vmem:[#allocation2 + $0x40] sm:$0xff]
      %v1920 = vld [vmem:[#allocation2 + $0x48] sm:$0xff]
      %v1921 = vld [vmem:[#allocation2 + $0x50] sm:$0xff]
      %v1922 = vld [vmem:[#allocation2 + $0x58] sm:$0xff]
      %v1923 = vld [vmem:[#allocation2 + $0x60] sm:$0xff]
      %v1924 = vld [vmem:[#allocation2 + $0x68] sm:$0xff]
      %v1925 = vld [vmem:[#allocation2 + $0x70] sm:$0xff]
      %v1926 = vld [vmem:[#allocation2 + $0x78] sm:$0xff]
      %v1927 = vld [vmem:[#allocation2 + $0x80] sm:$0xff]
      %v1928 = vld [vmem:[#allocation2 + $0x88] sm:$0xff]
      %v1929 = vld [vmem:[#allocation2 + $0x90] sm:$0xff]
      %v1930 = vld [vmem:[#allocation2 + $0x98] sm:$0xff]
      %v1931 = vld [vmem:[#allocation2 + $0xa0] sm:$0xff]
      %v1932 = vld [vmem:[#allocation2 + $0xa8] sm:$0xff]
      %v1933 = vld [vmem:[#allocation2 + $0xb0] sm:$0xff]
      %v1934 = vld [vmem:[#allocation2 + $0xb8] sm:$0xff]
      %v1935 = vld [vmem:[#allocation2 + $0xc0] sm:$0xff]
      %v1936 = vld [vmem:[#allocation2 + $0xc8] sm:$0xff]
      %v1937 = vld [vmem:[#allocation2 + $0xd0] sm:$0xff]
      %v1938 = vld [vmem:[#allocation2 + $0xd8] sm:$0xff]
      %v1939 = vld [vmem:[#allocation2 + $0xe0] sm:$0xff]
      %v1940 = vld [vmem:[#allocation2 + $0xe8] sm:$0xff]
      %v1941 = vld [vmem:[#allocation2 + $0xf0] sm:$0xff]
      %v1942 = vld [vmem:[#allocation2 + $0xf8] sm:$0xff]
      %v1943 = vld [vmem:[#allocation2 + $0x100] sm:$0xff]
      %v1944 = vld [vmem:[#allocation2 + $0x108] sm:$0xff]
      %v1945 = vld [vmem:[#allocation2 + $0x110] sm:$0xff]
      %v1946 = vld [vmem:[#allocation2 + $0x118] sm:$0xff]
      %v1947 = vld [vmem:[%s251 + $0x8] sm:$0xe]
      %v1948 = vld [vmem:[%s251 + $0xc] sm:$0xf]
      %v1949 = vld [vmem:[%s251 + $0x10] sm:$0xf]
      %v1950 = vld [vmem:[%s251 + $0x14] sm:$0xf]
      %v1951 = vld [vmem:[%s251 + $0x18] sm:$0xf]
      %v1952 = vld [vmem:[%s251 + $0x1c] sm:$0xf]
      %v1953 = vld [vmem:[%s251 + $0x20] sm:$0xf]
      %v1954 = vld [vmem:[%s251 + $0x24] sm:$0xf]
      %v1955 = vld [vmem:[%s251 + $0x28] sm:$0xf]
      %v1956 = vld [vmem:[%s251 + $0x2c] sm:$0xf]
      %v1957 = vld [vmem:[%s251 + $0x30] sm:$0xf]
      %v1958 = vld [vmem:[%s251 + $0x34] sm:$0xf]
      %v1959 = vld [vmem:[%s251 + $0x38] sm:$0xf]
      %v1960 = vld [vmem:[%s251 + $0x3c] sm:$0xf]
      %v1961 = vld [vmem:[%s251 + $0x40] sm:$0xf]
      %v1962 = vld [vmem:[%s251 + $0x44] sm:$0xf]
      %v1963 = vld [vmem:[%s251 + $0x48] sm:$0xf]
      %v1964 = vld [vmem:[%s251 + $0x4c] sm:$0xf]
      %v1965 = vld [vmem:[%s251 + $0x50] sm:$0xf]
      %v1966 = vld [vmem:[%s251 + $0x54] sm:$0xf]
      %v1967 = vld [vmem:[%s251 + $0x58] sm:$0xf]
      %v1968 = vld [vmem:[%s251 + $0x5c] sm:$0xf]
      %v1969 = vld [vmem:[%s251 + $0x60] sm:$0xf]
      %v1970 = vld [vmem:[%s251 + $0x64] sm:$0xf]
      %v1971 = vld [vmem:[%s251 + $0x68] sm:$0xf]
      %v1972 = vld [vmem:[%s251 + $0x6c] sm:$0xf]
      %v1973 = vld [vmem:[%s251 + $0x70] sm:$0xf]
      %v1974 = vld [vmem:[%s251 + $0x74] sm:$0xf]
      %v1975 = vld [vmem:[%s251 + $0x78] sm:$0xf]
      %v1976 = vld [vmem:[%s251 + $0x7c] sm:$0xf]
      %v1977 = vld [vmem:[%s251 + $0x80] sm:$0xf]
      %v1978 = vld [vmem:[%s251 + $0x84] sm:$0xf]
      %v1979 = vld [vmem:[%s251 + $0x88] sm:$0xf]
      %v1980 = vld [vmem:[%s251 + $0x8c] sm:$0xf]
      %v1981 = vld [vmem:[%s251 + $0x90] sm:$0xf]
      %v1982 = vld [vmem:[%s251 + $0x94] sm:$0xf]
      %v1983 = vld [vmem:[%s251 + $0x98] sm:$0x1]
      %s1984 = scalar_lea.vmem %s1, 6
      %v1985 = vld [vmem:[%s1984] sm:$0x3]
      %v2023 = vunpack.c.l.b16 %v1947
      %v2024 = vunpack.c.l.b16 %v1948
      %v2025 = vunpack.c.l.b16 %v1949
      %v2026 = vunpack.c.l.b16 %v1950
      %v2027 = vunpack.c.l.b16 %v1951
      %v2028 = vunpack.c.l.b16 %v1952
      %v2029 = vunpack.c.l.b16 %v1953
      %v2030 = vunpack.c.l.b16 %v1954
      %v2031 = vunpack.c.l.b16 %v1955
      %v2032 = vunpack.c.l.b16 %v1956
      %v2033 = vunpack.c.l.b16 %v1957
      %v2034 = vunpack.c.l.b16 %v1958
      %v2035 = vunpack.c.l.b16 %v1959
      %v2036 = vunpack.c.l.b16 %v1960
      %v2037 = vunpack.c.l.b16 %v1961
      %v2038 = vunpack.c.l.b16 %v1962
      %v2039 = vunpack.c.l.b16 %v1963
      %v2040 = vunpack.c.l.b16 %v1964
      %v2041 = vunpack.c.l.b16 %v1965
      %v2042 = vunpack.c.l.b16 %v1966
      %v2043 = vunpack.c.l.b16 %v1967
      %v2044 = vunpack.c.l.b16 %v1968
      %v2045 = vunpack.c.l.b16 %v1969
      %v2046 = vunpack.c.l.b16 %v1970
      %v2047 = vunpack.c.l.b16 %v1971
      %v2048 = vunpack.c.l.b16 %v1972
      %v2049 = vunpack.c.l.b16 %v1973
      %v2050 = vunpack.c.l.b16 %v1974
      %v2051 = vunpack.c.l.b16 %v1975
      %v2052 = vunpack.c.l.b16 %v1976
      %v2053 = vunpack.c.l.b16 %v1977
      %v2054 = vunpack.c.l.b16 %v1978
      %v2055 = vunpack.c.l.b16 %v1979
      %v2056 = vunpack.c.l.b16 %v1980
      %v2057 = vunpack.c.l.b16 %v1981
      %v2058 = vunpack.c.l.b16 %v1982
      %v2059 = vunpack.c.l.b16 %v1983
      %v2060 = vpack.c.b16 %v2024, %v2023
      %v2061 = vpack.c.b16 %v2026, %v2025
      %v2062 = vpack.c.b16 %v2028, %v2027
      %v2063 = vpack.c.b16 %v2030, %v2029
      %v2064 = vpack.c.b16 %v2032, %v2031
      %v2065 = vpack.c.b16 %v2034, %v2033
      %v2066 = vpack.c.b16 %v2036, %v2035
      %v2067 = vpack.c.b16 %v2038, %v2037
      %v2068 = vpack.c.b16 %v2040, %v2039
      %v2069 = vpack.c.b16 %v2042, %v2041
      %v2070 = vpack.c.b16 %v2044, %v2043
      %v2071 = vpack.c.b16 %v2046, %v2045
      %v2072 = vpack.c.b16 %v2048, %v2047
      %v2073 = vpack.c.b16 %v2050, %v2049
      %v2074 = vpack.c.b16 %v2052, %v2051
      %v2075 = vpack.c.b16 %v2054, %v2053
      %v2076 = vpack.c.b16 %v2056, %v2055
      %v2077 = vpack.c.b16 %v2058, %v2057
      %v2078 = vpack.c.b16 %v2059, %v2059
      %v2079 = vrot.slane %v2060, 1
      %v2080 = vrot.slane %v2061, 1
      %v2081 = vsel %vm1567, %v2079, %v2080
      %v2082 = vrot.slane %v2062, 1
      %v2083 = vsel %vm1567, %v2080, %v2082
      %v2084 = vrot.slane %v2063, 1
      %v2085 = vsel %vm1567, %v2082, %v2084
      %v2086 = vrot.slane %v2064, 1
      %v2087 = vsel %vm1567, %v2084, %v2086
      %v2088 = vrot.slane %v2065, 1
      %v2089 = vsel %vm1567, %v2086, %v2088
      %v2090 = vrot.slane %v2066, 1
      %v2091 = vsel %vm1567, %v2088, %v2090
      %v2092 = vrot.slane %v2067, 1
      %v2093 = vsel %vm1567, %v2090, %v2092
      %v2094 = vrot.slane %v2068, 1
      %v2095 = vsel %vm1567, %v2092, %v2094
      %v2096 = vrot.slane %v2069, 1
      %v2097 = vsel %vm1567, %v2094, %v2096
      %v2098 = vrot.slane %v2070, 1
      %v2099 = vsel %vm1567, %v2096, %v2098
      %v2100 = vrot.slane %v2071, 1
      %v2101 = vsel %vm1567, %v2098, %v2100
      %v2102 = vrot.slane %v2072, 1
      %v2103 = vsel %vm1567, %v2100, %v2102
      %v2104 = vrot.slane %v2073, 1
      %v2105 = vsel %vm1567, %v2102, %v2104
      %v2106 = vrot.slane %v2074, 1
      %v2107 = vsel %vm1567, %v2104, %v2106
      %v2108 = vrot.slane %v2075, 1
      %v2109 = vsel %vm1567, %v2106, %v2108
      %v2110 = vrot.slane %v2076, 1
      %v2111 = vsel %vm1567, %v2108, %v2110
      %v2112 = vrot.slane %v2077, 1
      %v2113 = vsel %vm1567, %v2110, %v2112
      %v2114 = vrot.slane %v2078, 1
      %v2115 = vsel %vm1567, %v2112, %v2114
      %v2117 = vsel %vm269, %v2081, 0
      %v2120 = vsel %vm269, %v2083, 0
      %v2123 = vsel %vm269, %v2085, 0
      %v2126 = vsel %vm269, %v2087, 0
      %v2129 = vsel %vm269, %v2089, 0
      %v2132 = vsel %vm269, %v2091, 0
      %v2135 = vsel %vm269, %v2093, 0
      %v2138 = vsel %vm269, %v2095, 0
      %v2141 = vsel %vm269, %v2097, 0
      %v2144 = vsel %vm269, %v2099, 0
      %v2147 = vsel %vm269, %v2101, 0
      %v2150 = vsel %vm269, %v2103, 0
      %v2153 = vsel %vm269, %v2105, 0
      %v2156 = vsel %vm269, %v2107, 0
      %v2159 = vsel %vm269, %v2109, 0
      %v2162 = vsel %vm269, %v2111, 0
      %v2165 = vsel %vm269, %v2113, 0
      %v2168 = vsel %vm269, %v2115, 0
      %v2171 = vsel %vm523, %v1985, 0
      %2173 = vmatprep.subr.bf16.mxu0 0
      %2174 = vmatpush1.bf16.msra.mxu0 %v2171
      %2175 = vmatprep.subr.bf16.mxu0 0
      %2176 = vmatpush1.bf16.msra.mxu0 0
      %2177 = vmatprep.subr.bf16.mxu0 0
      %2178 = vmatpush1.bf16.msra.mxu0 0
      %2179 = vmatprep.subr.bf16.mxu0 0
      %2180 = vmatpush1.bf16.msra.mxu0 0
      %2181 = vmatprep.subr.bf16.mxu0 0
      %2182 = vmatpush1.bf16.msra.mxu0 0
      %2183 = vmatprep.subr.bf16.mxu0 0
      %2184 = vmatpush1.bf16.msra.mxu0 0
      %2185 = vmatprep.subr.bf16.mxu0 0
      %2186 = vmatpush1.bf16.msra.mxu0 0
      %2187 = vmatprep.subr.bf16.mxu0 0
      %2188 = vmatpush1.bf16.msra.mxu0 0
      %2189 = vmatprep.subr.bf16.mxu0 0
      %2190 = vmatpush1.bf16.msra.mxu0 0
      %2191 = vmatprep.subr.bf16.mxu0 0
      %2192 = vmatpush1.bf16.msra.mxu0 0
      %2193 = vmatprep.subr.bf16.mxu0 0
      %2194 = vmatpush1.bf16.msra.mxu0 0
      %2195 = vmatprep.subr.bf16.mxu0 0
      %2196 = vmatpush1.bf16.msra.mxu0 0
      %2197 = vmatprep.subr.bf16.mxu0 0
      %2198 = vmatpush1.bf16.msra.mxu0 0
      %2199 = vmatprep.subr.bf16.mxu0 0
      %2200 = vmatpush1.bf16.msra.mxu0 0
      %2201 = vmatprep.subr.bf16.mxu0 0
      %2202 = vmatpush1.bf16.msra.mxu0 0
      %2203 = vmatprep.subr.bf16.mxu0 0
      %2204 = vmatpush1.bf16.msra.mxu0 0
      %2205 = vmatprep.mubr.bf16.mxu0 0
      %2206 = vmatmul.mubr.bf16.gmra.mrb[0].mxu0 %v2117
      %v2207 = vpop.f32.mrb[0].mxu0
      %v2208 = vadd.f32 0.0, %v2207
      %v2209 = vpop.f32.mrb[0].mxu0
      %v2210 = vpop.f32.mrb[0].mxu0
      %v2211 = vadd.f32 0.0, %v2210
      %v2212 = vpop.f32.mrb[0].mxu0
      %2213 = vmatprep.mubr.bf16.mxu0 0
      %2214 = vmatmul.mubr.bf16.gmra.mrb[0].mxu0 %v2120
      %v2215 = vpop.f32.mrb[0].mxu0
      %v2216 = vadd.f32 0.0, %v2215
      %v2217 = vpop.f32.mrb[0].mxu0
      %v2218 = vpop.f32.mrb[0].mxu0
      %v2219 = vadd.f32 0.0, %v2218
      %v2220 = vpop.f32.mrb[0].mxu0
      %2221 = vmatprep.mubr.bf16.mxu0 0
      %2222 = vmatmul.mubr.bf16.gmra.mrb[0].mxu0 %v2123
      %v2223 = vpop.f32.mrb[0].mxu0
      %v2224 = vadd.f32 0.0, %v2223
      %v2225 = vpop.f32.mrb[0].mxu0
      %v2226 = vpop.f32.mrb[0].mxu0
      %v2227 = vadd.f32 0.0, %v2226
      %v2228 = vpop.f32.mrb[0].mxu0
      %2229 = vmatprep.mubr.bf16.mxu0 0
      %2230 = vmatmul.mubr.bf16.gmra.mrb[0].mxu0 %v2126
      %v2231 = vpop.f32.mrb[0].mxu0
      %v2232 = vadd.f32 0.0, %v2231
      %v2233 = vpop.f32.mrb[0].mxu0
      %v2234 = vpop.f32.mrb[0].mxu0
      %v2235 = vadd.f32 0.0, %v2234
      %v2236 = vpop.f32.mrb[0].mxu0
      %2237 = vmatprep.mubr.bf16.mxu0 0
      %2238 = vmatmul.mubr.bf16.gmra.mrb[0].mxu0 %v2129
      %v2239 = vpop.f32.mrb[0].mxu0
      %v2240 = vadd.f32 0.0, %v2239
      %v2241 = vpop.f32.mrb[0].mxu0
      %v2242 = vpop.f32.mrb[0].mxu0
      %v2243 = vadd.f32 0.0, %v2242
      %v2244 = vpop.f32.mrb[0].mxu0
      %2245 = vmatprep.mubr.bf16.mxu0 0
      %2246 = vmatmul.mubr.bf16.gmra.mrb[0].mxu0 %v2132
      %v2247 = vpop.f32.mrb[0].mxu0
      %v2248 = vadd.f32 0.0, %v2247
      %v2249 = vpop.f32.mrb[0].mxu0
      %v2250 = vpop.f32.mrb[0].mxu0
      %v2251 = vadd.f32 0.0, %v2250
      %v2252 = vpop.f32.mrb[0].mxu0
      %2253 = vmatprep.mubr.bf16.mxu0 0
      %2254 = vmatmul.mubr.bf16.gmra.mrb[0].mxu0 %v2135
      %v2255 = vpop.f32.mrb[0].mxu0
      %v2256 = vadd.f32 0.0, %v2255
      %v2257 = vpop.f32.mrb[0].mxu0
      %v2258 = vpop.f32.mrb[0].mxu0
      %v2259 = vadd.f32 0.0, %v2258
      %v2260 = vpop.f32.mrb[0].mxu0
      %2261 = vmatprep.mubr.bf16.mxu0 0
      %2262 = vmatmul.mubr.bf16.gmra.mrb[0].mxu0 %v2138
      %v2263 = vpop.f32.mrb[0].mxu0
      %v2264 = vadd.f32 0.0, %v2263
      %v2265 = vpop.f32.mrb[0].mxu0
      %v2266 = vpop.f32.mrb[0].mxu0
      %v2267 = vadd.f32 0.0, %v2266
      %v2268 = vpop.f32.mrb[0].mxu0
      %2269 = vmatprep.mubr.bf16.mxu0 0
      %2270 = vmatmul.mubr.bf16.gmra.mrb[0].mxu0 %v2141
      %v2271 = vpop.f32.mrb[0].mxu0
      %v2272 = vadd.f32 0.0, %v2271
      %v2273 = vpop.f32.mrb[0].mxu0
      %v2274 = vpop.f32.mrb[0].mxu0
      %v2275 = vadd.f32 0.0, %v2274
      %v2276 = vpop.f32.mrb[0].mxu0
      %2277 = vmatprep.mubr.bf16.mxu0 0
      %2278 = vmatmul.mubr.bf16.gmra.mrb[0].mxu0 %v2144
      %v2279 = vpop.f32.mrb[0].mxu0
      %v2280 = vadd.f32 0.0, %v2279
      %v2281 = vpop.f32.mrb[0].mxu0
      %v2282 = vpop.f32.mrb[0].mxu0
      %v2283 = vadd.f32 0.0, %v2282
      %v2284 = vpop.f32.mrb[0].mxu0
      %2285 = vmatprep.mubr.bf16.mxu0 0
      %2286 = vmatmul.mubr.bf16.gmra.mrb[0].mxu0 %v2147
      %v2287 = vpop.f32.mrb[0].mxu0
      %v2288 = vadd.f32 0.0, %v2287
      %v2289 = vpop.f32.mrb[0].mxu0
      %v2290 = vpop.f32.mrb[0].mxu0
      %v2291 = vadd.f32 0.0, %v2290
      %v2292 = vpop.f32.mrb[0].mxu0
      %2293 = vmatprep.mubr.bf16.mxu0 0
      %2294 = vmatmul.mubr.bf16.gmra.mrb[0].mxu0 %v2150
      %v2295 = vpop.f32.mrb[0].mxu0
      %v2296 = vadd.f32 0.0, %v2295
      %v2297 = vpop.f32.mrb[0].mxu0
      %v2298 = vpop.f32.mrb[0].mxu0
      %v2299 = vadd.f32 0.0, %v2298
      %v2300 = vpop.f32.mrb[0].mxu0
      %2301 = vmatprep.mubr.bf16.mxu0 0
      %2302 = vmatmul.mubr.bf16.gmra.mrb[0].mxu0 %v2153
      %v2303 = vpop.f32.mrb[0].mxu0
      %v2304 = vadd.f32 0.0, %v2303
      %v2305 = vpop.f32.mrb[0].mxu0
      %v2306 = vpop.f32.mrb[0].mxu0
      %v2307 = vadd.f32 0.0, %v2306
      %v2308 = vpop.f32.mrb[0].mxu0
      %2309 = vmatprep.mubr.bf16.mxu0 0
      %2310 = vmatmul.mubr.bf16.gmra.mrb[0].mxu0 %v2156
      %v2311 = vpop.f32.mrb[0].mxu0
      %v2312 = vadd.f32 0.0, %v2311
      %v2313 = vpop.f32.mrb[0].mxu0
      %v2314 = vpop.f32.mrb[0].mxu0
      %v2315 = vadd.f32 0.0, %v2314
      %v2316 = vpop.f32.mrb[0].mxu0
      %2317 = vmatprep.mubr.bf16.mxu0 0
      %2318 = vmatmul.mubr.bf16.gmra.mrb[0].mxu0 %v2159
      %v2319 = vpop.f32.mrb[0].mxu0
      %v2320 = vadd.f32 0.0, %v2319
      %v2321 = vpop.f32.mrb[0].mxu0
      %v2322 = vpop.f32.mrb[0].mxu0
      %v2323 = vadd.f32 0.0, %v2322
      %v2324 = vpop.f32.mrb[0].mxu0
      %2325 = vmatprep.mubr.bf16.mxu0 0
      %2326 = vmatmul.mubr.bf16.gmra.mrb[0].mxu0 %v2162
      %v2327 = vpop.f32.mrb[0].mxu0
      %v2328 = vadd.f32 0.0, %v2327
      %v2329 = vpop.f32.mrb[0].mxu0
      %v2330 = vpop.f32.mrb[0].mxu0
      %v2331 = vadd.f32 0.0, %v2330
      %v2332 = vpop.f32.mrb[0].mxu0
      %2333 = vmatprep.mubr.bf16.mxu0 0
      %2334 = vmatmul.mubr.bf16.gmra.mrb[0].mxu0 %v2165
      %v2335 = vpop.f32.mrb[0].mxu0
      %v2336 = vadd.f32 0.0, %v2335
      %v2337 = vpop.f32.mrb[0].mxu0
      %v2338 = vpop.f32.mrb[0].mxu0
      %v2339 = vadd.f32 0.0, %v2338
      %v2340 = vpop.f32.mrb[0].mxu0
      %2341 = vmatprep.mubr.bf16.mxu0 0
      %2342 = vmatmul.mubr.bf16.gmra.mrb[0].mxu0 %v2168
      %v2343 = vpop.f32.mrb[0].mxu0
      %v2344 = vadd.f32 0.0, %v2343
      %v2345 = vpop.f32.mrb[0].mxu0
      %v2346 = vpop.f32.mrb[0].mxu0
      %v2347 = vadd.f32 0.0, %v2346
      %v2348 = vpop.f32.mrb[0].mxu0
      %2349 = vdwg.mxu0
      %v2350 = vadd.f32 %v1911, %v2208
      %v2351 = vadd.f32 %v1912, %v2211
      %v2352 = vadd.f32 %v1913, %v2216
      %v2353 = vadd.f32 %v1914, %v2219
      %v2354 = vadd.f32 %v1915, %v2224
      %v2355 = vadd.f32 %v1916, %v2227
      %v2356 = vadd.f32 %v1917, %v2232
      %v2357 = vadd.f32 %v1918, %v2235
      %v2358 = vadd.f32 %v1919, %v2240
      %v2359 = vadd.f32 %v1920, %v2243
      %v2360 = vadd.f32 %v1921, %v2248
      %v2361 = vadd.f32 %v1922, %v2251
      %v2362 = vadd.f32 %v1923, %v2256
      %v2363 = vadd.f32 %v1924, %v2259
      %v2364 = vadd.f32 %v1925, %v2264
      %v2365 = vadd.f32 %v1926, %v2267
      %v2366 = vadd.f32 %v1927, %v2272
      %v2367 = vadd.f32 %v1928, %v2275
      %v2368 = vadd.f32 %v1929, %v2280
      %v2369 = vadd.f32 %v1930, %v2283
      %v2370 = vadd.f32 %v1931, %v2288
      %v2371 = vadd.f32 %v1932, %v2291
      %v2372 = vadd.f32 %v1933, %v2296
      %v2373 = vadd.f32 %v1934, %v2299
      %v2374 = vadd.f32 %v1935, %v2304
      %v2375 = vadd.f32 %v1936, %v2307
      %v2376 = vadd.f32 %v1937, %v2312
      %v2377 = vadd.f32 %v1938, %v2315
      %v2378 = vadd.f32 %v1939, %v2320
      %v2379 = vadd.f32 %v1940, %v2323
      %v2380 = vadd.f32 %v1941, %v2328
      %v2381 = vadd.f32 %v1942, %v2331
      %v2382 = vadd.f32 %v1943, %v2336
      %v2383 = vadd.f32 %v1944, %v2339
      %v2384 = vadd.f32 %v1945, %v2344
      %v2385 = vadd.f32 %v1946, %v2347
      %2386 = vst.msk [vmem:[#allocation2] sm:$0xff] %vm269, %v2350
      %2387 = vst.msk [vmem:[#allocation2 + $0x8] sm:$0xff] %vm269, %v2351
      %2388 = vst.msk [vmem:[#allocation2 + $0x10] sm:$0xff] %vm269, %v2352
      %2389 = vst.msk [vmem:[#allocation2 + $0x18] sm:$0xff] %vm269, %v2353
      %2390 = vst.msk [vmem:[#allocation2 + $0x20] sm:$0xff] %vm269, %v2354
      %2391 = vst.msk [vmem:[#allocation2 + $0x28] sm:$0xff] %vm269, %v2355
      %2392 = vst.msk [vmem:[#allocation2 + $0x30] sm:$0xff] %vm269, %v2356
      %2393 = vst.msk [vmem:[#allocation2 + $0x38] sm:$0xff] %vm269, %v2357
      %2394 = vst.msk [vmem:[#allocation2 + $0x40] sm:$0xff] %vm269, %v2358
      %2395 = vst.msk [vmem:[#allocation2 + $0x48] sm:$0xff] %vm269, %v2359
      %2396 = vst.msk [vmem:[#allocation2 + $0x50] sm:$0xff] %vm269, %v2360
      %2397 = vst.msk [vmem:[#allocation2 + $0x58] sm:$0xff] %vm269, %v2361
      %2398 = vst.msk [vmem:[#allocation2 + $0x60] sm:$0xff] %vm269, %v2362
      %2399 = vst.msk [vmem:[#allocation2 + $0x68] sm:$0xff] %vm269, %v2363
      %2400 = vst.msk [vmem:[#allocation2 + $0x70] sm:$0xff] %vm269, %v2364
      %2401 = vst.msk [vmem:[#allocation2 + $0x78] sm:$0xff] %vm269, %v2365
      %2402 = vst.msk [vmem:[#allocation2 + $0x80] sm:$0xff] %vm269, %v2366
      %2403 = vst.msk [vmem:[#allocation2 + $0x88] sm:$0xff] %vm269, %v2367
      %2404 = vst.msk [vmem:[#allocation2 + $0x90] sm:$0xff] %vm269, %v2368
      %2405 = vst.msk [vmem:[#allocation2 + $0x98] sm:$0xff] %vm269, %v2369
      %2406 = vst.msk [vmem:[#allocation2 + $0xa0] sm:$0xff] %vm269, %v2370
      %2407 = vst.msk [vmem:[#allocation2 + $0xa8] sm:$0xff] %vm269, %v2371
      %2408 = vst.msk [vmem:[#allocation2 + $0xb0] sm:$0xff] %vm269, %v2372
      %2409 = vst.msk [vmem:[#allocation2 + $0xb8] sm:$0xff] %vm269, %v2373
      %2410 = vst.msk [vmem:[#allocation2 + $0xc0] sm:$0xff] %vm269, %v2374
      %2411 = vst.msk [vmem:[#allocation2 + $0xc8] sm:$0xff] %vm269, %v2375
      %2412 = vst.msk [vmem:[#allocation2 + $0xd0] sm:$0xff] %vm269, %v2376
      %2413 = vst.msk [vmem:[#allocation2 + $0xd8] sm:$0xff] %vm269, %v2377
      %2414 = vst.msk [vmem:[#allocation2 + $0xe0] sm:$0xff] %vm269, %v2378
      %2415 = vst.msk [vmem:[#allocation2 + $0xe8] sm:$0xff] %vm269, %v2379
      %2416 = vst.msk [vmem:[#allocation2 + $0xf0] sm:$0xff] %vm269, %v2380
      %2417 = vst.msk [vmem:[#allocation2 + $0xf8] sm:$0xff] %vm269, %v2381
      %2418 = vst.msk [vmem:[#allocation2 + $0x100] sm:$0xff] %vm269, %v2382
      %2419 = vst.msk [vmem:[#allocation2 + $0x108] sm:$0xff] %vm269, %v2383
      %2420 = vst.msk [vmem:[#allocation2 + $0x110] sm:$0xff] %vm269, %v2384
      %2421 = vst.msk [vmem:[#allocation2 + $0x118] sm:$0xff] %vm269, %v2385
      %v2422 = vld [vmem:[#allocation2] sm:$0xff]
      %v2423 = vld [vmem:[#allocation2 + $0x8] sm:$0xff]
      %v2424 = vld [vmem:[#allocation2 + $0x10] sm:$0xff]
      %v2425 = vld [vmem:[#allocation2 + $0x18] sm:$0xff]
      %v2426 = vld [vmem:[#allocation2 + $0x20] sm:$0xff]
      %v2427 = vld [vmem:[#allocation2 + $0x28] sm:$0xff]
      %v2428 = vld [vmem:[#allocation2 + $0x30] sm:$0xff]
      %v2429 = vld [vmem:[#allocation2 + $0x38] sm:$0xff]
      %v2430 = vld [vmem:[#allocation2 + $0x40] sm:$0xff]
      %v2431 = vld [vmem:[#allocation2 + $0x48] sm:$0xff]
      %v2432 = vld [vmem:[#allocation2 + $0x50] sm:$0xff]
      %v2433 = vld [vmem:[#allocation2 + $0x58] sm:$0xff]
      %v2434 = vld [vmem:[#allocation2 + $0x60] sm:$0xff]
      %v2435 = vld [vmem:[#allocation2 + $0x68] sm:$0xff]
      %v2436 = vld [vmem:[#allocation2 + $0x70] sm:$0xff]
      %v2437 = vld [vmem:[#allocation2 + $0x78] sm:$0xff]
      %v2438 = vld [vmem:[#allocation2 + $0x80] sm:$0xff]
      %v2439 = vld [vmem:[#allocation2 + $0x88] sm:$0xff]
      %v2440 = vld [vmem:[#allocation2 + $0x90] sm:$0xff]
      %v2441 = vld [vmem:[#allocation2 + $0x98] sm:$0xff]
      %v2442 = vld [vmem:[#allocation2 + $0xa0] sm:$0xff]
      %v2443 = vld [vmem:[#allocation2 + $0xa8] sm:$0xff]
      %v2444 = vld [vmem:[#allocation2 + $0xb0] sm:$0xff]
      %v2445 = vld [vmem:[#allocation2 + $0xb8] sm:$0xff]
      %v2446 = vld [vmem:[#allocation2 + $0xc0] sm:$0xff]
      %v2447 = vld [vmem:[#allocation2 + $0xc8] sm:$0xff]
      %v2448 = vld [vmem:[#allocation2 + $0xd0] sm:$0xff]
      %v2449 = vld [vmem:[#allocation2 + $0xd8] sm:$0xff]
      %v2450 = vld [vmem:[#allocation2 + $0xe0] sm:$0xff]
      %v2451 = vld [vmem:[#allocation2 + $0xe8] sm:$0xff]
      %v2452 = vld [vmem:[#allocation2 + $0xf0] sm:$0xff]
      %v2453 = vld [vmem:[#allocation2 + $0xf8] sm:$0xff]
      %v2454 = vld [vmem:[#allocation2 + $0x100] sm:$0xff]
      %v2455 = vld [vmem:[#allocation2 + $0x108] sm:$0xff]
      %v2456 = vld [vmem:[#allocation2 + $0x110] sm:$0xff]
      %v2457 = vld [vmem:[#allocation2 + $0x118] sm:$0xff]
      %v2458 = vld [vmem:[%s251 + $0x8] sm:$0xe]
      %v2459 = vld [vmem:[%s251 + $0xc] sm:$0xf]
      %v2460 = vld [vmem:[%s251 + $0x10] sm:$0xf]
      %v2461 = vld [vmem:[%s251 + $0x14] sm:$0xf]
      %v2462 = vld [vmem:[%s251 + $0x18] sm:$0xf]
      %v2463 = vld [vmem:[%s251 + $0x1c] sm:$0xf]
      %v2464 = vld [vmem:[%s251 + $0x20] sm:$0xf]
      %v2465 = vld [vmem:[%s251 + $0x24] sm:$0xf]
      %v2466 = vld [vmem:[%s251 + $0x28] sm:$0xf]
      %v2467 = vld [vmem:[%s251 + $0x2c] sm:$0xf]
      %v2468 = vld [vmem:[%s251 + $0x30] sm:$0xf]
      %v2469 = vld [vmem:[%s251 + $0x34] sm:$0xf]
      %v2470 = vld [vmem:[%s251 + $0x38] sm:$0xf]
      %v2471 = vld [vmem:[%s251 + $0x3c] sm:$0xf]
      %v2472 = vld [vmem:[%s251 + $0x40] sm:$0xf]
      %v2473 = vld [vmem:[%s251 + $0x44] sm:$0xf]
      %v2474 = vld [vmem:[%s251 + $0x48] sm:$0xf]
      %v2475 = vld [vmem:[%s251 + $0x4c] sm:$0xf]
      %v2476 = vld [vmem:[%s251 + $0x50] sm:$0xf]
      %v2477 = vld [vmem:[%s251 + $0x54] sm:$0xf]
      %v2478 = vld [vmem:[%s251 + $0x58] sm:$0xf]
      %v2479 = vld [vmem:[%s251 + $0x5c] sm:$0xf]
      %v2480 = vld [vmem:[%s251 + $0x60] sm:$0xf]
      %v2481 = vld [vmem:[%s251 + $0x64] sm:$0xf]
      %v2482 = vld [vmem:[%s251 + $0x68] sm:$0xf]
      %v2483 = vld [vmem:[%s251 + $0x6c] sm:$0xf]
      %v2484 = vld [vmem:[%s251 + $0x70] sm:$0xf]
      %v2485 = vld [vmem:[%s251 + $0x74] sm:$0xf]
      %v2486 = vld [vmem:[%s251 + $0x78] sm:$0xf]
      %v2487 = vld [vmem:[%s251 + $0x7c] sm:$0xf]
      %v2488 = vld [vmem:[%s251 + $0x80] sm:$0xf]
      %v2489 = vld [vmem:[%s251 + $0x84] sm:$0xf]
      %v2490 = vld [vmem:[%s251 + $0x88] sm:$0xf]
      %v2491 = vld [vmem:[%s251 + $0x8c] sm:$0xf]
      %v2492 = vld [vmem:[%s251 + $0x90] sm:$0xf]
      %v2493 = vld [vmem:[%s251 + $0x94] sm:$0xf]
      %v2494 = vld [vmem:[%s251 + $0x98] sm:$0x3]
      %s2495 = scalar_lea.vmem %s1, 8
      %v2496 = vld [vmem:[%s2495] sm:$0x3]
      %v2534 = vunpack.c.l.b16 %v2458
      %v2535 = vunpack.c.l.b16 %v2459
      %v2536 = vunpack.c.l.b16 %v2460
      %v2537 = vunpack.c.l.b16 %v2461
      %v2538 = vunpack.c.l.b16 %v2462
      %v2539 = vunpack.c.l.b16 %v2463
      %v2540 = vunpack.c.l.b16 %v2464
      %v2541 = vunpack.c.l.b16 %v2465
      %v2542 = vunpack.c.l.b16 %v2466
      %v2543 = vunpack.c.l.b16 %v2467
      %v2544 = vunpack.c.l.b16 %v2468
      %v2545 = vunpack.c.l.b16 %v2469
      %v2546 = vunpack.c.l.b16 %v2470
      %v2547 = vunpack.c.l.b16 %v2471
      %v2548 = vunpack.c.l.b16 %v2472
      %v2549 = vunpack.c.l.b16 %v2473
      %v2550 = vunpack.c.l.b16 %v2474
      %v2551 = vunpack.c.l.b16 %v2475
      %v2552 = vunpack.c.l.b16 %v2476
      %v2553 = vunpack.c.l.b16 %v2477
      %v2554 = vunpack.c.l.b16 %v2478
      %v2555 = vunpack.c.l.b16 %v2479
      %v2556 = vunpack.c.l.b16 %v2480
      %v2557 = vunpack.c.l.b16 %v2481
      %v2558 = vunpack.c.l.b16 %v2482
      %v2559 = vunpack.c.l.b16 %v2483
      %v2560 = vunpack.c.l.b16 %v2484
      %v2561 = vunpack.c.l.b16 %v2485
      %v2562 = vunpack.c.l.b16 %v2486
      %v2563 = vunpack.c.l.b16 %v2487
      %v2564 = vunpack.c.l.b16 %v2488
      %v2565 = vunpack.c.l.b16 %v2489
      %v2566 = vunpack.c.l.b16 %v2490
      %v2567 = vunpack.c.l.b16 %v2491
      %v2568 = vunpack.c.l.b16 %v2492
      %v2569 = vunpack.c.l.b16 %v2493
      %v2570 = vunpack.c.l.b16 %v2494
      %v2571 = vpack.c.b16 %v2535, %v2534
      %v2572 = vpack.c.b16 %v2537, %v2536
      %v2573 = vpack.c.b16 %v2539, %v2538
      %v2574 = vpack.c.b16 %v2541, %v2540
      %v2575 = vpack.c.b16 %v2543, %v2542
      %v2576 = vpack.c.b16 %v2545, %v2544
      %v2577 = vpack.c.b16 %v2547, %v2546
      %v2578 = vpack.c.b16 %v2549, %v2548
      %v2579 = vpack.c.b16 %v2551, %v2550
      %v2580 = vpack.c.b16 %v2553, %v2552
      %v2581 = vpack.c.b16 %v2555, %v2554
      %v2582 = vpack.c.b16 %v2557, %v2556
      %v2583 = vpack.c.b16 %v2559, %v2558
      %v2584 = vpack.c.b16 %v2561, %v2560
      %v2585 = vpack.c.b16 %v2563, %v2562
      %v2586 = vpack.c.b16 %v2565, %v2564
      %v2587 = vpack.c.b16 %v2567, %v2566
      %v2588 = vpack.c.b16 %v2569, %v2568
      %v2589 = vpack.c.b16 %v2570, %v2570
      %vm2590 = vsmask.f32 6400
      %v2592 = vshrl.u32 %v2571, 16
      %v2594 = vrot.slane %v2592, 1
      %v2595 = vshll.u32 %v2571, 16
      %v2597 = vrot.slane %v2595, 2
      %v2598 = vor.u32 %v2594, %v2597
      %v2600 = vshrl.u32 %v2572, 16
      %v2602 = vrot.slane %v2600, 1
      %v2603 = vshll.u32 %v2572, 16
      %v2605 = vrot.slane %v2603, 2
      %v2606 = vor.u32 %v2602, %v2605
      %v2607 = vsel %vm2590, %v2598, %v2606
      %v2609 = vshrl.u32 %v2573, 16
      %v2611 = vrot.slane %v2609, 1
      %v2612 = vshll.u32 %v2573, 16
      %v2614 = vrot.slane %v2612, 2
      %v2615 = vor.u32 %v2611, %v2614
      %v2616 = vsel %vm2590, %v2606, %v2615
      %v2618 = vshrl.u32 %v2574, 16
      %v2620 = vrot.slane %v2618, 1
      %v2621 = vshll.u32 %v2574, 16
      %v2623 = vrot.slane %v2621, 2
      %v2624 = vor.u32 %v2620, %v2623
      %v2625 = vsel %vm2590, %v2615, %v2624
      %v2627 = vshrl.u32 %v2575, 16
      %v2629 = vrot.slane %v2627, 1
      %v2630 = vshll.u32 %v2575, 16
      %v2632 = vrot.slane %v2630, 2
      %v2633 = vor.u32 %v2629, %v2632
      %v2634 = vsel %vm2590, %v2624, %v2633
      %v2636 = vshrl.u32 %v2576, 16
      %v2638 = vrot.slane %v2636, 1
      %v2639 = vshll.u32 %v2576, 16
      %v2641 = vrot.slane %v2639, 2
      %v2642 = vor.u32 %v2638, %v2641
      %v2643 = vsel %vm2590, %v2633, %v2642
      %v2645 = vshrl.u32 %v2577, 16
      %v2647 = vrot.slane %v2645, 1
      %v2648 = vshll.u32 %v2577, 16
      %v2650 = vrot.slane %v2648, 2
      %v2651 = vor.u32 %v2647, %v2650
      %v2652 = vsel %vm2590, %v2642, %v2651
      %v2654 = vshrl.u32 %v2578, 16
      %v2656 = vrot.slane %v2654, 1
      %v2657 = vshll.u32 %v2578, 16
      %v2659 = vrot.slane %v2657, 2
      %v2660 = vor.u32 %v2656, %v2659
      %v2661 = vsel %vm2590, %v2651, %v2660
      %v2663 = vshrl.u32 %v2579, 16
      %v2665 = vrot.slane %v2663, 1
      %v2666 = vshll.u32 %v2579, 16
      %v2668 = vrot.slane %v2666, 2
      %v2669 = vor.u32 %v2665, %v2668
      %v2670 = vsel %vm2590, %v2660, %v2669
      %v2672 = vshrl.u32 %v2580, 16
      %v2674 = vrot.slane %v2672, 1
      %v2675 = vshll.u32 %v2580, 16
      %v2677 = vrot.slane %v2675, 2
      %v2678 = vor.u32 %v2674, %v2677
      %v2679 = vsel %vm2590, %v2669, %v2678
      %v2681 = vshrl.u32 %v2581, 16
      %v2683 = vrot.slane %v2681, 1
      %v2684 = vshll.u32 %v2581, 16
      %v2686 = vrot.slane %v2684, 2
      %v2687 = vor.u32 %v2683, %v2686
      %v2688 = vsel %vm2590, %v2678, %v2687
      %v2690 = vshrl.u32 %v2582, 16
      %v2692 = vrot.slane %v2690, 1
      %v2693 = vshll.u32 %v2582, 16
      %v2695 = vrot.slane %v2693, 2
      %v2696 = vor.u32 %v2692, %v2695
      %v2697 = vsel %vm2590, %v2687, %v2696
      %v2699 = vshrl.u32 %v2583, 16
      %v2701 = vrot.slane %v2699, 1
      %v2702 = vshll.u32 %v2583, 16
      %v2704 = vrot.slane %v2702, 2
      %v2705 = vor.u32 %v2701, %v2704
      %v2706 = vsel %vm2590, %v2696, %v2705
      %v2708 = vshrl.u32 %v2584, 16
      %v2710 = vrot.slane %v2708, 1
      %v2711 = vshll.u32 %v2584, 16
      %v2713 = vrot.slane %v2711, 2
      %v2714 = vor.u32 %v2710, %v2713
      %v2715 = vsel %vm2590, %v2705, %v2714
      %v2717 = vshrl.u32 %v2585, 16
      %v2719 = vrot.slane %v2717, 1
      %v2720 = vshll.u32 %v2585, 16
      %v2722 = vrot.slane %v2720, 2
      %v2723 = vor.u32 %v2719, %v2722
      %v2724 = vsel %vm2590, %v2714, %v2723
      %v2726 = vshrl.u32 %v2586, 16
      %v2728 = vrot.slane %v2726, 1
      %v2729 = vshll.u32 %v2586, 16
      %v2731 = vrot.slane %v2729, 2
      %v2732 = vor.u32 %v2728, %v2731
      %v2733 = vsel %vm2590, %v2723, %v2732
      %v2735 = vshrl.u32 %v2587, 16
      %v2737 = vrot.slane %v2735, 1
      %v2738 = vshll.u32 %v2587, 16
      %v2740 = vrot.slane %v2738, 2
      %v2741 = vor.u32 %v2737, %v2740
      %v2742 = vsel %vm2590, %v2732, %v2741
      %v2744 = vshrl.u32 %v2588, 16
      %v2746 = vrot.slane %v2744, 1
      %v2747 = vshll.u32 %v2588, 16
      %v2749 = vrot.slane %v2747, 2
      %v2750 = vor.u32 %v2746, %v2749
      %v2751 = vsel %vm2590, %v2741, %v2750
      %v2753 = vshrl.u32 %v2589, 16
      %v2755 = vrot.slane %v2753, 1
      %v2756 = vshll.u32 %v2589, 16
      %v2758 = vrot.slane %v2756, 2
      %v2759 = vor.u32 %v2755, %v2758
      %v2760 = vsel %vm2590, %v2750, %v2759
      %v2762 = vsel %vm269, %v2607, 0
      %v2765 = vsel %vm269, %v2616, 0
      %v2768 = vsel %vm269, %v2625, 0
      %v2771 = vsel %vm269, %v2634, 0
      %v2774 = vsel %vm269, %v2643, 0
      %v2777 = vsel %vm269, %v2652, 0
      %v2780 = vsel %vm269, %v2661, 0
      %v2783 = vsel %vm269, %v2670, 0
      %v2786 = vsel %vm269, %v2679, 0
      %v2789 = vsel %vm269, %v2688, 0
      %v2792 = vsel %vm269, %v2697, 0
      %v2795 = vsel %vm269, %v2706, 0
      %v2798 = vsel %vm269, %v2715, 0
      %v2801 = vsel %vm269, %v2724, 0
      %v2804 = vsel %vm269, %v2733, 0
      %v2807 = vsel %vm269, %v2742, 0
      %v2810 = vsel %vm269, %v2751, 0
      %v2813 = vsel %vm269, %v2760, 0
      %v2816 = vsel %vm523, %v2496, 0
      %2818 = vmatprep.subr.bf16.mxu0 0
      %2819 = vmatpush1.bf16.msra.mxu0 %v2816
      %2820 = vmatprep.subr.bf16.mxu0 0
      %2821 = vmatpush1.bf16.msra.mxu0 0
      %2822 = vmatprep.subr.bf16.mxu0 0
      %2823 = vmatpush1.bf16.msra.mxu0 0
      %2824 = vmatprep.subr.bf16.mxu0 0
      %2825 = vmatpush1.bf16.msra.mxu0 0
      %2826 = vmatprep.subr.bf16.mxu0 0
      %2827 = vmatpush1.bf16.msra.mxu0 0
      %2828 = vmatprep.subr.bf16.mxu0 0
      %2829 = vmatpush1.bf16.msra.mxu0 0
      %2830 = vmatprep.subr.bf16.mxu0 0
      %2831 = vmatpush1.bf16.msra.mxu0 0
      %2832 = vmatprep.subr.bf16.mxu0 0
      %2833 = vmatpush1.bf16.msra.mxu0 0
      %2834 = vmatprep.subr.bf16.mxu0 0
      %2835 = vmatpush1.bf16.msra.mxu0 0
      %2836 = vmatprep.subr.bf16.mxu0 0
      %2837 = vmatpush1.bf16.msra.mxu0 0
      %2838 = vmatprep.subr.bf16.mxu0 0
      %2839 = vmatpush1.bf16.msra.mxu0 0
      %2840 = vmatprep.subr.bf16.mxu0 0
      %2841 = vmatpush1.bf16.msra.mxu0 0
      %2842 = vmatprep.subr.bf16.mxu0 0
      %2843 = vmatpush1.bf16.msra.mxu0 0
      %2844 = vmatprep.subr.bf16.mxu0 0
      %2845 = vmatpush1.bf16.msra.mxu0 0
      %2846 = vmatprep.subr.bf16.mxu0 0
      %2847 = vmatpush1.bf16.msra.mxu0 0
      %2848 = vmatprep.subr.bf16.mxu0 0
      %2849 = vmatpush1.bf16.msra.mxu0 0
      %2850 = vmatprep.mubr.bf16.mxu0 0
      %2851 = vmatmul.mubr.bf16.gmra.mrb[0].mxu0 %v2762
      %v2852 = vpop.f32.mrb[0].mxu0
      %v2853 = vadd.f32 0.0, %v2852
      %v2854 = vpop.f32.mrb[0].mxu0
      %v2855 = vpop.f32.mrb[0].mxu0
      %v2856 = vadd.f32 0.0, %v2855
      %v2857 = vpop.f32.mrb[0].mxu0
      %2858 = vmatprep.mubr.bf16.mxu0 0
      %2859 = vmatmul.mubr.bf16.gmra.mrb[0].mxu0 %v2765
      %v2860 = vpop.f32.mrb[0].mxu0
      %v2861 = vadd.f32 0.0, %v2860
      %v2862 = vpop.f32.mrb[0].mxu0
      %v2863 = vpop.f32.mrb[0].mxu0
      %v2864 = vadd.f32 0.0, %v2863
      %v2865 = vpop.f32.mrb[0].mxu0
      %2866 = vmatprep.mubr.bf16.mxu0 0
      %2867 = vmatmul.mubr.bf16.gmra.mrb[0].mxu0 %v2768
      %v2868 = vpop.f32.mrb[0].mxu0
      %v2869 = vadd.f32 0.0, %v2868
      %v2870 = vpop.f32.mrb[0].mxu0
      %v2871 = vpop.f32.mrb[0].mxu0
      %v2872 = vadd.f32 0.0, %v2871
      %v2873 = vpop.f32.mrb[0].mxu0
      %2874 = vmatprep.mubr.bf16.mxu0 0
      %2875 = vmatmul.mubr.bf16.gmra.mrb[0].mxu0 %v2771
      %v2876 = vpop.f32.mrb[0].mxu0
      %v2877 = vadd.f32 0.0, %v2876
      %v2878 = vpop.f32.mrb[0].mxu0
      %v2879 = vpop.f32.mrb[0].mxu0
      %v2880 = vadd.f32 0.0, %v2879
      %v2881 = vpop.f32.mrb[0].mxu0
      %2882 = vmatprep.mubr.bf16.mxu0 0
      %2883 = vmatmul.mubr.bf16.gmra.mrb[0].mxu0 %v2774
      %v2884 = vpop.f32.mrb[0].mxu0
      %v2885 = vadd.f32 0.0, %v2884
      %v2886 = vpop.f32.mrb[0].mxu0
      %v2887 = vpop.f32.mrb[0].mxu0
      %v2888 = vadd.f32 0.0, %v2887
      %v2889 = vpop.f32.mrb[0].mxu0
      %2890 = vmatprep.mubr.bf16.mxu0 0
      %2891 = vmatmul.mubr.bf16.gmra.mrb[0].mxu0 %v2777
      %v2892 = vpop.f32.mrb[0].mxu0
      %v2893 = vadd.f32 0.0, %v2892
      %v2894 = vpop.f32.mrb[0].mxu0
      %v2895 = vpop.f32.mrb[0].mxu0
      %v2896 = vadd.f32 0.0, %v2895
      %v2897 = vpop.f32.mrb[0].mxu0
      %2898 = vmatprep.mubr.bf16.mxu0 0
      %2899 = vmatmul.mubr.bf16.gmra.mrb[0].mxu0 %v2780
      %v2900 = vpop.f32.mrb[0].mxu0
      %v2901 = vadd.f32 0.0, %v2900
      %v2902 = vpop.f32.mrb[0].mxu0
      %v2903 = vpop.f32.mrb[0].mxu0
      %v2904 = vadd.f32 0.0, %v2903
      %v2905 = vpop.f32.mrb[0].mxu0
      %2906 = vmatprep.mubr.bf16.mxu0 0
      %2907 = vmatmul.mubr.bf16.gmra.mrb[0].mxu0 %v2783
      %v2908 = vpop.f32.mrb[0].mxu0
      %v2909 = vadd.f32 0.0, %v2908
      %v2910 = vpop.f32.mrb[0].mxu0
      %v2911 = vpop.f32.mrb[0].mxu0
      %v2912 = vadd.f32 0.0, %v2911
      %v2913 = vpop.f32.mrb[0].mxu0
      %2914 = vmatprep.mubr.bf16.mxu0 0
      %2915 = vmatmul.mubr.bf16.gmra.mrb[0].mxu0 %v2786
      %v2916 = vpop.f32.mrb[0].mxu0
      %v2917 = vadd.f32 0.0, %v2916
      %v2918 = vpop.f32.mrb[0].mxu0
      %v2919 = vpop.f32.mrb[0].mxu0
      %v2920 = vadd.f32 0.0, %v2919
      %v2921 = vpop.f32.mrb[0].mxu0
      %2922 = vmatprep.mubr.bf16.mxu0 0
      %2923 = vmatmul.mubr.bf16.gmra.mrb[0].mxu0 %v2789
      %v2924 = vpop.f32.mrb[0].mxu0
      %v2925 = vadd.f32 0.0, %v2924
      %v2926 = vpop.f32.mrb[0].mxu0
      %v2927 = vpop.f32.mrb[0].mxu0
      %v2928 = vadd.f32 0.0, %v2927
      %v2929 = vpop.f32.mrb[0].mxu0
      %2930 = vmatprep.mubr.bf16.mxu0 0
      %2931 = vmatmul.mubr.bf16.gmra.mrb[0].mxu0 %v2792
      %v2932 = vpop.f32.mrb[0].mxu0
      %v2933 = vadd.f32 0.0, %v2932
      %v2934 = vpop.f32.mrb[0].mxu0
      %v2935 = vpop.f32.mrb[0].mxu0
      %v2936 = vadd.f32 0.0, %v2935
      %v2937 = vpop.f32.mrb[0].mxu0
      %2938 = vmatprep.mubr.bf16.mxu0 0
      %2939 = vmatmul.mubr.bf16.gmra.mrb[0].mxu0 %v2795
      %v2940 = vpop.f32.mrb[0].mxu0
      %v2941 = vadd.f32 0.0, %v2940
      %v2942 = vpop.f32.mrb[0].mxu0
      %v2943 = vpop.f32.mrb[0].mxu0
      %v2944 = vadd.f32 0.0, %v2943
      %v2945 = vpop.f32.mrb[0].mxu0
      %2946 = vmatprep.mubr.bf16.mxu0 0
      %2947 = vmatmul.mubr.bf16.gmra.mrb[0].mxu0 %v2798
      %v2948 = vpop.f32.mrb[0].mxu0
      %v2949 = vadd.f32 0.0, %v2948
      %v2950 = vpop.f32.mrb[0].mxu0
      %v2951 = vpop.f32.mrb[0].mxu0
      %v2952 = vadd.f32 0.0, %v2951
      %v2953 = vpop.f32.mrb[0].mxu0
      %2954 = vmatprep.mubr.bf16.mxu0 0
      %2955 = vmatmul.mubr.bf16.gmra.mrb[0].mxu0 %v2801
      %v2956 = vpop.f32.mrb[0].mxu0
      %v2957 = vadd.f32 0.0, %v2956
      %v2958 = vpop.f32.mrb[0].mxu0
      %v2959 = vpop.f32.mrb[0].mxu0
      %v2960 = vadd.f32 0.0, %v2959
      %v2961 = vpop.f32.mrb[0].mxu0
      %2962 = vmatprep.mubr.bf16.mxu0 0
      %2963 = vmatmul.mubr.bf16.gmra.mrb[0].mxu0 %v2804
      %v2964 = vpop.f32.mrb[0].mxu0
      %v2965 = vadd.f32 0.0, %v2964
      %v2966 = vpop.f32.mrb[0].mxu0
      %v2967 = vpop.f32.mrb[0].mxu0
      %v2968 = vadd.f32 0.0, %v2967
      %v2969 = vpop.f32.mrb[0].mxu0
      %2970 = vmatprep.mubr.bf16.mxu0 0
      %2971 = vmatmul.mubr.bf16.gmra.mrb[0].mxu0 %v2807
      %v2972 = vpop.f32.mrb[0].mxu0
      %v2973 = vadd.f32 0.0, %v2972
      %v2974 = vpop.f32.mrb[0].mxu0
      %v2975 = vpop.f32.mrb[0].mxu0
      %v2976 = vadd.f32 0.0, %v2975
      %v2977 = vpop.f32.mrb[0].mxu0
      %2978 = vmatprep.mubr.bf16.mxu0 0
      %2979 = vmatmul.mubr.bf16.gmra.mrb[0].mxu0 %v2810
      %v2980 = vpop.f32.mrb[0].mxu0
      %v2981 = vadd.f32 0.0, %v2980
      %v2982 = vpop.f32.mrb[0].mxu0
      %v2983 = vpop.f32.mrb[0].mxu0
      %v2984 = vadd.f32 0.0, %v2983
      %v2985 = vpop.f32.mrb[0].mxu0
      %2986 = vmatprep.mubr.bf16.mxu0 0
      %2987 = vmatmul.mubr.bf16.gmra.mrb[0].mxu0 %v2813
      %v2988 = vpop.f32.mrb[0].mxu0
      %v2989 = vadd.f32 0.0, %v2988
      %v2990 = vpop.f32.mrb[0].mxu0
      %v2991 = vpop.f32.mrb[0].mxu0
      %v2992 = vadd.f32 0.0, %v2991
      %v2993 = vpop.f32.mrb[0].mxu0
      %2994 = vdwg.mxu0
      %v2995 = vadd.f32 %v2422, %v2853
      %v2996 = vadd.f32 %v2423, %v2856
      %v2997 = vadd.f32 %v2424, %v2861
      %v2998 = vadd.f32 %v2425, %v2864
      %v2999 = vadd.f32 %v2426, %v2869
      %v3000 = vadd.f32 %v2427, %v2872
      %v3001 = vadd.f32 %v2428, %v2877
      %v3002 = vadd.f32 %v2429, %v2880
      %v3003 = vadd.f32 %v2430, %v2885
      %v3004 = vadd.f32 %v2431, %v2888
      %v3005 = vadd.f32 %v2432, %v2893
      %v3006 = vadd.f32 %v2433, %v2896
      %v3007 = vadd.f32 %v2434, %v2901
      %v3008 = vadd.f32 %v2435, %v2904
      %v3009 = vadd.f32 %v2436, %v2909
      %v3010 = vadd.f32 %v2437, %v2912
      %v3011 = vadd.f32 %v2438, %v2917
      %v3012 = vadd.f32 %v2439, %v2920
      %v3013 = vadd.f32 %v2440, %v2925
      %v3014 = vadd.f32 %v2441, %v2928
      %v3015 = vadd.f32 %v2442, %v2933
      %v3016 = vadd.f32 %v2443, %v2936
      %v3017 = vadd.f32 %v2444, %v2941
      %v3018 = vadd.f32 %v2445, %v2944
      %v3019 = vadd.f32 %v2446, %v2949
      %v3020 = vadd.f32 %v2447, %v2952
      %v3021 = vadd.f32 %v2448, %v2957
      %v3022 = vadd.f32 %v2449, %v2960
      %v3023 = vadd.f32 %v2450, %v2965
      %v3024 = vadd.f32 %v2451, %v2968
      %v3025 = vadd.f32 %v2452, %v2973
      %v3026 = vadd.f32 %v2453, %v2976
      %v3027 = vadd.f32 %v2454, %v2981
      %v3028 = vadd.f32 %v2455, %v2984
      %v3029 = vadd.f32 %v2456, %v2989
      %v3030 = vadd.f32 %v2457, %v2992
      %3031 = vst.msk [vmem:[#allocation2] sm:$0xff] %vm269, %v2995
      %3032 = vst.msk [vmem:[#allocation2 + $0x8] sm:$0xff] %vm269, %v2996
      %3033 = vst.msk [vmem:[#allocation2 + $0x10] sm:$0xff] %vm269, %v2997
      %3034 = vst.msk [vmem:[#allocation2 + $0x18] sm:$0xff] %vm269, %v2998
      %3035 = vst.msk [vmem:[#allocation2 + $0x20] sm:$0xff] %vm269, %v2999
      %3036 = vst.msk [vmem:[#allocation2 + $0x28] sm:$0xff] %vm269, %v3000
      %3037 = vst.msk [vmem:[#allocation2 + $0x30] sm:$0xff] %vm269, %v3001
      %3038 = vst.msk [vmem:[#allocation2 + $0x38] sm:$0xff] %vm269, %v3002
      %3039 = vst.msk [vmem:[#allocation2 + $0x40] sm:$0xff] %vm269, %v3003
      %3040 = vst.msk [vmem:[#allocation2 + $0x48] sm:$0xff] %vm269, %v3004
      %3041 = vst.msk [vmem:[#allocation2 + $0x50] sm:$0xff] %vm269, %v3005
      %3042 = vst.msk [vmem:[#allocation2 + $0x58] sm:$0xff] %vm269, %v3006
      %3043 = vst.msk [vmem:[#allocation2 + $0x60] sm:$0xff] %vm269, %v3007
      %3044 = vst.msk [vmem:[#allocation2 + $0x68] sm:$0xff] %vm269, %v3008
      %3045 = vst.msk [vmem:[#allocation2 + $0x70] sm:$0xff] %vm269, %v3009
      %3046 = vst.msk [vmem:[#allocation2 + $0x78] sm:$0xff] %vm269, %v3010
      %3047 = vst.msk [vmem:[#allocation2 + $0x80] sm:$0xff] %vm269, %v3011
      %3048 = vst.msk [vmem:[#allocation2 + $0x88] sm:$0xff] %vm269, %v3012
      %3049 = vst.msk [vmem:[#allocation2 + $0x90] sm:$0xff] %vm269, %v3013
      %3050 = vst.msk [vmem:[#allocation2 + $0x98] sm:$0xff] %vm269, %v3014
      %3051 = vst.msk [vmem:[#allocation2 + $0xa0] sm:$0xff] %vm269, %v3015
      %3052 = vst.msk [vmem:[#allocation2 + $0xa8] sm:$0xff] %vm269, %v3016
      %3053 = vst.msk [vmem:[#allocation2 + $0xb0] sm:$0xff] %vm269, %v3017
      %3054 = vst.msk [vmem:[#allocation2 + $0xb8] sm:$0xff] %vm269, %v3018
      %3055 = vst.msk [vmem:[#allocation2 + $0xc0] sm:$0xff] %vm269, %v3019
      %3056 = vst.msk [vmem:[#allocation2 + $0xc8] sm:$0xff] %vm269, %v3020
      %3057 = vst.msk [vmem:[#allocation2 + $0xd0] sm:$0xff] %vm269, %v3021
      %3058 = vst.msk [vmem:[#allocation2 + $0xd8] sm:$0xff] %vm269, %v3022
      %3059 = vst.msk [vmem:[#allocation2 + $0xe0] sm:$0xff] %vm269, %v3023
      %3060 = vst.msk [vmem:[#allocation2 + $0xe8] sm:$0xff] %vm269, %v3024
      %3061 = vst.msk [vmem:[#allocation2 + $0xf0] sm:$0xff] %vm269, %v3025
      %3062 = vst.msk [vmem:[#allocation2 + $0xf8] sm:$0xff] %vm269, %v3026
      %3063 = vst.msk [vmem:[#allocation2 + $0x100] sm:$0xff] %vm269, %v3027
      %3064 = vst.msk [vmem:[#allocation2 + $0x108] sm:$0xff] %vm269, %v3028
      %3065 = vst.msk [vmem:[#allocation2 + $0x110] sm:$0xff] %vm269, %v3029
      %3066 = vst.msk [vmem:[#allocation2 + $0x118] sm:$0xff] %vm269, %v3030
      %v3067 = vld [vmem:[#allocation2] sm:$0xff]
      %v3068 = vld [vmem:[#allocation2 + $0x8] sm:$0xff]
      %v3069 = vld [vmem:[#allocation2 + $0x10] sm:$0xff]
      %v3070 = vld [vmem:[#allocation2 + $0x18] sm:$0xff]
      %v3071 = vld [vmem:[#allocation2 + $0x20] sm:$0xff]
      %v3072 = vld [vmem:[#allocation2 + $0x28] sm:$0xff]
      %v3073 = vld [vmem:[#allocation2 + $0x30] sm:$0xff]
      %v3074 = vld [vmem:[#allocation2 + $0x38] sm:$0xff]
      %v3075 = vld [vmem:[#allocation2 + $0x40] sm:$0xff]
      %v3076 = vld [vmem:[#allocation2 + $0x48] sm:$0xff]
      %v3077 = vld [vmem:[#allocation2 + $0x50] sm:$0xff]
      %v3078 = vld [vmem:[#allocation2 + $0x58] sm:$0xff]
      %v3079 = vld [vmem:[#allocation2 + $0x60] sm:$0xff]
      %v3080 = vld [vmem:[#allocation2 + $0x68] sm:$0xff]
      %v3081 = vld [vmem:[#allocation2 + $0x70] sm:$0xff]
      %v3082 = vld [vmem:[#allocation2 + $0x78] sm:$0xff]
      %v3083 = vld [vmem:[#allocation2 + $0x80] sm:$0xff]
      %v3084 = vld [vmem:[#allocation2 + $0x88] sm:$0xff]
      %v3085 = vld [vmem:[#allocation2 + $0x90] sm:$0xff]
      %v3086 = vld [vmem:[#allocation2 + $0x98] sm:$0xff]
      %v3087 = vld [vmem:[#allocation2 + $0xa0] sm:$0xff]
      %v3088 = vld [vmem:[#allocation2 + $0xa8] sm:$0xff]
      %v3089 = vld [vmem:[#allocation2 + $0xb0] sm:$0xff]
      %v3090 = vld [vmem:[#allocation2 + $0xb8] sm:$0xff]
      %v3091 = vld [vmem:[#allocation2 + $0xc0] sm:$0xff]
      %v3092 = vld [vmem:[#allocation2 + $0xc8] sm:$0xff]
      %v3093 = vld [vmem:[#allocation2 + $0xd0] sm:$0xff]
      %v3094 = vld [vmem:[#allocation2 + $0xd8] sm:$0xff]
      %v3095 = vld [vmem:[#allocation2 + $0xe0] sm:$0xff]
      %v3096 = vld [vmem:[#allocation2 + $0xe8] sm:$0xff]
      %v3097 = vld [vmem:[#allocation2 + $0xf0] sm:$0xff]
      %v3098 = vld [vmem:[#allocation2 + $0xf8] sm:$0xff]
      %v3099 = vld [vmem:[#allocation2 + $0x100] sm:$0xff]
      %v3100 = vld [vmem:[#allocation2 + $0x108] sm:$0xff]
      %v3101 = vld [vmem:[#allocation2 + $0x110] sm:$0xff]
      %v3102 = vld [vmem:[#allocation2 + $0x118] sm:$0xff]
      %v3103 = vld [vmem:[%s251 + $0x8] sm:$0xc]
      %v3104 = vld [vmem:[%s251 + $0xc] sm:$0xf]
      %v3105 = vld [vmem:[%s251 + $0x10] sm:$0xf]
      %v3106 = vld [vmem:[%s251 + $0x14] sm:$0xf]
      %v3107 = vld [vmem:[%s251 + $0x18] sm:$0xf]
      %v3108 = vld [vmem:[%s251 + $0x1c] sm:$0xf]
      %v3109 = vld [vmem:[%s251 + $0x20] sm:$0xf]
      %v3110 = vld [vmem:[%s251 + $0x24] sm:$0xf]
      %v3111 = vld [vmem:[%s251 + $0x28] sm:$0xf]
      %v3112 = vld [vmem:[%s251 + $0x2c] sm:$0xf]
      %v3113 = vld [vmem:[%s251 + $0x30] sm:$0xf]
      %v3114 = vld [vmem:[%s251 + $0x34] sm:$0xf]
      %v3115 = vld [vmem:[%s251 + $0x38] sm:$0xf]
      %v3116 = vld [vmem:[%s251 + $0x3c] sm:$0xf]
      %v3117 = vld [vmem:[%s251 + $0x40] sm:$0xf]
      %v3118 = vld [vmem:[%s251 + $0x44] sm:$0xf]
      %v3119 = vld [vmem:[%s251 + $0x48] sm:$0xf]
      %v3120 = vld [vmem:[%s251 + $0x4c] sm:$0xf]
      %v3121 = vld [vmem:[%s251 + $0x50] sm:$0xf]
      %v3122 = vld [vmem:[%s251 + $0x54] sm:$0xf]
      %v3123 = vld [vmem:[%s251 + $0x58] sm:$0xf]
      %v3124 = vld [vmem:[%s251 + $0x5c] sm:$0xf]
      %v3125 = vld [vmem:[%s251 + $0x60] sm:$0xf]
      %v3126 = vld [vmem:[%s251 + $0x64] sm:$0xf]
      %v3127 = vld [vmem:[%s251 + $0x68] sm:$0xf]
      %v3128 = vld [vmem:[%s251 + $0x6c] sm:$0xf]
      %v3129 = vld [vmem:[%s251 + $0x70] sm:$0xf]
      %v3130 = vld [vmem:[%s251 + $0x74] sm:$0xf]
      %v3131 = vld [vmem:[%s251 + $0x78] sm:$0xf]
      %v3132 = vld [vmem:[%s251 + $0x7c] sm:$0xf]
      %v3133 = vld [vmem:[%s251 + $0x80] sm:$0xf]
      %v3134 = vld [vmem:[%s251 + $0x84] sm:$0xf]
      %v3135 = vld [vmem:[%s251 + $0x88] sm:$0xf]
      %v3136 = vld [vmem:[%s251 + $0x8c] sm:$0xf]
      %v3137 = vld [vmem:[%s251 + $0x90] sm:$0xf]
      %v3138 = vld [vmem:[%s251 + $0x94] sm:$0xf]
      %v3139 = vld [vmem:[%s251 + $0x98] sm:$0x3]
      %s3140 = scalar_lea.vmem %s1, 10
      %v3141 = vld [vmem:[%s3140] sm:$0x3]
      %v3179 = vunpack.c.l.b16 %v3103
      %v3180 = vunpack.c.l.b16 %v3104
      %v3181 = vunpack.c.l.b16 %v3105
      %v3182 = vunpack.c.l.b16 %v3106
      %v3183 = vunpack.c.l.b16 %v3107
      %v3184 = vunpack.c.l.b16 %v3108
      %v3185 = vunpack.c.l.b16 %v3109
      %v3186 = vunpack.c.l.b16 %v3110
      %v3187 = vunpack.c.l.b16 %v3111
      %v3188 = vunpack.c.l.b16 %v3112
      %v3189 = vunpack.c.l.b16 %v3113
      %v3190 = vunpack.c.l.b16 %v3114
      %v3191 = vunpack.c.l.b16 %v3115
      %v3192 = vunpack.c.l.b16 %v3116
      %v3193 = vunpack.c.l.b16 %v3117
      %v3194 = vunpack.c.l.b16 %v3118
      %v3195 = vunpack.c.l.b16 %v3119
      %v3196 = vunpack.c.l.b16 %v3120
      %v3197 = vunpack.c.l.b16 %v3121
      %v3198 = vunpack.c.l.b16 %v3122
      %v3199 = vunpack.c.l.b16 %v3123
      %v3200 = vunpack.c.l.b16 %v3124
      %v3201 = vunpack.c.l.b16 %v3125
      %v3202 = vunpack.c.l.b16 %v3126
      %v3203 = vunpack.c.l.b16 %v3127
      %v3204 = vunpack.c.l.b16 %v3128
      %v3205 = vunpack.c.l.b16 %v3129
      %v3206 = vunpack.c.l.b16 %v3130
      %v3207 = vunpack.c.l.b16 %v3131
      %v3208 = vunpack.c.l.b16 %v3132
      %v3209 = vunpack.c.l.b16 %v3133
      %v3210 = vunpack.c.l.b16 %v3134
      %v3211 = vunpack.c.l.b16 %v3135
      %v3212 = vunpack.c.l.b16 %v3136
      %v3213 = vunpack.c.l.b16 %v3137
      %v3214 = vunpack.c.l.b16 %v3138
      %v3215 = vunpack.c.l.b16 %v3139
      %v3216 = vpack.c.b16 %v3180, %v3179
      %v3217 = vpack.c.b16 %v3182, %v3181
      %v3218 = vpack.c.b16 %v3184, %v3183
      %v3219 = vpack.c.b16 %v3186, %v3185
      %v3220 = vpack.c.b16 %v3188, %v3187
      %v3221 = vpack.c.b16 %v3190, %v3189
      %v3222 = vpack.c.b16 %v3192, %v3191
      %v3223 = vpack.c.b16 %v3194, %v3193
      %v3224 = vpack.c.b16 %v3196, %v3195
      %v3225 = vpack.c.b16 %v3198, %v3197
      %v3226 = vpack.c.b16 %v3200, %v3199
      %v3227 = vpack.c.b16 %v3202, %v3201
      %v3228 = vpack.c.b16 %v3204, %v3203
      %v3229 = vpack.c.b16 %v3206, %v3205
      %v3230 = vpack.c.b16 %v3208, %v3207
      %v3231 = vpack.c.b16 %v3210, %v3209
      %v3232 = vpack.c.b16 %v3212, %v3211
      %v3233 = vpack.c.b16 %v3214, %v3213
      %v3234 = vpack.c.b16 %v3215, %v3215
      %vm3235 = vcmask 1045504
      %v3236 = vrot.slane %v3216, 2
      %v3237 = vrot.slane %v3217, 2
      %v3238 = vsel %vm3235, %v3236, %v3237
      %v3239 = vrot.slane %v3218, 2
      %v3240 = vsel %vm3235, %v3237, %v3239
      %v3241 = vrot.slane %v3219, 2
      %v3242 = vsel %vm3235, %v3239, %v3241
      %v3243 = vrot.slane %v3220, 2
      %v3244 = vsel %vm3235, %v3241, %v3243
      %v3245 = vrot.slane %v3221, 2
      %v3246 = vsel %vm3235, %v3243, %v3245
      %v3247 = vrot.slane %v3222, 2
      %v3248 = vsel %vm3235, %v3245, %v3247
      %v3249 = vrot.slane %v3223, 2
      %v3250 = vsel %vm3235, %v3247, %v3249
      %v3251 = vrot.slane %v3224, 2
      %v3252 = vsel %vm3235, %v3249, %v3251
      %v3253 = vrot.slane %v3225, 2
      %v3254 = vsel %vm3235, %v3251, %v3253
      %v3255 = vrot.slane %v3226, 2
      %v3256 = vsel %vm3235, %v3253, %v3255
      %v3257 = vrot.slane %v3227, 2
      %v3258 = vsel %vm3235, %v3255, %v3257
      %v3259 = vrot.slane %v3228, 2
      %v3260 = vsel %vm3235, %v3257, %v3259
      %v3261 = vrot.slane %v3229, 2
      %v3262 = vsel %vm3235, %v3259, %v3261
      %v3263 = vrot.slane %v3230, 2
      %v3264 = vsel %vm3235, %v3261, %v3263
      %v3265 = vrot.slane %v3231, 2
      %v3266 = vsel %vm3235, %v3263, %v3265
      %v3267 = vrot.slane %v3232, 2
      %v3268 = vsel %vm3235, %v3265, %v3267
      %v3269 = vrot.slane %v3233, 2
      %v3270 = vsel %vm3235, %v3267, %v3269
      %v3271 = vrot.slane %v3234, 2
      %v3272 = vsel %vm3235, %v3269, %v3271
      %v3274 = vsel %vm269, %v3238, 0
      %v3277 = vsel %vm269, %v3240, 0
      %v3280 = vsel %vm269, %v3242, 0
      %v3283 = vsel %vm269, %v3244, 0
      %v3286 = vsel %vm269, %v3246, 0
      %v3289 = vsel %vm269, %v3248, 0
      %v3292 = vsel %vm269, %v3250, 0
      %v3295 = vsel %vm269, %v3252, 0
      %v3298 = vsel %vm269, %v3254, 0
      %v3301 = vsel %vm269, %v3256, 0
      %v3304 = vsel %vm269, %v3258, 0
      %v3307 = vsel %vm269, %v3260, 0
      %v3310 = vsel %vm269, %v3262, 0
      %v3313 = vsel %vm269, %v3264, 0
      %v3316 = vsel %vm269, %v3266, 0
      %v3319 = vsel %vm269, %v3268, 0
      %v3322 = vsel %vm269, %v3270, 0
      %v3325 = vsel %vm269, %v3272, 0
      %v3328 = vsel %vm523, %v3141, 0
      %3330 = vmatprep.subr.bf16.mxu0 0
      %3331 = vmatpush1.bf16.msra.mxu0 %v3328
      %3332 = vmatprep.subr.bf16.mxu0 0
      %3333 = vmatpush1.bf16.msra.mxu0 0
      %3334 = vmatprep.subr.bf16.mxu0 0
      %3335 = vmatpush1.bf16.msra.mxu0 0
      %3336 = vmatprep.subr.bf16.mxu0 0
      %3337 = vmatpush1.bf16.msra.mxu0 0
      %3338 = vmatprep.subr.bf16.mxu0 0
      %3339 = vmatpush1.bf16.msra.mxu0 0
      %3340 = vmatprep.subr.bf16.mxu0 0
      %3341 = vmatpush1.bf16.msra.mxu0 0
      %3342 = vmatprep.subr.bf16.mxu0 0
      %3343 = vmatpush1.bf16.msra.mxu0 0
      %3344 = vmatprep.subr.bf16.mxu0 0
      %3345 = vmatpush1.bf16.msra.mxu0 0
      %3346 = vmatprep.subr.bf16.mxu0 0
      %3347 = vmatpush1.bf16.msra.mxu0 0
      %3348 = vmatprep.subr.bf16.mxu0 0
      %3349 = vmatpush1.bf16.msra.mxu0 0
      %3350 = vmatprep.subr.bf16.mxu0 0
      %3351 = vmatpush1.bf16.msra.mxu0 0
      %3352 = vmatprep.subr.bf16.mxu0 0
      %3353 = vmatpush1.bf16.msra.mxu0 0
      %3354 = vmatprep.subr.bf16.mxu0 0
      %3355 = vmatpush1.bf16.msra.mxu0 0
      %3356 = vmatprep.subr.bf16.mxu0 0
      %3357 = vmatpush1.bf16.msra.mxu0 0
      %3358 = vmatprep.subr.bf16.mxu0 0
      %3359 = vmatpush1.bf16.msra.mxu0 0
      %3360 = vmatprep.subr.bf16.mxu0 0
      %3361 = vmatpush1.bf16.msra.mxu0 0
      %3362 = vmatprep.mubr.bf16.mxu0 0
      %3363 = vmatmul.mubr.bf16.gmra.mrb[0].mxu0 %v3274
      %v3364 = vpop.f32.mrb[0].mxu0
      %v3365 = vadd.f32 0.0, %v3364
      %v3366 = vpop.f32.mrb[0].mxu0
      %v3367 = vpop.f32.mrb[0].mxu0
      %v3368 = vadd.f32 0.0, %v3367
      %v3369 = vpop.f32.mrb[0].mxu0
      %3370 = vmatprep.mubr.bf16.mxu0 0
      %3371 = vmatmul.mubr.bf16.gmra.mrb[0].mxu0 %v3277
      %v3372 = vpop.f32.mrb[0].mxu0
      %v3373 = vadd.f32 0.0, %v3372
      %v3374 = vpop.f32.mrb[0].mxu0
      %v3375 = vpop.f32.mrb[0].mxu0
      %v3376 = vadd.f32 0.0, %v3375
      %v3377 = vpop.f32.mrb[0].mxu0
      %3378 = vmatprep.mubr.bf16.mxu0 0
      %3379 = vmatmul.mubr.bf16.gmra.mrb[0].mxu0 %v3280
      %v3380 = vpop.f32.mrb[0].mxu0
      %v3381 = vadd.f32 0.0, %v3380
      %v3382 = vpop.f32.mrb[0].mxu0
      %v3383 = vpop.f32.mrb[0].mxu0
      %v3384 = vadd.f32 0.0, %v3383
      %v3385 = vpop.f32.mrb[0].mxu0
      %3386 = vmatprep.mubr.bf16.mxu0 0
      %3387 = vmatmul.mubr.bf16.gmra.mrb[0].mxu0 %v3283
      %v3388 = vpop.f32.mrb[0].mxu0
      %v3389 = vadd.f32 0.0, %v3388
      %v3390 = vpop.f32.mrb[0].mxu0
      %v3391 = vpop.f32.mrb[0].mxu0
      %v3392 = vadd.f32 0.0, %v3391
      %v3393 = vpop.f32.mrb[0].mxu0
      %3394 = vmatprep.mubr.bf16.mxu0 0
      %3395 = vmatmul.mubr.bf16.gmra.mrb[0].mxu0 %v3286
      %v3396 = vpop.f32.mrb[0].mxu0
      %v3397 = vadd.f32 0.0, %v3396
      %v3398 = vpop.f32.mrb[0].mxu0
      %v3399 = vpop.f32.mrb[0].mxu0
      %v3400 = vadd.f32 0.0, %v3399
      %v3401 = vpop.f32.mrb[0].mxu0
      %3402 = vmatprep.mubr.bf16.mxu0 0
      %3403 = vmatmul.mubr.bf16.gmra.mrb[0].mxu0 %v3289
      %v3404 = vpop.f32.mrb[0].mxu0
      %v3405 = vadd.f32 0.0, %v3404
      %v3406 = vpop.f32.mrb[0].mxu0
      %v3407 = vpop.f32.mrb[0].mxu0
      %v3408 = vadd.f32 0.0, %v3407
      %v3409 = vpop.f32.mrb[0].mxu0
      %3410 = vmatprep.mubr.bf16.mxu0 0
      %3411 = vmatmul.mubr.bf16.gmra.mrb[0].mxu0 %v3292
      %v3412 = vpop.f32.mrb[0].mxu0
      %v3413 = vadd.f32 0.0, %v3412
      %v3414 = vpop.f32.mrb[0].mxu0
      %v3415 = vpop.f32.mrb[0].mxu0
      %v3416 = vadd.f32 0.0, %v3415
      %v3417 = vpop.f32.mrb[0].mxu0
      %3418 = vmatprep.mubr.bf16.mxu0 0
      %3419 = vmatmul.mubr.bf16.gmra.mrb[0].mxu0 %v3295
      %v3420 = vpop.f32.mrb[0].mxu0
      %v3421 = vadd.f32 0.0, %v3420
      %v3422 = vpop.f32.mrb[0].mxu0
      %v3423 = vpop.f32.mrb[0].mxu0
      %v3424 = vadd.f32 0.0, %v3423
      %v3425 = vpop.f32.mrb[0].mxu0
      %3426 = vmatprep.mubr.bf16.mxu0 0
      %3427 = vmatmul.mubr.bf16.gmra.mrb[0].mxu0 %v3298
      %v3428 = vpop.f32.mrb[0].mxu0
      %v3429 = vadd.f32 0.0, %v3428
      %v3430 = vpop.f32.mrb[0].mxu0
      %v3431 = vpop.f32.mrb[0].mxu0
      %v3432 = vadd.f32 0.0, %v3431
      %v3433 = vpop.f32.mrb[0].mxu0
      %3434 = vmatprep.mubr.bf16.mxu0 0
      %3435 = vmatmul.mubr.bf16.gmra.mrb[0].mxu0 %v3301
      %v3436 = vpop.f32.mrb[0].mxu0
      %v3437 = vadd.f32 0.0, %v3436
      %v3438 = vpop.f32.mrb[0].mxu0
      %v3439 = vpop.f32.mrb[0].mxu0
      %v3440 = vadd.f32 0.0, %v3439
      %v3441 = vpop.f32.mrb[0].mxu0
      %3442 = vmatprep.mubr.bf16.mxu0 0
      %3443 = vmatmul.mubr.bf16.gmra.mrb[0].mxu0 %v3304
      %v3444 = vpop.f32.mrb[0].mxu0
      %v3445 = vadd.f32 0.0, %v3444
      %v3446 = vpop.f32.mrb[0].mxu0
      %v3447 = vpop.f32.mrb[0].mxu0
      %v3448 = vadd.f32 0.0, %v3447
      %v3449 = vpop.f32.mrb[0].mxu0
      %3450 = vmatprep.mubr.bf16.mxu0 0
      %3451 = vmatmul.mubr.bf16.gmra.mrb[0].mxu0 %v3307
      %v3452 = vpop.f32.mrb[0].mxu0
      %v3453 = vadd.f32 0.0, %v3452
      %v3454 = vpop.f32.mrb[0].mxu0
      %v3455 = vpop.f32.mrb[0].mxu0
      %v3456 = vadd.f32 0.0, %v3455
      %v3457 = vpop.f32.mrb[0].mxu0
      %3458 = vmatprep.mubr.bf16.mxu0 0
      %3459 = vmatmul.mubr.bf16.gmra.mrb[0].mxu0 %v3310
      %v3460 = vpop.f32.mrb[0].mxu0
      %v3461 = vadd.f32 0.0, %v3460
      %v3462 = vpop.f32.mrb[0].mxu0
      %v3463 = vpop.f32.mrb[0].mxu0
      %v3464 = vadd.f32 0.0, %v3463
      %v3465 = vpop.f32.mrb[0].mxu0
      %3466 = vmatprep.mubr.bf16.mxu0 0
      %3467 = vmatmul.mubr.bf16.gmra.mrb[0].mxu0 %v3313
      %v3468 = vpop.f32.mrb[0].mxu0
      %v3469 = vadd.f32 0.0, %v3468
      %v3470 = vpop.f32.mrb[0].mxu0
      %v3471 = vpop.f32.mrb[0].mxu0
      %v3472 = vadd.f32 0.0, %v3471
      %v3473 = vpop.f32.mrb[0].mxu0
      %3474 = vmatprep.mubr.bf16.mxu0 0
      %3475 = vmatmul.mubr.bf16.gmra.mrb[0].mxu0 %v3316
      %v3476 = vpop.f32.mrb[0].mxu0
      %v3477 = vadd.f32 0.0, %v3476
      %v3478 = vpop.f32.mrb[0].mxu0
      %v3479 = vpop.f32.mrb[0].mxu0
      %v3480 = vadd.f32 0.0, %v3479
      %v3481 = vpop.f32.mrb[0].mxu0
      %3482 = vmatprep.mubr.bf16.mxu0 0
      %3483 = vmatmul.mubr.bf16.gmra.mrb[0].mxu0 %v3319
      %v3484 = vpop.f32.mrb[0].mxu0
      %v3485 = vadd.f32 0.0, %v3484
      %v3486 = vpop.f32.mrb[0].mxu0
      %v3487 = vpop.f32.mrb[0].mxu0
      %v3488 = vadd.f32 0.0, %v3487
      %v3489 = vpop.f32.mrb[0].mxu0
      %3490 = vmatprep.mubr.bf16.mxu0 0
      %3491 = vmatmul.mubr.bf16.gmra.mrb[0].mxu0 %v3322
      %v3492 = vpop.f32.mrb[0].mxu0
      %v3493 = vadd.f32 0.0, %v3492
      %v3494 = vpop.f32.mrb[0].mxu0
      %v3495 = vpop.f32.mrb[0].mxu0
      %v3496 = vadd.f32 0.0, %v3495
      %v3497 = vpop.f32.mrb[0].mxu0
      %3498 = vmatprep.mubr.bf16.mxu0 0
      %3499 = vmatmul.mubr.bf16.gmra.mrb[0].mxu0 %v3325
      %v3500 = vpop.f32.mrb[0].mxu0
      %v3501 = vadd.f32 0.0, %v3500
      %v3502 = vpop.f32.mrb[0].mxu0
      %v3503 = vpop.f32.mrb[0].mxu0
      %v3504 = vadd.f32 0.0, %v3503
      %v3505 = vpop.f32.mrb[0].mxu0
      %3506 = vdwg.mxu0
      %v3507 = vadd.f32 %v3067, %v3365
      %v3508 = vadd.f32 %v3068, %v3368
      %v3509 = vadd.f32 %v3069, %v3373
      %v3510 = vadd.f32 %v3070, %v3376
      %v3511 = vadd.f32 %v3071, %v3381
      %v3512 = vadd.f32 %v3072, %v3384
      %v3513 = vadd.f32 %v3073, %v3389
      %v3514 = vadd.f32 %v3074, %v3392
      %v3515 = vadd.f32 %v3075, %v3397
      %v3516 = vadd.f32 %v3076, %v3400
      %v3517 = vadd.f32 %v3077, %v3405
      %v3518 = vadd.f32 %v3078, %v3408
      %v3519 = vadd.f32 %v3079, %v3413
      %v3520 = vadd.f32 %v3080, %v3416
      %v3521 = vadd.f32 %v3081, %v3421
      %v3522 = vadd.f32 %v3082, %v3424
      %v3523 = vadd.f32 %v3083, %v3429
      %v3524 = vadd.f32 %v3084, %v3432
      %v3525 = vadd.f32 %v3085, %v3437
      %v3526 = vadd.f32 %v3086, %v3440
      %v3527 = vadd.f32 %v3087, %v3445
      %v3528 = vadd.f32 %v3088, %v3448
      %v3529 = vadd.f32 %v3089, %v3453
      %v3530 = vadd.f32 %v3090, %v3456
      %v3531 = vadd.f32 %v3091, %v3461
      %v3532 = vadd.f32 %v3092, %v3464
      %v3533 = vadd.f32 %v3093, %v3469
      %v3534 = vadd.f32 %v3094, %v3472
      %v3535 = vadd.f32 %v3095, %v3477
      %v3536 = vadd.f32 %v3096, %v3480
      %v3537 = vadd.f32 %v3097, %v3485
      %v3538 = vadd.f32 %v3098, %v3488
      %v3539 = vadd.f32 %v3099, %v3493
      %v3540 = vadd.f32 %v3100, %v3496
      %v3541 = vadd.f32 %v3101, %v3501
      %v3542 = vadd.f32 %v3102, %v3504
      %3543 = vst.msk [vmem:[#allocation2] sm:$0xff] %vm269, %v3507
      %3544 = vst.msk [vmem:[#allocation2 + $0x8] sm:$0xff] %vm269, %v3508
      %3545 = vst.msk [vmem:[#allocation2 + $0x10] sm:$0xff] %vm269, %v3509
      %3546 = vst.msk [vmem:[#allocation2 + $0x18] sm:$0xff] %vm269, %v3510
      %3547 = vst.msk [vmem:[#allocation2 + $0x20] sm:$0xff] %vm269, %v3511
      %3548 = vst.msk [vmem:[#allocation2 + $0x28] sm:$0xff] %vm269, %v3512
      %3549 = vst.msk [vmem:[#allocation2 + $0x30] sm:$0xff] %vm269, %v3513
      %3550 = vst.msk [vmem:[#allocation2 + $0x38] sm:$0xff] %vm269, %v3514
      %3551 = vst.msk [vmem:[#allocation2 + $0x40] sm:$0xff] %vm269, %v3515
      %3552 = vst.msk [vmem:[#allocation2 + $0x48] sm:$0xff] %vm269, %v3516
      %3553 = vst.msk [vmem:[#allocation2 + $0x50] sm:$0xff] %vm269, %v3517
      %3554 = vst.msk [vmem:[#allocation2 + $0x58] sm:$0xff] %vm269, %v3518
      %3555 = vst.msk [vmem:[#allocation2 + $0x60] sm:$0xff] %vm269, %v3519
      %3556 = vst.msk [vmem:[#allocation2 + $0x68] sm:$0xff] %vm269, %v3520
      %3557 = vst.msk [vmem:[#allocation2 + $0x70] sm:$0xff] %vm269, %v3521
      %3558 = vst.msk [vmem:[#allocation2 + $0x78] sm:$0xff] %vm269, %v3522
      %3559 = vst.msk [vmem:[#allocation2 + $0x80] sm:$0xff] %vm269, %v3523
      %3560 = vst.msk [vmem:[#allocation2 + $0x88] sm:$0xff] %vm269, %v3524
      %3561 = vst.msk [vmem:[#allocation2 + $0x90] sm:$0xff] %vm269, %v3525
      %3562 = vst.msk [vmem:[#allocation2 + $0x98] sm:$0xff] %vm269, %v3526
      %3563 = vst.msk [vmem:[#allocation2 + $0xa0] sm:$0xff] %vm269, %v3527
      %3564 = vst.msk [vmem:[#allocation2 + $0xa8] sm:$0xff] %vm269, %v3528
      %3565 = vst.msk [vmem:[#allocation2 + $0xb0] sm:$0xff] %vm269, %v3529
      %3566 = vst.msk [vmem:[#allocation2 + $0xb8] sm:$0xff] %vm269, %v3530
      %3567 = vst.msk [vmem:[#allocation2 + $0xc0] sm:$0xff] %vm269, %v3531
      %3568 = vst.msk [vmem:[#allocation2 + $0xc8] sm:$0xff] %vm269, %v3532
      %3569 = vst.msk [vmem:[#allocation2 + $0xd0] sm:$0xff] %vm269, %v3533
      %3570 = vst.msk [vmem:[#allocation2 + $0xd8] sm:$0xff] %vm269, %v3534
      %3571 = vst.msk [vmem:[#allocation2 + $0xe0] sm:$0xff] %vm269, %v3535
      %3572 = vst.msk [vmem:[#allocation2 + $0xe8] sm:$0xff] %vm269, %v3536
      %3573 = vst.msk [vmem:[#allocation2 + $0xf0] sm:$0xff] %vm269, %v3537
      %3574 = vst.msk [vmem:[#allocation2 + $0xf8] sm:$0xff] %vm269, %v3538
      %3575 = vst.msk [vmem:[#allocation2 + $0x100] sm:$0xff] %vm269, %v3539
      %3576 = vst.msk [vmem:[#allocation2 + $0x108] sm:$0xff] %vm269, %v3540
      %3577 = vst.msk [vmem:[#allocation2 + $0x110] sm:$0xff] %vm269, %v3541
      %3578 = vst.msk [vmem:[#allocation2 + $0x118] sm:$0xff] %vm269, %v3542
      %v3579 = vld [vmem:[#allocation2] sm:$0xff]
      %v3580 = vld [vmem:[#allocation2 + $0x8] sm:$0xff]
      %v3581 = vld [vmem:[#allocation2 + $0x10] sm:$0xff]
      %v3582 = vld [vmem:[#allocation2 + $0x18] sm:$0xff]
      %v3583 = vld [vmem:[#allocation2 + $0x20] sm:$0xff]
      %v3584 = vld [vmem:[#allocation2 + $0x28] sm:$0xff]
      %v3585 = vld [vmem:[#allocation2 + $0x30] sm:$0xff]
      %v3586 = vld [vmem:[#allocation2 + $0x38] sm:$0xff]
      %v3587 = vld [vmem:[#allocation2 + $0x40] sm:$0xff]
      %v3588 = vld [vmem:[#allocation2 + $0x48] sm:$0xff]
      %v3589 = vld [vmem:[#allocation2 + $0x50] sm:$0xff]
      %v3590 = vld [vmem:[#allocation2 + $0x58] sm:$0xff]
      %v3591 = vld [vmem:[#allocation2 + $0x60] sm:$0xff]
      %v3592 = vld [vmem:[#allocation2 + $0x68] sm:$0xff]
      %v3593 = vld [vmem:[#allocation2 + $0x70] sm:$0xff]
      %v3594 = vld [vmem:[#allocation2 + $0x78] sm:$0xff]
      %v3595 = vld [vmem:[#allocation2 + $0x80] sm:$0xff]
      %v3596 = vld [vmem:[#allocation2 + $0x88] sm:$0xff]
      %v3597 = vld [vmem:[#allocation2 + $0x90] sm:$0xff]
      %v3598 = vld [vmem:[#allocation2 + $0x98] sm:$0xff]
      %v3599 = vld [vmem:[#allocation2 + $0xa0] sm:$0xff]
      %v3600 = vld [vmem:[#allocation2 + $0xa8] sm:$0xff]
      %v3601 = vld [vmem:[#allocation2 + $0xb0] sm:$0xff]
      %v3602 = vld [vmem:[#allocation2 + $0xb8] sm:$0xff]
      %v3603 = vld [vmem:[#allocation2 + $0xc0] sm:$0xff]
      %v3604 = vld [vmem:[#allocation2 + $0xc8] sm:$0xff]
      %v3605 = vld [vmem:[#allocation2 + $0xd0] sm:$0xff]
      %v3606 = vld [vmem:[#allocation2 + $0xd8] sm:$0xff]
      %v3607 = vld [vmem:[#allocation2 + $0xe0] sm:$0xff]
      %v3608 = vld [vmem:[#allocation2 + $0xe8] sm:$0xff]
      %v3609 = vld [vmem:[#allocation2 + $0xf0] sm:$0xff]
      %v3610 = vld [vmem:[#allocation2 + $0xf8] sm:$0xff]
      %v3611 = vld [vmem:[#allocation2 + $0x100] sm:$0xff]
      %v3612 = vld [vmem:[#allocation2 + $0x108] sm:$0xff]
      %v3613 = vld [vmem:[#allocation2 + $0x110] sm:$0xff]
      %v3614 = vld [vmem:[#allocation2 + $0x118] sm:$0xff]
      %v3615 = vld [vmem:[%s251 + $0x10] sm:$0xc]
      %v3616 = vld [vmem:[%s251 + $0x14] sm:$0xf]
      %v3617 = vld [vmem:[%s251 + $0x18] sm:$0xf]
      %v3618 = vld [vmem:[%s251 + $0x1c] sm:$0xf]
      %v3619 = vld [vmem:[%s251 + $0x20] sm:$0xf]
      %v3620 = vld [vmem:[%s251 + $0x24] sm:$0xf]
      %v3621 = vld [vmem:[%s251 + $0x28] sm:$0xf]
      %v3622 = vld [vmem:[%s251 + $0x2c] sm:$0xf]
      %v3623 = vld [vmem:[%s251 + $0x30] sm:$0xf]
      %v3624 = vld [vmem:[%s251 + $0x34] sm:$0xf]
      %v3625 = vld [vmem:[%s251 + $0x38] sm:$0xf]
      %v3626 = vld [vmem:[%s251 + $0x3c] sm:$0xf]
      %v3627 = vld [vmem:[%s251 + $0x40] sm:$0xf]
      %v3628 = vld [vmem:[%s251 + $0x44] sm:$0xf]
      %v3629 = vld [vmem:[%s251 + $0x48] sm:$0xf]
      %v3630 = vld [vmem:[%s251 + $0x4c] sm:$0xf]
      %v3631 = vld [vmem:[%s251 + $0x50] sm:$0xf]
      %v3632 = vld [vmem:[%s251 + $0x54] sm:$0xf]
      %v3633 = vld [vmem:[%s251 + $0x58] sm:$0xf]
      %v3634 = vld [vmem:[%s251 + $0x5c] sm:$0xf]
      %v3635 = vld [vmem:[%s251 + $0x60] sm:$0xf]
      %v3636 = vld [vmem:[%s251 + $0x64] sm:$0xf]
      %v3637 = vld [vmem:[%s251 + $0x68] sm:$0xf]
      %v3638 = vld [vmem:[%s251 + $0x6c] sm:$0xf]
      %v3639 = vld [vmem:[%s251 + $0x70] sm:$0xf]
      %v3640 = vld [vmem:[%s251 + $0x74] sm:$0xf]
      %v3641 = vld [vmem:[%s251 + $0x78] sm:$0xf]
      %v3642 = vld [vmem:[%s251 + $0x7c] sm:$0xf]
      %v3643 = vld [vmem:[%s251 + $0x80] sm:$0xf]
      %v3644 = vld [vmem:[%s251 + $0x84] sm:$0xf]
      %v3645 = vld [vmem:[%s251 + $0x88] sm:$0xf]
      %v3646 = vld [vmem:[%s251 + $0x8c] sm:$0xf]
      %v3647 = vld [vmem:[%s251 + $0x90] sm:$0xf]
      %v3648 = vld [vmem:[%s251 + $0x94] sm:$0xf]
      %v3649 = vld [vmem:[%s251 + $0x98] sm:$0xf]
      %v3650 = vld [vmem:[%s251 + $0x9c] sm:$0xf]
      %v3651 = vld [vmem:[%s251 + $0xa0] sm:$0x3]
      %s3652 = scalar_lea.vmem %s1, 12
      %v3653 = vld [vmem:[%s3652] sm:$0x3]
      %v3691 = vunpack.c.l.b16 %v3615
      %v3692 = vunpack.c.l.b16 %v3616
      %v3693 = vunpack.c.l.b16 %v3617
      %v3694 = vunpack.c.l.b16 %v3618
      %v3695 = vunpack.c.l.b16 %v3619
      %v3696 = vunpack.c.l.b16 %v3620
      %v3697 = vunpack.c.l.b16 %v3621
      %v3698 = vunpack.c.l.b16 %v3622
      %v3699 = vunpack.c.l.b16 %v3623
      %v3700 = vunpack.c.l.b16 %v3624
      %v3701 = vunpack.c.l.b16 %v3625
      %v3702 = vunpack.c.l.b16 %v3626
      %v3703 = vunpack.c.l.b16 %v3627
      %v3704 = vunpack.c.l.b16 %v3628
      %v3705 = vunpack.c.l.b16 %v3629
      %v3706 = vunpack.c.l.b16 %v3630
      %v3707 = vunpack.c.l.b16 %v3631
      %v3708 = vunpack.c.l.b16 %v3632
      %v3709 = vunpack.c.l.b16 %v3633
      %v3710 = vunpack.c.l.b16 %v3634
      %v3711 = vunpack.c.l.b16 %v3635
      %v3712 = vunpack.c.l.b16 %v3636
      %v3713 = vunpack.c.l.b16 %v3637
      %v3714 = vunpack.c.l.b16 %v3638
      %v3715 = vunpack.c.l.b16 %v3639
      %v3716 = vunpack.c.l.b16 %v3640
      %v3717 = vunpack.c.l.b16 %v3641
      %v3718 = vunpack.c.l.b16 %v3642
      %v3719 = vunpack.c.l.b16 %v3643
      %v3720 = vunpack.c.l.b16 %v3644
      %v3721 = vunpack.c.l.b16 %v3645
      %v3722 = vunpack.c.l.b16 %v3646
      %v3723 = vunpack.c.l.b16 %v3647
      %v3724 = vunpack.c.l.b16 %v3648
      %v3725 = vunpack.c.l.b16 %v3649
      %v3726 = vunpack.c.l.b16 %v3650
      %v3727 = vunpack.c.l.b16 %v3651
      %v3728 = vpack.c.b16 %v3692, %v3691
      %v3729 = vpack.c.b16 %v3694, %v3693
      %v3730 = vpack.c.b16 %v3696, %v3695
      %v3731 = vpack.c.b16 %v3698, %v3697
      %v3732 = vpack.c.b16 %v3700, %v3699
      %v3733 = vpack.c.b16 %v3702, %v3701
      %v3734 = vpack.c.b16 %v3704, %v3703
      %v3735 = vpack.c.b16 %v3706, %v3705
      %v3736 = vpack.c.b16 %v3708, %v3707
      %v3737 = vpack.c.b16 %v3710, %v3709
      %v3738 = vpack.c.b16 %v3712, %v3711
      %v3739 = vpack.c.b16 %v3714, %v3713
      %v3740 = vpack.c.b16 %v3716, %v3715
      %v3741 = vpack.c.b16 %v3718, %v3717
      %v3742 = vpack.c.b16 %v3720, %v3719
      %v3743 = vpack.c.b16 %v3722, %v3721
      %v3744 = vpack.c.b16 %v3724, %v3723
      %v3745 = vpack.c.b16 %v3726, %v3725
      %v3746 = vpack.c.b16 %v3727, %v3727
      %v3747 = vrot.slane %v3728, 2
      %v3748 = vrot.slane %v3729, 2
      %v3749 = vsel %vm3235, %v3747, %v3748
      %v3750 = vrot.slane %v3730, 2
      %v3751 = vsel %vm3235, %v3748, %v3750
      %v3752 = vrot.slane %v3731, 2
      %v3753 = vsel %vm3235, %v3750, %v3752
      %v3754 = vrot.slane %v3732, 2
      %v3755 = vsel %vm3235, %v3752, %v3754
      %v3756 = vrot.slane %v3733, 2
      %v3757 = vsel %vm3235, %v3754, %v3756
      %v3758 = vrot.slane %v3734, 2
      %v3759 = vsel %vm3235, %v3756, %v3758
      %v3760 = vrot.slane %v3735, 2
      %v3761 = vsel %vm3235, %v3758, %v3760
      %v3762 = vrot.slane %v3736, 2
      %v3763 = vsel %vm3235, %v3760, %v3762
      %v3764 = vrot.slane %v3737, 2
      %v3765 = vsel %vm3235, %v3762, %v3764
      %v3766 = vrot.slane %v3738, 2
      %v3767 = vsel %vm3235, %v3764, %v3766
      %v3768 = vrot.slane %v3739, 2
      %v3769 = vsel %vm3235, %v3766, %v3768
      %v3770 = vrot.slane %v3740, 2
      %v3771 = vsel %vm3235, %v3768, %v3770
      %v3772 = vrot.slane %v3741, 2
      %v3773 = vsel %vm3235, %v3770, %v3772
      %v3774 = vrot.slane %v3742, 2
      %v3775 = vsel %vm3235, %v3772, %v3774
      %v3776 = vrot.slane %v3743, 2
      %v3777 = vsel %vm3235, %v3774, %v3776
      %v3778 = vrot.slane %v3744, 2
      %v3779 = vsel %vm3235, %v3776, %v3778
      %v3780 = vrot.slane %v3745, 2
      %v3781 = vsel %vm3235, %v3778, %v3780
      %v3782 = vrot.slane %v3746, 2
      %v3783 = vsel %vm3235, %v3780, %v3782
      %v3785 = vsel %vm269, %v3749, 0
      %v3788 = vsel %vm269, %v3751, 0
      %v3791 = vsel %vm269, %v3753, 0
      %v3794 = vsel %vm269, %v3755, 0
      %v3797 = vsel %vm269, %v3757, 0
      %v3800 = vsel %vm269, %v3759, 0
      %v3803 = vsel %vm269, %v3761, 0
      %v3806 = vsel %vm269, %v3763, 0
      %v3809 = vsel %vm269, %v3765, 0
      %v3812 = vsel %vm269, %v3767, 0
      %v3815 = vsel %vm269, %v3769, 0
      %v3818 = vsel %vm269, %v3771, 0
      %v3821 = vsel %vm269, %v3773, 0
      %v3824 = vsel %vm269, %v3775, 0
      %v3827 = vsel %vm269, %v3777, 0
      %v3830 = vsel %vm269, %v3779, 0
      %v3833 = vsel %vm269, %v3781, 0
      %v3836 = vsel %vm269, %v3783, 0
      %v3839 = vsel %vm523, %v3653, 0
      %3841 = vmatprep.subr.bf16.mxu0 0
      %3842 = vmatpush1.bf16.msra.mxu0 %v3839
      %3843 = vmatprep.subr.bf16.mxu0 0
      %3844 = vmatpush1.bf16.msra.mxu0 0
      %3845 = vmatprep.subr.bf16.mxu0 0
      %3846 = vmatpush1.bf16.msra.mxu0 0
      %3847 = vmatprep.subr.bf16.mxu0 0
      %3848 = vmatpush1.bf16.msra.mxu0 0
      %3849 = vmatprep.subr.bf16.mxu0 0
      %3850 = vmatpush1.bf16.msra.mxu0 0
      %3851 = vmatprep.subr.bf16.mxu0 0
      %3852 = vmatpush1.bf16.msra.mxu0 0
      %3853 = vmatprep.subr.bf16.mxu0 0
      %3854 = vmatpush1.bf16.msra.mxu0 0
      %3855 = vmatprep.subr.bf16.mxu0 0
      %3856 = vmatpush1.bf16.msra.mxu0 0
      %3857 = vmatprep.subr.bf16.mxu0 0
      %3858 = vmatpush1.bf16.msra.mxu0 0
      %3859 = vmatprep.subr.bf16.mxu0 0
      %3860 = vmatpush1.bf16.msra.mxu0 0
      %3861 = vmatprep.subr.bf16.mxu0 0
      %3862 = vmatpush1.bf16.msra.mxu0 0
      %3863 = vmatprep.subr.bf16.mxu0 0
      %3864 = vmatpush1.bf16.msra.mxu0 0
      %3865 = vmatprep.subr.bf16.mxu0 0
      %3866 = vmatpush1.bf16.msra.mxu0 0
      %3867 = vmatprep.subr.bf16.mxu0 0
      %3868 = vmatpush1.bf16.msra.mxu0 0
      %3869 = vmatprep.subr.bf16.mxu0 0
      %3870 = vmatpush1.bf16.msra.mxu0 0
      %3871 = vmatprep.subr.bf16.mxu0 0
      %3872 = vmatpush1.bf16.msra.mxu0 0
      %3873 = vmatprep.mubr.bf16.mxu0 0
      %3874 = vmatmul.mubr.bf16.gmra.mrb[0].mxu0 %v3785
      %v3875 = vpop.f32.mrb[0].mxu0
      %v3876 = vadd.f32 0.0, %v3875
      %v3877 = vpop.f32.mrb[0].mxu0
      %v3878 = vpop.f32.mrb[0].mxu0
      %v3879 = vadd.f32 0.0, %v3878
      %v3880 = vpop.f32.mrb[0].mxu0
      %3881 = vmatprep.mubr.bf16.mxu0 0
      %3882 = vmatmul.mubr.bf16.gmra.mrb[0].mxu0 %v3788
      %v3883 = vpop.f32.mrb[0].mxu0
      %v3884 = vadd.f32 0.0, %v3883
      %v3885 = vpop.f32.mrb[0].mxu0
      %v3886 = vpop.f32.mrb[0].mxu0
      %v3887 = vadd.f32 0.0, %v3886
      %v3888 = vpop.f32.mrb[0].mxu0
      %3889 = vmatprep.mubr.bf16.mxu0 0
      %3890 = vmatmul.mubr.bf16.gmra.mrb[0].mxu0 %v3791
      %v3891 = vpop.f32.mrb[0].mxu0
      %v3892 = vadd.f32 0.0, %v3891
      %v3893 = vpop.f32.mrb[0].mxu0
      %v3894 = vpop.f32.mrb[0].mxu0
      %v3895 = vadd.f32 0.0, %v3894
      %v3896 = vpop.f32.mrb[0].mxu0
      %3897 = vmatprep.mubr.bf16.mxu0 0
      %3898 = vmatmul.mubr.bf16.gmra.mrb[0].mxu0 %v3794
      %v3899 = vpop.f32.mrb[0].mxu0
      %v3900 = vadd.f32 0.0, %v3899
      %v3901 = vpop.f32.mrb[0].mxu0
      %v3902 = vpop.f32.mrb[0].mxu0
      %v3903 = vadd.f32 0.0, %v3902
      %v3904 = vpop.f32.mrb[0].mxu0
      %3905 = vmatprep.mubr.bf16.mxu0 0
      %3906 = vmatmul.mubr.bf16.gmra.mrb[0].mxu0 %v3797
      %v3907 = vpop.f32.mrb[0].mxu0
      %v3908 = vadd.f32 0.0, %v3907
      %v3909 = vpop.f32.mrb[0].mxu0
      %v3910 = vpop.f32.mrb[0].mxu0
      %v3911 = vadd.f32 0.0, %v3910
      %v3912 = vpop.f32.mrb[0].mxu0
      %3913 = vmatprep.mubr.bf16.mxu0 0
      %3914 = vmatmul.mubr.bf16.gmra.mrb[0].mxu0 %v3800
      %v3915 = vpop.f32.mrb[0].mxu0
      %v3916 = vadd.f32 0.0, %v3915
      %v3917 = vpop.f32.mrb[0].mxu0
      %v3918 = vpop.f32.mrb[0].mxu0
      %v3919 = vadd.f32 0.0, %v3918
      %v3920 = vpop.f32.mrb[0].mxu0
      %3921 = vmatprep.mubr.bf16.mxu0 0
      %3922 = vmatmul.mubr.bf16.gmra.mrb[0].mxu0 %v3803
      %v3923 = vpop.f32.mrb[0].mxu0
      %v3924 = vadd.f32 0.0, %v3923
      %v3925 = vpop.f32.mrb[0].mxu0
      %v3926 = vpop.f32.mrb[0].mxu0
      %v3927 = vadd.f32 0.0, %v3926
      %v3928 = vpop.f32.mrb[0].mxu0
      %3929 = vmatprep.mubr.bf16.mxu0 0
      %3930 = vmatmul.mubr.bf16.gmra.mrb[0].mxu0 %v3806
      %v3931 = vpop.f32.mrb[0].mxu0
      %v3932 = vadd.f32 0.0, %v3931
      %v3933 = vpop.f32.mrb[0].mxu0
      %v3934 = vpop.f32.mrb[0].mxu0
      %v3935 = vadd.f32 0.0, %v3934
      %v3936 = vpop.f32.mrb[0].mxu0
      %3937 = vmatprep.mubr.bf16.mxu0 0
      %3938 = vmatmul.mubr.bf16.gmra.mrb[0].mxu0 %v3809
      %v3939 = vpop.f32.mrb[0].mxu0
      %v3940 = vadd.f32 0.0, %v3939
      %v3941 = vpop.f32.mrb[0].mxu0
      %v3942 = vpop.f32.mrb[0].mxu0
      %v3943 = vadd.f32 0.0, %v3942
      %v3944 = vpop.f32.mrb[0].mxu0
      %3945 = vmatprep.mubr.bf16.mxu0 0
      %3946 = vmatmul.mubr.bf16.gmra.mrb[0].mxu0 %v3812
      %v3947 = vpop.f32.mrb[0].mxu0
      %v3948 = vadd.f32 0.0, %v3947
      %v3949 = vpop.f32.mrb[0].mxu0
      %v3950 = vpop.f32.mrb[0].mxu0
      %v3951 = vadd.f32 0.0, %v3950
      %v3952 = vpop.f32.mrb[0].mxu0
      %3953 = vmatprep.mubr.bf16.mxu0 0
      %3954 = vmatmul.mubr.bf16.gmra.mrb[0].mxu0 %v3815
      %v3955 = vpop.f32.mrb[0].mxu0
      %v3956 = vadd.f32 0.0, %v3955
      %v3957 = vpop.f32.mrb[0].mxu0
      %v3958 = vpop.f32.mrb[0].mxu0
      %v3959 = vadd.f32 0.0, %v3958
      %v3960 = vpop.f32.mrb[0].mxu0
      %3961 = vmatprep.mubr.bf16.mxu0 0
      %3962 = vmatmul.mubr.bf16.gmra.mrb[0].mxu0 %v3818
      %v3963 = vpop.f32.mrb[0].mxu0
      %v3964 = vadd.f32 0.0, %v3963
      %v3965 = vpop.f32.mrb[0].mxu0
      %v3966 = vpop.f32.mrb[0].mxu0
      %v3967 = vadd.f32 0.0, %v3966
      %v3968 = vpop.f32.mrb[0].mxu0
      %3969 = vmatprep.mubr.bf16.mxu0 0
      %3970 = vmatmul.mubr.bf16.gmra.mrb[0].mxu0 %v3821
      %v3971 = vpop.f32.mrb[0].mxu0
      %v3972 = vadd.f32 0.0, %v3971
      %v3973 = vpop.f32.mrb[0].mxu0
      %v3974 = vpop.f32.mrb[0].mxu0
      %v3975 = vadd.f32 0.0, %v3974
      %v3976 = vpop.f32.mrb[0].mxu0
      %3977 = vmatprep.mubr.bf16.mxu0 0
      %3978 = vmatmul.mubr.bf16.gmra.mrb[0].mxu0 %v3824
      %v3979 = vpop.f32.mrb[0].mxu0
      %v3980 = vadd.f32 0.0, %v3979
      %v3981 = vpop.f32.mrb[0].mxu0
      %v3982 = vpop.f32.mrb[0].mxu0
      %v3983 = vadd.f32 0.0, %v3982
      %v3984 = vpop.f32.mrb[0].mxu0
      %3985 = vmatprep.mubr.bf16.mxu0 0
      %3986 = vmatmul.mubr.bf16.gmra.mrb[0].mxu0 %v3827
      %v3987 = vpop.f32.mrb[0].mxu0
      %v3988 = vadd.f32 0.0, %v3987
      %v3989 = vpop.f32.mrb[0].mxu0
      %v3990 = vpop.f32.mrb[0].mxu0
      %v3991 = vadd.f32 0.0, %v3990
      %v3992 = vpop.f32.mrb[0].mxu0
      %3993 = vmatprep.mubr.bf16.mxu0 0
      %3994 = vmatmul.mubr.bf16.gmra.mrb[0].mxu0 %v3830
      %v3995 = vpop.f32.mrb[0].mxu0
      %v3996 = vadd.f32 0.0, %v3995
      %v3997 = vpop.f32.mrb[0].mxu0
      %v3998 = vpop.f32.mrb[0].mxu0
      %v3999 = vadd.f32 0.0, %v3998
      %v4000 = vpop.f32.mrb[0].mxu0
      %4001 = vmatprep.mubr.bf16.mxu0 0
      %4002 = vmatmul.mubr.bf16.gmra.mrb[0].mxu0 %v3833
      %v4003 = vpop.f32.mrb[0].mxu0
      %v4004 = vadd.f32 0.0, %v4003
      %v4005 = vpop.f32.mrb[0].mxu0
      %v4006 = vpop.f32.mrb[0].mxu0
      %v4007 = vadd.f32 0.0, %v4006
      %v4008 = vpop.f32.mrb[0].mxu0
      %4009 = vmatprep.mubr.bf16.mxu0 0
      %4010 = vmatmul.mubr.bf16.gmra.mrb[0].mxu0 %v3836
      %v4011 = vpop.f32.mrb[0].mxu0
      %v4012 = vadd.f32 0.0, %v4011
      %v4013 = vpop.f32.mrb[0].mxu0
      %v4014 = vpop.f32.mrb[0].mxu0
      %v4015 = vadd.f32 0.0, %v4014
      %v4016 = vpop.f32.mrb[0].mxu0
      %4017 = vdwg.mxu0
      %v4018 = vadd.f32 %v3579, %v3876
      %v4019 = vadd.f32 %v3580, %v3879
      %v4020 = vadd.f32 %v3581, %v3884
      %v4021 = vadd.f32 %v3582, %v3887
      %v4022 = vadd.f32 %v3583, %v3892
      %v4023 = vadd.f32 %v3584, %v3895
      %v4024 = vadd.f32 %v3585, %v3900
      %v4025 = vadd.f32 %v3586, %v3903
      %v4026 = vadd.f32 %v3587, %v3908
      %v4027 = vadd.f32 %v3588, %v3911
      %v4028 = vadd.f32 %v3589, %v3916
      %v4029 = vadd.f32 %v3590, %v3919
      %v4030 = vadd.f32 %v3591, %v3924
      %v4031 = vadd.f32 %v3592, %v3927
      %v4032 = vadd.f32 %v3593, %v3932
      %v4033 = vadd.f32 %v3594, %v3935
      %v4034 = vadd.f32 %v3595, %v3940
      %v4035 = vadd.f32 %v3596, %v3943
      %v4036 = vadd.f32 %v3597, %v3948
      %v4037 = vadd.f32 %v3598, %v3951
      %v4038 = vadd.f32 %v3599, %v3956
      %v4039 = vadd.f32 %v3600, %v3959
      %v4040 = vadd.f32 %v3601, %v3964
      %v4041 = vadd.f32 %v3602, %v3967
      %v4042 = vadd.f32 %v3603, %v3972
      %v4043 = vadd.f32 %v3604, %v3975
      %v4044 = vadd.f32 %v3605, %v3980
      %v4045 = vadd.f32 %v3606, %v3983
      %v4046 = vadd.f32 %v3607, %v3988
      %v4047 = vadd.f32 %v3608, %v3991
      %v4048 = vadd.f32 %v3609, %v3996
      %v4049 = vadd.f32 %v3610, %v3999
      %v4050 = vadd.f32 %v3611, %v4004
      %v4051 = vadd.f32 %v3612, %v4007
      %v4052 = vadd.f32 %v3613, %v4012
      %v4053 = vadd.f32 %v3614, %v4015
      %4054 = vst.msk [vmem:[#allocation2] sm:$0xff] %vm269, %v4018
      %4055 = vst.msk [vmem:[#allocation2 + $0x8] sm:$0xff] %vm269, %v4019
      %4056 = vst.msk [vmem:[#allocation2 + $0x10] sm:$0xff] %vm269, %v4020
      %4057 = vst.msk [vmem:[#allocation2 + $0x18] sm:$0xff] %vm269, %v4021
      %4058 = vst.msk [vmem:[#allocation2 + $0x20] sm:$0xff] %vm269, %v4022
      %4059 = vst.msk [vmem:[#allocation2 + $0x28] sm:$0xff] %vm269, %v4023
      %4060 = vst.msk [vmem:[#allocation2 + $0x30] sm:$0xff] %vm269, %v4024
      %4061 = vst.msk [vmem:[#allocation2 + $0x38] sm:$0xff] %vm269, %v4025
      %4062 = vst.msk [vmem:[#allocation2 + $0x40] sm:$0xff] %vm269, %v4026
      %4063 = vst.msk [vmem:[#allocation2 + $0x48] sm:$0xff] %vm269, %v4027
      %4064 = vst.msk [vmem:[#allocation2 + $0x50] sm:$0xff] %vm269, %v4028
      %4065 = vst.msk [vmem:[#allocation2 + $0x58] sm:$0xff] %vm269, %v4029
      %4066 = vst.msk [vmem:[#allocation2 + $0x60] sm:$0xff] %vm269, %v4030
      %4067 = vst.msk [vmem:[#allocation2 + $0x68] sm:$0xff] %vm269, %v4031
      %4068 = vst.msk [vmem:[#allocation2 + $0x70] sm:$0xff] %vm269, %v4032
      %4069 = vst.msk [vmem:[#allocation2 + $0x78] sm:$0xff] %vm269, %v4033
      %4070 = vst.msk [vmem:[#allocation2 + $0x80] sm:$0xff] %vm269, %v4034
      %4071 = vst.msk [vmem:[#allocation2 + $0x88] sm:$0xff] %vm269, %v4035
      %4072 = vst.msk [vmem:[#allocation2 + $0x90] sm:$0xff] %vm269, %v4036
      %4073 = vst.msk [vmem:[#allocation2 + $0x98] sm:$0xff] %vm269, %v4037
      %4074 = vst.msk [vmem:[#allocation2 + $0xa0] sm:$0xff] %vm269, %v4038
      %4075 = vst.msk [vmem:[#allocation2 + $0xa8] sm:$0xff] %vm269, %v4039
      %4076 = vst.msk [vmem:[#allocation2 + $0xb0] sm:$0xff] %vm269, %v4040
      %4077 = vst.msk [vmem:[#allocation2 + $0xb8] sm:$0xff] %vm269, %v4041
      %4078 = vst.msk [vmem:[#allocation2 + $0xc0] sm:$0xff] %vm269, %v4042
      %4079 = vst.msk [vmem:[#allocation2 + $0xc8] sm:$0xff] %vm269, %v4043
      %4080 = vst.msk [vmem:[#allocation2 + $0xd0] sm:$0xff] %vm269, %v4044
      %4081 = vst.msk [vmem:[#allocation2 + $0xd8] sm:$0xff] %vm269, %v4045
      %4082 = vst.msk [vmem:[#allocation2 + $0xe0] sm:$0xff] %vm269, %v4046
      %4083 = vst.msk [vmem:[#allocation2 + $0xe8] sm:$0xff] %vm269, %v4047
      %4084 = vst.msk [vmem:[#allocation2 + $0xf0] sm:$0xff] %vm269, %v4048
      %4085 = vst.msk [vmem:[#allocation2 + $0xf8] sm:$0xff] %vm269, %v4049
      %4086 = vst.msk [vmem:[#allocation2 + $0x100] sm:$0xff] %vm269, %v4050
      %4087 = vst.msk [vmem:[#allocation2 + $0x108] sm:$0xff] %vm269, %v4051
      %4088 = vst.msk [vmem:[#allocation2 + $0x110] sm:$0xff] %vm269, %v4052
      %4089 = vst.msk [vmem:[#allocation2 + $0x118] sm:$0xff] %vm269, %v4053
      %v4090 = vld [vmem:[#allocation2] sm:$0xff]
      %v4091 = vld [vmem:[#allocation2 + $0x8] sm:$0xff]
      %v4092 = vld [vmem:[#allocation2 + $0x10] sm:$0xff]
      %v4093 = vld [vmem:[#allocation2 + $0x18] sm:$0xff]
      %v4094 = vld [vmem:[#allocation2 + $0x20] sm:$0xff]
      %v4095 = vld [vmem:[#allocation2 + $0x28] sm:$0xff]
      %v4096 = vld [vmem:[#allocation2 + $0x30] sm:$0xff]
      %v4097 = vld [vmem:[#allocation2 + $0x38] sm:$0xff]
      %v4098 = vld [vmem:[#allocation2 + $0x40] sm:$0xff]
      %v4099 = vld [vmem:[#allocation2 + $0x48] sm:$0xff]
      %v4100 = vld [vmem:[#allocation2 + $0x50] sm:$0xff]
      %v4101 = vld [vmem:[#allocation2 + $0x58] sm:$0xff]
      %v4102 = vld [vmem:[#allocation2 + $0x60] sm:$0xff]
      %v4103 = vld [vmem:[#allocation2 + $0x68] sm:$0xff]
      %v4104 = vld [vmem:[#allocation2 + $0x70] sm:$0xff]
      %v4105 = vld [vmem:[#allocation2 + $0x78] sm:$0xff]
      %v4106 = vld [vmem:[#allocation2 + $0x80] sm:$0xff]
      %v4107 = vld [vmem:[#allocation2 + $0x88] sm:$0xff]
      %v4108 = vld [vmem:[#allocation2 + $0x90] sm:$0xff]
      %v4109 = vld [vmem:[#allocation2 + $0x98] sm:$0xff]
      %v4110 = vld [vmem:[#allocation2 + $0xa0] sm:$0xff]
      %v4111 = vld [vmem:[#allocation2 + $0xa8] sm:$0xff]
      %v4112 = vld [vmem:[#allocation2 + $0xb0] sm:$0xff]
      %v4113 = vld [vmem:[#allocation2 + $0xb8] sm:$0xff]
      %v4114 = vld [vmem:[#allocation2 + $0xc0] sm:$0xff]
      %v4115 = vld [vmem:[#allocation2 + $0xc8] sm:$0xff]
      %v4116 = vld [vmem:[#allocation2 + $0xd0] sm:$0xff]
      %v4117 = vld [vmem:[#allocation2 + $0xd8] sm:$0xff]
      %v4118 = vld [vmem:[#allocation2 + $0xe0] sm:$0xff]
      %v4119 = vld [vmem:[#allocation2 + $0xe8] sm:$0xff]
      %v4120 = vld [vmem:[#allocation2 + $0xf0] sm:$0xff]
      %v4121 = vld [vmem:[#allocation2 + $0xf8] sm:$0xff]
      %v4122 = vld [vmem:[#allocation2 + $0x100] sm:$0xff]
      %v4123 = vld [vmem:[#allocation2 + $0x108] sm:$0xff]
      %v4124 = vld [vmem:[#allocation2 + $0x110] sm:$0xff]
      %v4125 = vld [vmem:[#allocation2 + $0x118] sm:$0xff]
      %v4126 = vld [vmem:[%s251 + $0x10] sm:$0xc]
      %v4127 = vld [vmem:[%s251 + $0x14] sm:$0xf]
      %v4128 = vld [vmem:[%s251 + $0x18] sm:$0xf]
      %v4129 = vld [vmem:[%s251 + $0x1c] sm:$0xf]
      %v4130 = vld [vmem:[%s251 + $0x20] sm:$0xf]
      %v4131 = vld [vmem:[%s251 + $0x24] sm:$0xf]
      %v4132 = vld [vmem:[%s251 + $0x28] sm:$0xf]
      %v4133 = vld [vmem:[%s251 + $0x2c] sm:$0xf]
      %v4134 = vld [vmem:[%s251 + $0x30] sm:$0xf]
      %v4135 = vld [vmem:[%s251 + $0x34] sm:$0xf]
      %v4136 = vld [vmem:[%s251 + $0x38] sm:$0xf]
      %v4137 = vld [vmem:[%s251 + $0x3c] sm:$0xf]
      %v4138 = vld [vmem:[%s251 + $0x40] sm:$0xf]
      %v4139 = vld [vmem:[%s251 + $0x44] sm:$0xf]
      %v4140 = vld [vmem:[%s251 + $0x48] sm:$0xf]
      %v4141 = vld [vmem:[%s251 + $0x4c] sm:$0xf]
      %v4142 = vld [vmem:[%s251 + $0x50] sm:$0xf]
      %v4143 = vld [vmem:[%s251 + $0x54] sm:$0xf]
      %v4144 = vld [vmem:[%s251 + $0x58] sm:$0xf]
      %v4145 = vld [vmem:[%s251 + $0x5c] sm:$0xf]
      %v4146 = vld [vmem:[%s251 + $0x60] sm:$0xf]
      %v4147 = vld [vmem:[%s251 + $0x64] sm:$0xf]
      %v4148 = vld [vmem:[%s251 + $0x68] sm:$0xf]
      %v4149 = vld [vmem:[%s251 + $0x6c] sm:$0xf]
      %v4150 = vld [vmem:[%s251 + $0x70] sm:$0xf]
      %v4151 = vld [vmem:[%s251 + $0x74] sm:$0xf]
      %v4152 = vld [vmem:[%s251 + $0x78] sm:$0xf]
      %v4153 = vld [vmem:[%s251 + $0x7c] sm:$0xf]
      %v4154 = vld [vmem:[%s251 + $0x80] sm:$0xf]
      %v4155 = vld [vmem:[%s251 + $0x84] sm:$0xf]
      %v4156 = vld [vmem:[%s251 + $0x88] sm:$0xf]
      %v4157 = vld [vmem:[%s251 + $0x8c] sm:$0xf]
      %v4158 = vld [vmem:[%s251 + $0x90] sm:$0xf]
      %v4159 = vld [vmem:[%s251 + $0x94] sm:$0xf]
      %v4160 = vld [vmem:[%s251 + $0x98] sm:$0xf]
      %v4161 = vld [vmem:[%s251 + $0x9c] sm:$0xf]
      %v4162 = vld [vmem:[%s251 + $0xa0] sm:$0x7]
      %s4163 = scalar_lea.vmem %s1, 14
      %v4164 = vld [vmem:[%s4163] sm:$0x3]
      %v4202 = vunpack.c.l.b16 %v4126
      %v4203 = vunpack.c.l.b16 %v4127
      %v4204 = vunpack.c.l.b16 %v4128
      %v4205 = vunpack.c.l.b16 %v4129
      %v4206 = vunpack.c.l.b16 %v4130
      %v4207 = vunpack.c.l.b16 %v4131
      %v4208 = vunpack.c.l.b16 %v4132
      %v4209 = vunpack.c.l.b16 %v4133
      %v4210 = vunpack.c.l.b16 %v4134
      %v4211 = vunpack.c.l.b16 %v4135
      %v4212 = vunpack.c.l.b16 %v4136
      %v4213 = vunpack.c.l.b16 %v4137
      %v4214 = vunpack.c.l.b16 %v4138
      %v4215 = vunpack.c.l.b16 %v4139
      %v4216 = vunpack.c.l.b16 %v4140
      %v4217 = vunpack.c.l.b16 %v4141
      %v4218 = vunpack.c.l.b16 %v4142
      %v4219 = vunpack.c.l.b16 %v4143
      %v4220 = vunpack.c.l.b16 %v4144
      %v4221 = vunpack.c.l.b16 %v4145
      %v4222 = vunpack.c.l.b16 %v4146
      %v4223 = vunpack.c.l.b16 %v4147
      %v4224 = vunpack.c.l.b16 %v4148
      %v4225 = vunpack.c.l.b16 %v4149
      %v4226 = vunpack.c.l.b16 %v4150
      %v4227 = vunpack.c.l.b16 %v4151
      %v4228 = vunpack.c.l.b16 %v4152
      %v4229 = vunpack.c.l.b16 %v4153
      %v4230 = vunpack.c.l.b16 %v4154
      %v4231 = vunpack.c.l.b16 %v4155
      %v4232 = vunpack.c.l.b16 %v4156
      %v4233 = vunpack.c.l.b16 %v4157
      %v4234 = vunpack.c.l.b16 %v4158
      %v4235 = vunpack.c.l.b16 %v4159
      %v4236 = vunpack.c.l.b16 %v4160
      %v4237 = vunpack.c.l.b16 %v4161
      %v4238 = vunpack.c.l.b16 %v4162
      %v4239 = vpack.c.b16 %v4203, %v4202
      %v4240 = vpack.c.b16 %v4205, %v4204
      %v4241 = vpack.c.b16 %v4207, %v4206
      %v4242 = vpack.c.b16 %v4209, %v4208
      %v4243 = vpack.c.b16 %v4211, %v4210
      %v4244 = vpack.c.b16 %v4213, %v4212
      %v4245 = vpack.c.b16 %v4215, %v4214
      %v4246 = vpack.c.b16 %v4217, %v4216
      %v4247 = vpack.c.b16 %v4219, %v4218
      %v4248 = vpack.c.b16 %v4221, %v4220
      %v4249 = vpack.c.b16 %v4223, %v4222
      %v4250 = vpack.c.b16 %v4225, %v4224
      %v4251 = vpack.c.b16 %v4227, %v4226
      %v4252 = vpack.c.b16 %v4229, %v4228
      %v4253 = vpack.c.b16 %v4231, %v4230
      %v4254 = vpack.c.b16 %v4233, %v4232
      %v4255 = vpack.c.b16 %v4235, %v4234
      %v4256 = vpack.c.b16 %v4237, %v4236
      %v4257 = vpack.c.b16 %v4238, %v4238
      %vm4258 = vsmask.f32 5376
      %v4260 = vshrl.u32 %v4239, 16
      %v4262 = vrot.slane %v4260, 2
      %v4263 = vshll.u32 %v4239, 16
      %v4265 = vrot.slane %v4263, 3
      %v4266 = vor.u32 %v4262, %v4265
      %v4268 = vshrl.u32 %v4240, 16
      %v4270 = vrot.slane %v4268, 2
      %v4271 = vshll.u32 %v4240, 16
      %v4273 = vrot.slane %v4271, 3
      %v4274 = vor.u32 %v4270, %v4273
      %v4275 = vsel %vm4258, %v4266, %v4274
      %v4277 = vshrl.u32 %v4241, 16
      %v4279 = vrot.slane %v4277, 2
      %v4280 = vshll.u32 %v4241, 16
      %v4282 = vrot.slane %v4280, 3
      %v4283 = vor.u32 %v4279, %v4282
      %v4284 = vsel %vm4258, %v4274, %v4283
      %v4286 = vshrl.u32 %v4242, 16
      %v4288 = vrot.slane %v4286, 2
      %v4289 = vshll.u32 %v4242, 16
      %v4291 = vrot.slane %v4289, 3
      %v4292 = vor.u32 %v4288, %v4291
      %v4293 = vsel %vm4258, %v4283, %v4292
      %v4295 = vshrl.u32 %v4243, 16
      %v4297 = vrot.slane %v4295, 2
      %v4298 = vshll.u32 %v4243, 16
      %v4300 = vrot.slane %v4298, 3
      %v4301 = vor.u32 %v4297, %v4300
      %v4302 = vsel %vm4258, %v4292, %v4301
      %v4304 = vshrl.u32 %v4244, 16
      %v4306 = vrot.slane %v4304, 2
      %v4307 = vshll.u32 %v4244, 16
      %v4309 = vrot.slane %v4307, 3
      %v4310 = vor.u32 %v4306, %v4309
      %v4311 = vsel %vm4258, %v4301, %v4310
      %v4313 = vshrl.u32 %v4245, 16
      %v4315 = vrot.slane %v4313, 2
      %v4316 = vshll.u32 %v4245, 16
      %v4318 = vrot.slane %v4316, 3
      %v4319 = vor.u32 %v4315, %v4318
      %v4320 = vsel %vm4258, %v4310, %v4319
      %v4322 = vshrl.u32 %v4246, 16
      %v4324 = vrot.slane %v4322, 2
      %v4325 = vshll.u32 %v4246, 16
      %v4327 = vrot.slane %v4325, 3
      %v4328 = vor.u32 %v4324, %v4327
      %v4329 = vsel %vm4258, %v4319, %v4328
      %v4331 = vshrl.u32 %v4247, 16
      %v4333 = vrot.slane %v4331, 2
      %v4334 = vshll.u32 %v4247, 16
      %v4336 = vrot.slane %v4334, 3
      %v4337 = vor.u32 %v4333, %v4336
      %v4338 = vsel %vm4258, %v4328, %v4337
      %v4340 = vshrl.u32 %v4248, 16
      %v4342 = vrot.slane %v4340, 2
      %v4343 = vshll.u32 %v4248, 16
      %v4345 = vrot.slane %v4343, 3
      %v4346 = vor.u32 %v4342, %v4345
      %v4347 = vsel %vm4258, %v4337, %v4346
      %v4349 = vshrl.u32 %v4249, 16
      %v4351 = vrot.slane %v4349, 2
      %v4352 = vshll.u32 %v4249, 16
      %v4354 = vrot.slane %v4352, 3
      %v4355 = vor.u32 %v4351, %v4354
      %v4356 = vsel %vm4258, %v4346, %v4355
      %v4358 = vshrl.u32 %v4250, 16
      %v4360 = vrot.slane %v4358, 2
      %v4361 = vshll.u32 %v4250, 16
      %v4363 = vrot.slane %v4361, 3
      %v4364 = vor.u32 %v4360, %v4363
      %v4365 = vsel %vm4258, %v4355, %v4364
      %v4367 = vshrl.u32 %v4251, 16
      %v4369 = vrot.slane %v4367, 2
      %v4370 = vshll.u32 %v4251, 16
      %v4372 = vrot.slane %v4370, 3
      %v4373 = vor.u32 %v4369, %v4372
      %v4374 = vsel %vm4258, %v4364, %v4373
      %v4376 = vshrl.u32 %v4252, 16
      %v4378 = vrot.slane %v4376, 2
      %v4379 = vshll.u32 %v4252, 16
      %v4381 = vrot.slane %v4379, 3
      %v4382 = vor.u32 %v4378, %v4381
      %v4383 = vsel %vm4258, %v4373, %v4382
      %v4385 = vshrl.u32 %v4253, 16
      %v4387 = vrot.slane %v4385, 2
      %v4388 = vshll.u32 %v4253, 16
      %v4390 = vrot.slane %v4388, 3
      %v4391 = vor.u32 %v4387, %v4390
      %v4392 = vsel %vm4258, %v4382, %v4391
      %v4394 = vshrl.u32 %v4254, 16
      %v4396 = vrot.slane %v4394, 2
      %v4397 = vshll.u32 %v4254, 16
      %v4399 = vrot.slane %v4397, 3
      %v4400 = vor.u32 %v4396, %v4399
      %v4401 = vsel %vm4258, %v4391, %v4400
      %v4403 = vshrl.u32 %v4255, 16
      %v4405 = vrot.slane %v4403, 2
      %v4406 = vshll.u32 %v4255, 16
      %v4408 = vrot.slane %v4406, 3
      %v4409 = vor.u32 %v4405, %v4408
      %v4410 = vsel %vm4258, %v4400, %v4409
      %v4412 = vshrl.u32 %v4256, 16
      %v4414 = vrot.slane %v4412, 2
      %v4415 = vshll.u32 %v4256, 16
      %v4417 = vrot.slane %v4415, 3
      %v4418 = vor.u32 %v4414, %v4417
      %v4419 = vsel %vm4258, %v4409, %v4418
      %v4421 = vshrl.u32 %v4257, 16
      %v4423 = vrot.slane %v4421, 2
      %v4424 = vshll.u32 %v4257, 16
      %v4426 = vrot.slane %v4424, 3
      %v4427 = vor.u32 %v4423, %v4426
      %v4428 = vsel %vm4258, %v4418, %v4427
      %v4430 = vsel %vm269, %v4275, 0
      %v4433 = vsel %vm269, %v4284, 0
      %v4436 = vsel %vm269, %v4293, 0
      %v4439 = vsel %vm269, %v4302, 0
      %v4442 = vsel %vm269, %v4311, 0
      %v4445 = vsel %vm269, %v4320, 0
      %v4448 = vsel %vm269, %v4329, 0
      %v4451 = vsel %vm269, %v4338, 0
      %v4454 = vsel %vm269, %v4347, 0
      %v4457 = vsel %vm269, %v4356, 0
      %v4460 = vsel %vm269, %v4365, 0
      %v4463 = vsel %vm269, %v4374, 0
      %v4466 = vsel %vm269, %v4383, 0
      %v4469 = vsel %vm269, %v4392, 0
      %v4472 = vsel %vm269, %v4401, 0
      %v4475 = vsel %vm269, %v4410, 0
      %v4478 = vsel %vm269, %v4419, 0
      %v4481 = vsel %vm269, %v4428, 0
      %v4484 = vsel %vm523, %v4164, 0
      %4486 = vmatprep.subr.bf16.mxu0 0
      %4487 = vmatpush1.bf16.msra.mxu0 %v4484
      %4488 = vmatprep.subr.bf16.mxu0 0
      %4489 = vmatpush1.bf16.msra.mxu0 0
      %4490 = vmatprep.subr.bf16.mxu0 0
      %4491 = vmatpush1.bf16.msra.mxu0 0
      %4492 = vmatprep.subr.bf16.mxu0 0
      %4493 = vmatpush1.bf16.msra.mxu0 0
      %4494 = vmatprep.subr.bf16.mxu0 0
      %4495 = vmatpush1.bf16.msra.mxu0 0
      %4496 = vmatprep.subr.bf16.mxu0 0
      %4497 = vmatpush1.bf16.msra.mxu0 0
      %4498 = vmatprep.subr.bf16.mxu0 0
      %4499 = vmatpush1.bf16.msra.mxu0 0
      %4500 = vmatprep.subr.bf16.mxu0 0
      %4501 = vmatpush1.bf16.msra.mxu0 0
      %4502 = vmatprep.subr.bf16.mxu0 0
      %4503 = vmatpush1.bf16.msra.mxu0 0
      %4504 = vmatprep.subr.bf16.mxu0 0
      %4505 = vmatpush1.bf16.msra.mxu0 0
      %4506 = vmatprep.subr.bf16.mxu0 0
      %4507 = vmatpush1.bf16.msra.mxu0 0
      %4508 = vmatprep.subr.bf16.mxu0 0
      %4509 = vmatpush1.bf16.msra.mxu0 0
      %4510 = vmatprep.subr.bf16.mxu0 0
      %4511 = vmatpush1.bf16.msra.mxu0 0
      %4512 = vmatprep.subr.bf16.mxu0 0
      %4513 = vmatpush1.bf16.msra.mxu0 0
      %4514 = vmatprep.subr.bf16.mxu0 0
      %4515 = vmatpush1.bf16.msra.mxu0 0
      %4516 = vmatprep.subr.bf16.mxu0 0
      %4517 = vmatpush1.bf16.msra.mxu0 0
      %4518 = vmatprep.mubr.bf16.mxu0 0
      %4519 = vmatmul.mubr.bf16.gmra.mrb[0].mxu0 %v4430
      %v4520 = vpop.f32.mrb[0].mxu0
      %v4521 = vadd.f32 0.0, %v4520
      %v4522 = vpop.f32.mrb[0].mxu0
      %v4523 = vpop.f32.mrb[0].mxu0
      %v4524 = vadd.f32 0.0, %v4523
      %v4525 = vpop.f32.mrb[0].mxu0
      %4526 = vmatprep.mubr.bf16.mxu0 0
      %4527 = vmatmul.mubr.bf16.gmra.mrb[0].mxu0 %v4433
      %v4528 = vpop.f32.mrb[0].mxu0
      %v4529 = vadd.f32 0.0, %v4528
      %v4530 = vpop.f32.mrb[0].mxu0
      %v4531 = vpop.f32.mrb[0].mxu0
      %v4532 = vadd.f32 0.0, %v4531
      %v4533 = vpop.f32.mrb[0].mxu0
      %4534 = vmatprep.mubr.bf16.mxu0 0
      %4535 = vmatmul.mubr.bf16.gmra.mrb[0].mxu0 %v4436
      %v4536 = vpop.f32.mrb[0].mxu0
      %v4537 = vadd.f32 0.0, %v4536
      %v4538 = vpop.f32.mrb[0].mxu0
      %v4539 = vpop.f32.mrb[0].mxu0
      %v4540 = vadd.f32 0.0, %v4539
      %v4541 = vpop.f32.mrb[0].mxu0
      %4542 = vmatprep.mubr.bf16.mxu0 0
      %4543 = vmatmul.mubr.bf16.gmra.mrb[0].mxu0 %v4439
      %v4544 = vpop.f32.mrb[0].mxu0
      %v4545 = vadd.f32 0.0, %v4544
      %v4546 = vpop.f32.mrb[0].mxu0
      %v4547 = vpop.f32.mrb[0].mxu0
      %v4548 = vadd.f32 0.0, %v4547
      %v4549 = vpop.f32.mrb[0].mxu0
      %4550 = vmatprep.mubr.bf16.mxu0 0
      %4551 = vmatmul.mubr.bf16.gmra.mrb[0].mxu0 %v4442
      %v4552 = vpop.f32.mrb[0].mxu0
      %v4553 = vadd.f32 0.0, %v4552
      %v4554 = vpop.f32.mrb[0].mxu0
      %v4555 = vpop.f32.mrb[0].mxu0
      %v4556 = vadd.f32 0.0, %v4555
      %v4557 = vpop.f32.mrb[0].mxu0
      %4558 = vmatprep.mubr.bf16.mxu0 0
      %4559 = vmatmul.mubr.bf16.gmra.mrb[0].mxu0 %v4445
      %v4560 = vpop.f32.mrb[0].mxu0
      %v4561 = vadd.f32 0.0, %v4560
      %v4562 = vpop.f32.mrb[0].mxu0
      %v4563 = vpop.f32.mrb[0].mxu0
      %v4564 = vadd.f32 0.0, %v4563
      %v4565 = vpop.f32.mrb[0].mxu0
      %4566 = vmatprep.mubr.bf16.mxu0 0
      %4567 = vmatmul.mubr.bf16.gmra.mrb[0].mxu0 %v4448
      %v4568 = vpop.f32.mrb[0].mxu0
      %v4569 = vadd.f32 0.0, %v4568
      %v4570 = vpop.f32.mrb[0].mxu0
      %v4571 = vpop.f32.mrb[0].mxu0
      %v4572 = vadd.f32 0.0, %v4571
      %v4573 = vpop.f32.mrb[0].mxu0
      %4574 = vmatprep.mubr.bf16.mxu0 0
      %4575 = vmatmul.mubr.bf16.gmra.mrb[0].mxu0 %v4451
      %v4576 = vpop.f32.mrb[0].mxu0
      %v4577 = vadd.f32 0.0, %v4576
      %v4578 = vpop.f32.mrb[0].mxu0
      %v4579 = vpop.f32.mrb[0].mxu0
      %v4580 = vadd.f32 0.0, %v4579
      %v4581 = vpop.f32.mrb[0].mxu0
      %4582 = vmatprep.mubr.bf16.mxu0 0
      %4583 = vmatmul.mubr.bf16.gmra.mrb[0].mxu0 %v4454
      %v4584 = vpop.f32.mrb[0].mxu0
      %v4585 = vadd.f32 0.0, %v4584
      %v4586 = vpop.f32.mrb[0].mxu0
      %v4587 = vpop.f32.mrb[0].mxu0
      %v4588 = vadd.f32 0.0, %v4587
      %v4589 = vpop.f32.mrb[0].mxu0
      %4590 = vmatprep.mubr.bf16.mxu0 0
      %4591 = vmatmul.mubr.bf16.gmra.mrb[0].mxu0 %v4457
      %v4592 = vpop.f32.mrb[0].mxu0
      %v4593 = vadd.f32 0.0, %v4592
      %v4594 = vpop.f32.mrb[0].mxu0
      %v4595 = vpop.f32.mrb[0].mxu0
      %v4596 = vadd.f32 0.0, %v4595
      %v4597 = vpop.f32.mrb[0].mxu0
      %4598 = vmatprep.mubr.bf16.mxu0 0
      %4599 = vmatmul.mubr.bf16.gmra.mrb[0].mxu0 %v4460
      %v4600 = vpop.f32.mrb[0].mxu0
      %v4601 = vadd.f32 0.0, %v4600
      %v4602 = vpop.f32.mrb[0].mxu0
      %v4603 = vpop.f32.mrb[0].mxu0
      %v4604 = vadd.f32 0.0, %v4603
      %v4605 = vpop.f32.mrb[0].mxu0
      %4606 = vmatprep.mubr.bf16.mxu0 0
      %4607 = vmatmul.mubr.bf16.gmra.mrb[0].mxu0 %v4463
      %v4608 = vpop.f32.mrb[0].mxu0
      %v4609 = vadd.f32 0.0, %v4608
      %v4610 = vpop.f32.mrb[0].mxu0
      %v4611 = vpop.f32.mrb[0].mxu0
      %v4612 = vadd.f32 0.0, %v4611
      %v4613 = vpop.f32.mrb[0].mxu0
      %4614 = vmatprep.mubr.bf16.mxu0 0
      %4615 = vmatmul.mubr.bf16.gmra.mrb[0].mxu0 %v4466
      %v4616 = vpop.f32.mrb[0].mxu0
      %v4617 = vadd.f32 0.0, %v4616
      %v4618 = vpop.f32.mrb[0].mxu0
      %v4619 = vpop.f32.mrb[0].mxu0
      %v4620 = vadd.f32 0.0, %v4619
      %v4621 = vpop.f32.mrb[0].mxu0
      %4622 = vmatprep.mubr.bf16.mxu0 0
      %4623 = vmatmul.mubr.bf16.gmra.mrb[0].mxu0 %v4469
      %v4624 = vpop.f32.mrb[0].mxu0
      %v4625 = vadd.f32 0.0, %v4624
      %v4626 = vpop.f32.mrb[0].mxu0
      %v4627 = vpop.f32.mrb[0].mxu0
      %v4628 = vadd.f32 0.0, %v4627
      %v4629 = vpop.f32.mrb[0].mxu0
      %4630 = vmatprep.mubr.bf16.mxu0 0
      %4631 = vmatmul.mubr.bf16.gmra.mrb[0].mxu0 %v4472
      %v4632 = vpop.f32.mrb[0].mxu0
      %v4633 = vadd.f32 0.0, %v4632
      %v4634 = vpop.f32.mrb[0].mxu0
      %v4635 = vpop.f32.mrb[0].mxu0
      %v4636 = vadd.f32 0.0, %v4635
      %v4637 = vpop.f32.mrb[0].mxu0
      %4638 = vmatprep.mubr.bf16.mxu0 0
      %4639 = vmatmul.mubr.bf16.gmra.mrb[0].mxu0 %v4475
      %v4640 = vpop.f32.mrb[0].mxu0
      %v4641 = vadd.f32 0.0, %v4640
      %v4642 = vpop.f32.mrb[0].mxu0
      %v4643 = vpop.f32.mrb[0].mxu0
      %v4644 = vadd.f32 0.0, %v4643
      %v4645 = vpop.f32.mrb[0].mxu0
      %4646 = vmatprep.mubr.bf16.mxu0 0
      %4647 = vmatmul.mubr.bf16.gmra.mrb[0].mxu0 %v4478
      %v4648 = vpop.f32.mrb[0].mxu0
      %v4649 = vadd.f32 0.0, %v4648
      %v4650 = vpop.f32.mrb[0].mxu0
      %v4651 = vpop.f32.mrb[0].mxu0
      %v4652 = vadd.f32 0.0, %v4651
      %v4653 = vpop.f32.mrb[0].mxu0
      %4654 = vmatprep.mubr.bf16.mxu0 0
      %4655 = vmatmul.mubr.bf16.gmra.mrb[0].mxu0 %v4481
      %v4656 = vpop.f32.mrb[0].mxu0
      %v4657 = vadd.f32 0.0, %v4656
      %v4658 = vpop.f32.mrb[0].mxu0
      %v4659 = vpop.f32.mrb[0].mxu0
      %v4660 = vadd.f32 0.0, %v4659
      %v4661 = vpop.f32.mrb[0].mxu0
      %4662 = vdwg.mxu0
      %v4663 = vadd.f32 %v4090, %v4521
      %v4664 = vadd.f32 %v4091, %v4524
      %v4665 = vadd.f32 %v4092, %v4529
      %v4666 = vadd.f32 %v4093, %v4532
      %v4667 = vadd.f32 %v4094, %v4537
      %v4668 = vadd.f32 %v4095, %v4540
      %v4669 = vadd.f32 %v4096, %v4545
      %v4670 = vadd.f32 %v4097, %v4548
      %v4671 = vadd.f32 %v4098, %v4553
      %v4672 = vadd.f32 %v4099, %v4556
      %v4673 = vadd.f32 %v4100, %v4561
      %v4674 = vadd.f32 %v4101, %v4564
      %v4675 = vadd.f32 %v4102, %v4569
      %v4676 = vadd.f32 %v4103, %v4572
      %v4677 = vadd.f32 %v4104, %v4577
      %v4678 = vadd.f32 %v4105, %v4580
      %v4679 = vadd.f32 %v4106, %v4585
      %v4680 = vadd.f32 %v4107, %v4588
      %v4681 = vadd.f32 %v4108, %v4593
      %v4682 = vadd.f32 %v4109, %v4596
      %v4683 = vadd.f32 %v4110, %v4601
      %v4684 = vadd.f32 %v4111, %v4604
      %v4685 = vadd.f32 %v4112, %v4609
      %v4686 = vadd.f32 %v4113, %v4612
      %v4687 = vadd.f32 %v4114, %v4617
      %v4688 = vadd.f32 %v4115, %v4620
      %v4689 = vadd.f32 %v4116, %v4625
      %v4690 = vadd.f32 %v4117, %v4628
      %v4691 = vadd.f32 %v4118, %v4633
      %v4692 = vadd.f32 %v4119, %v4636
      %v4693 = vadd.f32 %v4120, %v4641
      %v4694 = vadd.f32 %v4121, %v4644
      %v4695 = vadd.f32 %v4122, %v4649
      %v4696 = vadd.f32 %v4123, %v4652
      %v4697 = vadd.f32 %v4124, %v4657
      %v4698 = vadd.f32 %v4125, %v4660
      %4699 = vst.msk [vmem:[#allocation2] sm:$0xff] %vm269, %v4663
      %4700 = vst.msk [vmem:[#allocation2 + $0x8] sm:$0xff] %vm269, %v4664
      %4701 = vst.msk [vmem:[#allocation2 + $0x10] sm:$0xff] %vm269, %v4665
      %4702 = vst.msk [vmem:[#allocation2 + $0x18] sm:$0xff] %vm269, %v4666
      %4703 = vst.msk [vmem:[#allocation2 + $0x20] sm:$0xff] %vm269, %v4667
      %4704 = vst.msk [vmem:[#allocation2 + $0x28] sm:$0xff] %vm269, %v4668
      %4705 = vst.msk [vmem:[#allocation2 + $0x30] sm:$0xff] %vm269, %v4669
      %4706 = vst.msk [vmem:[#allocation2 + $0x38] sm:$0xff] %vm269, %v4670
      %4707 = vst.msk [vmem:[#allocation2 + $0x40] sm:$0xff] %vm269, %v4671
      %4708 = vst.msk [vmem:[#allocation2 + $0x48] sm:$0xff] %vm269, %v4672
      %4709 = vst.msk [vmem:[#allocation2 + $0x50] sm:$0xff] %vm269, %v4673
      %4710 = vst.msk [vmem:[#allocation2 + $0x58] sm:$0xff] %vm269, %v4674
      %4711 = vst.msk [vmem:[#allocation2 + $0x60] sm:$0xff] %vm269, %v4675
      %4712 = vst.msk [vmem:[#allocation2 + $0x68] sm:$0xff] %vm269, %v4676
      %4713 = vst.msk [vmem:[#allocation2 + $0x70] sm:$0xff] %vm269, %v4677
      %4714 = vst.msk [vmem:[#allocation2 + $0x78] sm:$0xff] %vm269, %v4678
      %4715 = vst.msk [vmem:[#allocation2 + $0x80] sm:$0xff] %vm269, %v4679
      %4716 = vst.msk [vmem:[#allocation2 + $0x88] sm:$0xff] %vm269, %v4680
      %4717 = vst.msk [vmem:[#allocation2 + $0x90] sm:$0xff] %vm269, %v4681
      %4718 = vst.msk [vmem:[#allocation2 + $0x98] sm:$0xff] %vm269, %v4682
      %4719 = vst.msk [vmem:[#allocation2 + $0xa0] sm:$0xff] %vm269, %v4683
      %4720 = vst.msk [vmem:[#allocation2 + $0xa8] sm:$0xff] %vm269, %v4684
      %4721 = vst.msk [vmem:[#allocation2 + $0xb0] sm:$0xff] %vm269, %v4685
      %4722 = vst.msk [vmem:[#allocation2 + $0xb8] sm:$0xff] %vm269, %v4686
      %4723 = vst.msk [vmem:[#allocation2 + $0xc0] sm:$0xff] %vm269, %v4687
      %4724 = vst.msk [vmem:[#allocation2 + $0xc8] sm:$0xff] %vm269, %v4688
      %4725 = vst.msk [vmem:[#allocation2 + $0xd0] sm:$0xff] %vm269, %v4689
      %4726 = vst.msk [vmem:[#allocation2 + $0xd8] sm:$0xff] %vm269, %v4690
      %4727 = vst.msk [vmem:[#allocation2 + $0xe0] sm:$0xff] %vm269, %v4691
      %4728 = vst.msk [vmem:[#allocation2 + $0xe8] sm:$0xff] %vm269, %v4692
      %4729 = vst.msk [vmem:[#allocation2 + $0xf0] sm:$0xff] %vm269, %v4693
      %4730 = vst.msk [vmem:[#allocation2 + $0xf8] sm:$0xff] %vm269, %v4694
      %4731 = vst.msk [vmem:[#allocation2 + $0x100] sm:$0xff] %vm269, %v4695
      %4732 = vst.msk [vmem:[#allocation2 + $0x108] sm:$0xff] %vm269, %v4696
      %4733 = vst.msk [vmem:[#allocation2 + $0x110] sm:$0xff] %vm269, %v4697
      %4734 = vst.msk [vmem:[#allocation2 + $0x118] sm:$0xff] %vm269, %v4698
      %v4735 = vld [vmem:[#allocation2] sm:$0xff]
      %v4736 = vld [vmem:[#allocation2 + $0x8] sm:$0xff]
      %v4737 = vld [vmem:[#allocation2 + $0x10] sm:$0xff]
      %v4738 = vld [vmem:[#allocation2 + $0x18] sm:$0xff]
      %v4739 = vld [vmem:[#allocation2 + $0x20] sm:$0xff]
      %v4740 = vld [vmem:[#allocation2 + $0x28] sm:$0xff]
      %v4741 = vld [vmem:[#allocation2 + $0x30] sm:$0xff]
      %v4742 = vld [vmem:[#allocation2 + $0x38] sm:$0xff]
      %v4743 = vld [vmem:[#allocation2 + $0x40] sm:$0xff]
      %v4744 = vld [vmem:[#allocation2 + $0x48] sm:$0xff]
      %v4745 = vld [vmem:[#allocation2 + $0x50] sm:$0xff]
      %v4746 = vld [vmem:[#allocation2 + $0x58] sm:$0xff]
      %v4747 = vld [vmem:[#allocation2 + $0x60] sm:$0xff]
      %v4748 = vld [vmem:[#allocation2 + $0x68] sm:$0xff]
      %v4749 = vld [vmem:[#allocation2 + $0x70] sm:$0xff]
      %v4750 = vld [vmem:[#allocation2 + $0x78] sm:$0xff]
      %v4751 = vld [vmem:[#allocation2 + $0x80] sm:$0xff]
      %v4752 = vld [vmem:[#allocation2 + $0x88] sm:$0xff]
      %v4753 = vld [vmem:[#allocation2 + $0x90] sm:$0xff]
      %v4754 = vld [vmem:[#allocation2 + $0x98] sm:$0xff]
      %v4755 = vld [vmem:[#allocation2 + $0xa0] sm:$0xff]
      %v4756 = vld [vmem:[#allocation2 + $0xa8] sm:$0xff]
      %v4757 = vld [vmem:[#allocation2 + $0xb0] sm:$0xff]
      %v4758 = vld [vmem:[#allocation2 + $0xb8] sm:$0xff]
      %v4759 = vld [vmem:[#allocation2 + $0xc0] sm:$0xff]
      %v4760 = vld [vmem:[#allocation2 + $0xc8] sm:$0xff]
      %v4761 = vld [vmem:[#allocation2 + $0xd0] sm:$0xff]
      %v4762 = vld [vmem:[#allocation2 + $0xd8] sm:$0xff]
      %v4763 = vld [vmem:[#allocation2 + $0xe0] sm:$0xff]
      %v4764 = vld [vmem:[#allocation2 + $0xe8] sm:$0xff]
      %v4765 = vld [vmem:[#allocation2 + $0xf0] sm:$0xff]
      %v4766 = vld [vmem:[#allocation2 + $0xf8] sm:$0xff]
      %v4767 = vld [vmem:[#allocation2 + $0x100] sm:$0xff]
      %v4768 = vld [vmem:[#allocation2 + $0x108] sm:$0xff]
      %v4769 = vld [vmem:[#allocation2 + $0x110] sm:$0xff]
      %v4770 = vld [vmem:[#allocation2 + $0x118] sm:$0xff]
      %v4771 = vld [vmem:[%s251 + $0x10] sm:$0x8]
      %v4772 = vld [vmem:[%s251 + $0x14] sm:$0xf]
      %v4773 = vld [vmem:[%s251 + $0x18] sm:$0xf]
      %v4774 = vld [vmem:[%s251 + $0x1c] sm:$0xf]
      %v4775 = vld [vmem:[%s251 + $0x20] sm:$0xf]
      %v4776 = vld [vmem:[%s251 + $0x24] sm:$0xf]
      %v4777 = vld [vmem:[%s251 + $0x28] sm:$0xf]
      %v4778 = vld [vmem:[%s251 + $0x2c] sm:$0xf]
      %v4779 = vld [vmem:[%s251 + $0x30] sm:$0xf]
      %v4780 = vld [vmem:[%s251 + $0x34] sm:$0xf]
      %v4781 = vld [vmem:[%s251 + $0x38] sm:$0xf]
      %v4782 = vld [vmem:[%s251 + $0x3c] sm:$0xf]
      %v4783 = vld [vmem:[%s251 + $0x40] sm:$0xf]
      %v4784 = vld [vmem:[%s251 + $0x44] sm:$0xf]
      %v4785 = vld [vmem:[%s251 + $0x48] sm:$0xf]
      %v4786 = vld [vmem:[%s251 + $0x4c] sm:$0xf]
      %v4787 = vld [vmem:[%s251 + $0x50] sm:$0xf]
      %v4788 = vld [vmem:[%s251 + $0x54] sm:$0xf]
      %v4789 = vld [vmem:[%s251 + $0x58] sm:$0xf]
      %v4790 = vld [vmem:[%s251 + $0x5c] sm:$0xf]
      %v4791 = vld [vmem:[%s251 + $0x60] sm:$0xf]
      %v4792 = vld [vmem:[%s251 + $0x64] sm:$0xf]
      %v4793 = vld [vmem:[%s251 + $0x68] sm:$0xf]
      %v4794 = vld [vmem:[%s251 + $0x6c] sm:$0xf]
      %v4795 = vld [vmem:[%s251 + $0x70] sm:$0xf]
      %v4796 = vld [vmem:[%s251 + $0x74] sm:$0xf]
      %v4797 = vld [vmem:[%s251 + $0x78] sm:$0xf]
      %v4798 = vld [vmem:[%s251 + $0x7c] sm:$0xf]
      %v4799 = vld [vmem:[%s251 + $0x80] sm:$0xf]
      %v4800 = vld [vmem:[%s251 + $0x84] sm:$0xf]
      %v4801 = vld [vmem:[%s251 + $0x88] sm:$0xf]
      %v4802 = vld [vmem:[%s251 + $0x8c] sm:$0xf]
      %v4803 = vld [vmem:[%s251 + $0x90] sm:$0xf]
      %v4804 = vld [vmem:[%s251 + $0x94] sm:$0xf]
      %v4805 = vld [vmem:[%s251 + $0x98] sm:$0xf]
      %v4806 = vld [vmem:[%s251 + $0x9c] sm:$0xf]
      %v4807 = vld [vmem:[%s251 + $0xa0] sm:$0x7]
      %s4808 = scalar_lea.vmem %s1, 16
      %v4809 = vld [vmem:[%s4808] sm:$0x3]
      %v4847 = vunpack.c.l.b16 %v4771
      %v4848 = vunpack.c.l.b16 %v4772
      %v4849 = vunpack.c.l.b16 %v4773
      %v4850 = vunpack.c.l.b16 %v4774
      %v4851 = vunpack.c.l.b16 %v4775
      %v4852 = vunpack.c.l.b16 %v4776
      %v4853 = vunpack.c.l.b16 %v4777
      %v4854 = vunpack.c.l.b16 %v4778
      %v4855 = vunpack.c.l.b16 %v4779
      %v4856 = vunpack.c.l.b16 %v4780
      %v4857 = vunpack.c.l.b16 %v4781
      %v4858 = vunpack.c.l.b16 %v4782
      %v4859 = vunpack.c.l.b16 %v4783
      %v4860 = vunpack.c.l.b16 %v4784
      %v4861 = vunpack.c.l.b16 %v4785
      %v4862 = vunpack.c.l.b16 %v4786
      %v4863 = vunpack.c.l.b16 %v4787
      %v4864 = vunpack.c.l.b16 %v4788
      %v4865 = vunpack.c.l.b16 %v4789
      %v4866 = vunpack.c.l.b16 %v4790
      %v4867 = vunpack.c.l.b16 %v4791
      %v4868 = vunpack.c.l.b16 %v4792
      %v4869 = vunpack.c.l.b16 %v4793
      %v4870 = vunpack.c.l.b16 %v4794
      %v4871 = vunpack.c.l.b16 %v4795
      %v4872 = vunpack.c.l.b16 %v4796
      %v4873 = vunpack.c.l.b16 %v4797
      %v4874 = vunpack.c.l.b16 %v4798
      %v4875 = vunpack.c.l.b16 %v4799
      %v4876 = vunpack.c.l.b16 %v4800
      %v4877 = vunpack.c.l.b16 %v4801
      %v4878 = vunpack.c.l.b16 %v4802
      %v4879 = vunpack.c.l.b16 %v4803
      %v4880 = vunpack.c.l.b16 %v4804
      %v4881 = vunpack.c.l.b16 %v4805
      %v4882 = vunpack.c.l.b16 %v4806
      %v4883 = vunpack.c.l.b16 %v4807
      %v4884 = vpack.c.b16 %v4848, %v4847
      %v4885 = vpack.c.b16 %v4850, %v4849
      %v4886 = vpack.c.b16 %v4852, %v4851
      %v4887 = vpack.c.b16 %v4854, %v4853
      %v4888 = vpack.c.b16 %v4856, %v4855
      %v4889 = vpack.c.b16 %v4858, %v4857
      %v4890 = vpack.c.b16 %v4860, %v4859
      %v4891 = vpack.c.b16 %v4862, %v4861
      %v4892 = vpack.c.b16 %v4864, %v4863
      %v4893 = vpack.c.b16 %v4866, %v4865
      %v4894 = vpack.c.b16 %v4868, %v4867
      %v4895 = vpack.c.b16 %v4870, %v4869
      %v4896 = vpack.c.b16 %v4872, %v4871
      %v4897 = vpack.c.b16 %v4874, %v4873
      %v4898 = vpack.c.b16 %v4876, %v4875
      %v4899 = vpack.c.b16 %v4878, %v4877
      %v4900 = vpack.c.b16 %v4880, %v4879
      %v4901 = vpack.c.b16 %v4882, %v4881
      %v4902 = vpack.c.b16 %v4883, %v4883
      %vm4903 = vcmask 1044480
      %v4904 = vrot.slane %v4884, 3
      %v4905 = vrot.slane %v4885, 3
      %v4906 = vsel %vm4903, %v4904, %v4905
      %v4907 = vrot.slane %v4886, 3
      %v4908 = vsel %vm4903, %v4905, %v4907
      %v4909 = vrot.slane %v4887, 3
      %v4910 = vsel %vm4903, %v4907, %v4909
      %v4911 = vrot.slane %v4888, 3
      %v4912 = vsel %vm4903, %v4909, %v4911
      %v4913 = vrot.slane %v4889, 3
      %v4914 = vsel %vm4903, %v4911, %v4913
      %v4915 = vrot.slane %v4890, 3
      %v4916 = vsel %vm4903, %v4913, %v4915
      %v4917 = vrot.slane %v4891, 3
      %v4918 = vsel %vm4903, %v4915, %v4917
      %v4919 = vrot.slane %v4892, 3
      %v4920 = vsel %vm4903, %v4917, %v4919
      %v4921 = vrot.slane %v4893, 3
      %v4922 = vsel %vm4903, %v4919, %v4921
      %v4923 = vrot.slane %v4894, 3
      %v4924 = vsel %vm4903, %v4921, %v4923
      %v4925 = vrot.slane %v4895, 3
      %v4926 = vsel %vm4903, %v4923, %v4925
      %v4927 = vrot.slane %v4896, 3
      %v4928 = vsel %vm4903, %v4925, %v4927
      %v4929 = vrot.slane %v4897, 3
      %v4930 = vsel %vm4903, %v4927, %v4929
      %v4931 = vrot.slane %v4898, 3
      %v4932 = vsel %vm4903, %v4929, %v4931
      %v4933 = vrot.slane %v4899, 3
      %v4934 = vsel %vm4903, %v4931, %v4933
      %v4935 = vrot.slane %v4900, 3
      %v4936 = vsel %vm4903, %v4933, %v4935
      %v4937 = vrot.slane %v4901, 3
      %v4938 = vsel %vm4903, %v4935, %v4937
      %v4939 = vrot.slane %v4902, 3
      %v4940 = vsel %vm4903, %v4937, %v4939
      %v4942 = vsel %vm269, %v4906, 0
      %v4945 = vsel %vm269, %v4908, 0
      %v4948 = vsel %vm269, %v4910, 0
      %v4951 = vsel %vm269, %v4912, 0
      %v4954 = vsel %vm269, %v4914, 0
      %v4957 = vsel %vm269, %v4916, 0
      %v4960 = vsel %vm269, %v4918, 0
      %v4963 = vsel %vm269, %v4920, 0
      %v4966 = vsel %vm269, %v4922, 0
      %v4969 = vsel %vm269, %v4924, 0
      %v4972 = vsel %vm269, %v4926, 0
      %v4975 = vsel %vm269, %v4928, 0
      %v4978 = vsel %vm269, %v4930, 0
      %v4981 = vsel %vm269, %v4932, 0
      %v4984 = vsel %vm269, %v4934, 0
      %v4987 = vsel %vm269, %v4936, 0
      %v4990 = vsel %vm269, %v4938, 0
      %v4993 = vsel %vm269, %v4940, 0
      %v4996 = vsel %vm523, %v4809, 0
      %4998 = vmatprep.subr.bf16.mxu0 0
      %4999 = vmatpush1.bf16.msra.mxu0 %v4996
      %5000 = vmatprep.subr.bf16.mxu0 0
      %5001 = vmatpush1.bf16.msra.mxu0 0
      %5002 = vmatprep.subr.bf16.mxu0 0
      %5003 = vmatpush1.bf16.msra.mxu0 0
      %5004 = vmatprep.subr.bf16.mxu0 0
      %5005 = vmatpush1.bf16.msra.mxu0 0
      %5006 = vmatprep.subr.bf16.mxu0 0
      %5007 = vmatpush1.bf16.msra.mxu0 0
      %5008 = vmatprep.subr.bf16.mxu0 0
      %5009 = vmatpush1.bf16.msra.mxu0 0
      %5010 = vmatprep.subr.bf16.mxu0 0
      %5011 = vmatpush1.bf16.msra.mxu0 0
      %5012 = vmatprep.subr.bf16.mxu0 0
      %5013 = vmatpush1.bf16.msra.mxu0 0
      %5014 = vmatprep.subr.bf16.mxu0 0
      %5015 = vmatpush1.bf16.msra.mxu0 0
      %5016 = vmatprep.subr.bf16.mxu0 0
      %5017 = vmatpush1.bf16.msra.mxu0 0
      %5018 = vmatprep.subr.bf16.mxu0 0
      %5019 = vmatpush1.bf16.msra.mxu0 0
      %5020 = vmatprep.subr.bf16.mxu0 0
      %5021 = vmatpush1.bf16.msra.mxu0 0
      %5022 = vmatprep.subr.bf16.mxu0 0
      %5023 = vmatpush1.bf16.msra.mxu0 0
      %5024 = vmatprep.subr.bf16.mxu0 0
      %5025 = vmatpush1.bf16.msra.mxu0 0
      %5026 = vmatprep.subr.bf16.mxu0 0
      %5027 = vmatpush1.bf16.msra.mxu0 0
      %5028 = vmatprep.subr.bf16.mxu0 0
      %5029 = vmatpush1.bf16.msra.mxu0 0
      %5030 = vmatprep.mubr.bf16.mxu0 0
      %5031 = vmatmul.mubr.bf16.gmra.mrb[0].mxu0 %v4942
      %v5032 = vpop.f32.mrb[0].mxu0
      %v5033 = vadd.f32 0.0, %v5032
      %v5034 = vpop.f32.mrb[0].mxu0
      %v5035 = vpop.f32.mrb[0].mxu0
      %v5036 = vadd.f32 0.0, %v5035
      %v5037 = vpop.f32.mrb[0].mxu0
      %5038 = vmatprep.mubr.bf16.mxu0 0
      %5039 = vmatmul.mubr.bf16.gmra.mrb[0].mxu0 %v4945
      %v5040 = vpop.f32.mrb[0].mxu0
      %v5041 = vadd.f32 0.0, %v5040
      %v5042 = vpop.f32.mrb[0].mxu0
      %v5043 = vpop.f32.mrb[0].mxu0
      %v5044 = vadd.f32 0.0, %v5043
      %v5045 = vpop.f32.mrb[0].mxu0
      %5046 = vmatprep.mubr.bf16.mxu0 0
      %5047 = vmatmul.mubr.bf16.gmra.mrb[0].mxu0 %v4948
      %v5048 = vpop.f32.mrb[0].mxu0
      %v5049 = vadd.f32 0.0, %v5048
      %v5050 = vpop.f32.mrb[0].mxu0
      %v5051 = vpop.f32.mrb[0].mxu0
      %v5052 = vadd.f32 0.0, %v5051
      %v5053 = vpop.f32.mrb[0].mxu0
      %5054 = vmatprep.mubr.bf16.mxu0 0
      %5055 = vmatmul.mubr.bf16.gmra.mrb[0].mxu0 %v4951
      %v5056 = vpop.f32.mrb[0].mxu0
      %v5057 = vadd.f32 0.0, %v5056
      %v5058 = vpop.f32.mrb[0].mxu0
      %v5059 = vpop.f32.mrb[0].mxu0
      %v5060 = vadd.f32 0.0, %v5059
      %v5061 = vpop.f32.mrb[0].mxu0
      %5062 = vmatprep.mubr.bf16.mxu0 0
      %5063 = vmatmul.mubr.bf16.gmra.mrb[0].mxu0 %v4954
      %v5064 = vpop.f32.mrb[0].mxu0
      %v5065 = vadd.f32 0.0, %v5064
      %v5066 = vpop.f32.mrb[0].mxu0
      %v5067 = vpop.f32.mrb[0].mxu0
      %v5068 = vadd.f32 0.0, %v5067
      %v5069 = vpop.f32.mrb[0].mxu0
      %5070 = vmatprep.mubr.bf16.mxu0 0
      %5071 = vmatmul.mubr.bf16.gmra.mrb[0].mxu0 %v4957
      %v5072 = vpop.f32.mrb[0].mxu0
      %v5073 = vadd.f32 0.0, %v5072
      %v5074 = vpop.f32.mrb[0].mxu0
      %v5075 = vpop.f32.mrb[0].mxu0
      %v5076 = vadd.f32 0.0, %v5075
      %v5077 = vpop.f32.mrb[0].mxu0
      %5078 = vmatprep.mubr.bf16.mxu0 0
      %5079 = vmatmul.mubr.bf16.gmra.mrb[0].mxu0 %v4960
      %v5080 = vpop.f32.mrb[0].mxu0
      %v5081 = vadd.f32 0.0, %v5080
      %v5082 = vpop.f32.mrb[0].mxu0
      %v5083 = vpop.f32.mrb[0].mxu0
      %v5084 = vadd.f32 0.0, %v5083
      %v5085 = vpop.f32.mrb[0].mxu0
      %5086 = vmatprep.mubr.bf16.mxu0 0
      %5087 = vmatmul.mubr.bf16.gmra.mrb[0].mxu0 %v4963
      %v5088 = vpop.f32.mrb[0].mxu0
      %v5089 = vadd.f32 0.0, %v5088
      %v5090 = vpop.f32.mrb[0].mxu0
      %v5091 = vpop.f32.mrb[0].mxu0
      %v5092 = vadd.f32 0.0, %v5091
      %v5093 = vpop.f32.mrb[0].mxu0
      %5094 = vmatprep.mubr.bf16.mxu0 0
      %5095 = vmatmul.mubr.bf16.gmra.mrb[0].mxu0 %v4966
      %v5096 = vpop.f32.mrb[0].mxu0
      %v5097 = vadd.f32 0.0, %v5096
      %v5098 = vpop.f32.mrb[0].mxu0
      %v5099 = vpop.f32.mrb[0].mxu0
      %v5100 = vadd.f32 0.0, %v5099
      %v5101 = vpop.f32.mrb[0].mxu0
      %5102 = vmatprep.mubr.bf16.mxu0 0
      %5103 = vmatmul.mubr.bf16.gmra.mrb[0].mxu0 %v4969
      %v5104 = vpop.f32.mrb[0].mxu0
      %v5105 = vadd.f32 0.0, %v5104
      %v5106 = vpop.f32.mrb[0].mxu0
      %v5107 = vpop.f32.mrb[0].mxu0
      %v5108 = vadd.f32 0.0, %v5107
      %v5109 = vpop.f32.mrb[0].mxu0
      %5110 = vmatprep.mubr.bf16.mxu0 0
      %5111 = vmatmul.mubr.bf16.gmra.mrb[0].mxu0 %v4972
      %v5112 = vpop.f32.mrb[0].mxu0
      %v5113 = vadd.f32 0.0, %v5112
      %v5114 = vpop.f32.mrb[0].mxu0
      %v5115 = vpop.f32.mrb[0].mxu0
      %v5116 = vadd.f32 0.0, %v5115
      %v5117 = vpop.f32.mrb[0].mxu0
      %5118 = vmatprep.mubr.bf16.mxu0 0
      %5119 = vmatmul.mubr.bf16.gmra.mrb[0].mxu0 %v4975
      %v5120 = vpop.f32.mrb[0].mxu0
      %v5121 = vadd.f32 0.0, %v5120
      %v5122 = vpop.f32.mrb[0].mxu0
      %v5123 = vpop.f32.mrb[0].mxu0
      %v5124 = vadd.f32 0.0, %v5123
      %v5125 = vpop.f32.mrb[0].mxu0
      %5126 = vmatprep.mubr.bf16.mxu0 0
      %5127 = vmatmul.mubr.bf16.gmra.mrb[0].mxu0 %v4978
      %v5128 = vpop.f32.mrb[0].mxu0
      %v5129 = vadd.f32 0.0, %v5128
      %v5130 = vpop.f32.mrb[0].mxu0
      %v5131 = vpop.f32.mrb[0].mxu0
      %v5132 = vadd.f32 0.0, %v5131
      %v5133 = vpop.f32.mrb[0].mxu0
      %5134 = vmatprep.mubr.bf16.mxu0 0
      %5135 = vmatmul.mubr.bf16.gmra.mrb[0].mxu0 %v4981
      %v5136 = vpop.f32.mrb[0].mxu0
      %v5137 = vadd.f32 0.0, %v5136
      %v5138 = vpop.f32.mrb[0].mxu0
      %v5139 = vpop.f32.mrb[0].mxu0
      %v5140 = vadd.f32 0.0, %v5139
      %v5141 = vpop.f32.mrb[0].mxu0
      %5142 = vmatprep.mubr.bf16.mxu0 0
      %5143 = vmatmul.mubr.bf16.gmra.mrb[0].mxu0 %v4984
      %v5144 = vpop.f32.mrb[0].mxu0
      %v5145 = vadd.f32 0.0, %v5144
      %v5146 = vpop.f32.mrb[0].mxu0
      %v5147 = vpop.f32.mrb[0].mxu0
      %v5148 = vadd.f32 0.0, %v5147
      %v5149 = vpop.f32.mrb[0].mxu0
      %5150 = vmatprep.mubr.bf16.mxu0 0
      %5151 = vmatmul.mubr.bf16.gmra.mrb[0].mxu0 %v4987
      %v5152 = vpop.f32.mrb[0].mxu0
      %v5153 = vadd.f32 0.0, %v5152
      %v5154 = vpop.f32.mrb[0].mxu0
      %v5155 = vpop.f32.mrb[0].mxu0
      %v5156 = vadd.f32 0.0, %v5155
      %v5157 = vpop.f32.mrb[0].mxu0
      %5158 = vmatprep.mubr.bf16.mxu0 0
      %5159 = vmatmul.mubr.bf16.gmra.mrb[0].mxu0 %v4990
      %v5160 = vpop.f32.mrb[0].mxu0
      %v5161 = vadd.f32 0.0, %v5160
      %v5162 = vpop.f32.mrb[0].mxu0
      %v5163 = vpop.f32.mrb[0].mxu0
      %v5164 = vadd.f32 0.0, %v5163
      %v5165 = vpop.f32.mrb[0].mxu0
      %5166 = vmatprep.mubr.bf16.mxu0 0
      %5167 = vmatmul.mubr.bf16.gmra.mrb[0].mxu0 %v4993
      %v5168 = vpop.f32.mrb[0].mxu0
      %v5169 = vadd.f32 0.0, %v5168
      %v5170 = vpop.f32.mrb[0].mxu0
      %v5171 = vpop.f32.mrb[0].mxu0
      %v5172 = vadd.f32 0.0, %v5171
      %v5173 = vpop.f32.mrb[0].mxu0
      %5174 = vdwg.mxu0
      %v5175 = vadd.f32 %v4735, %v5033
      %v5176 = vadd.f32 %v4736, %v5036
      %v5177 = vadd.f32 %v4737, %v5041
      %v5178 = vadd.f32 %v4738, %v5044
      %v5179 = vadd.f32 %v4739, %v5049
      %v5180 = vadd.f32 %v4740, %v5052
      %v5181 = vadd.f32 %v4741, %v5057
      %v5182 = vadd.f32 %v4742, %v5060
      %v5183 = vadd.f32 %v4743, %v5065
      %v5184 = vadd.f32 %v4744, %v5068
      %v5185 = vadd.f32 %v4745, %v5073
      %v5186 = vadd.f32 %v4746, %v5076
      %v5187 = vadd.f32 %v4747, %v5081
      %v5188 = vadd.f32 %v4748, %v5084
      %v5189 = vadd.f32 %v4749, %v5089
      %v5190 = vadd.f32 %v4750, %v5092
      %v5191 = vadd.f32 %v4751, %v5097
      %v5192 = vadd.f32 %v4752, %v5100
      %v5193 = vadd.f32 %v4753, %v5105
      %v5194 = vadd.f32 %v4754, %v5108
      %v5195 = vadd.f32 %v4755, %v5113
      %v5196 = vadd.f32 %v4756, %v5116
      %v5197 = vadd.f32 %v4757, %v5121
      %v5198 = vadd.f32 %v4758, %v5124
      %v5199 = vadd.f32 %v4759, %v5129
      %v5200 = vadd.f32 %v4760, %v5132
      %v5201 = vadd.f32 %v4761, %v5137
      %v5202 = vadd.f32 %v4762, %v5140
      %v5203 = vadd.f32 %v4763, %v5145
      %v5204 = vadd.f32 %v4764, %v5148
      %v5205 = vadd.f32 %v4765, %v5153
      %v5206 = vadd.f32 %v4766, %v5156
      %v5207 = vadd.f32 %v4767, %v5161
      %v5208 = vadd.f32 %v4768, %v5164
      %v5209 = vadd.f32 %v4769, %v5169
      %v5210 = vadd.f32 %v4770, %v5172
      %5211 = vst.msk [vmem:[#allocation2] sm:$0xff] %vm269, %v5175
      %5212 = vst.msk [vmem:[#allocation2 + $0x8] sm:$0xff] %vm269, %v5176
      %5213 = vst.msk [vmem:[#allocation2 + $0x10] sm:$0xff] %vm269, %v5177
      %5214 = vst.msk [vmem:[#allocation2 + $0x18] sm:$0xff] %vm269, %v5178
      %5215 = vst.msk [vmem:[#allocation2 + $0x20] sm:$0xff] %vm269, %v5179
      %5216 = vst.msk [vmem:[#allocation2 + $0x28] sm:$0xff] %vm269, %v5180
      %5217 = vst.msk [vmem:[#allocation2 + $0x30] sm:$0xff] %vm269, %v5181
      %5218 = vst.msk [vmem:[#allocation2 + $0x38] sm:$0xff] %vm269, %v5182
      %5219 = vst.msk [vmem:[#allocation2 + $0x40] sm:$0xff] %vm269, %v5183
      %5220 = vst.msk [vmem:[#allocation2 + $0x48] sm:$0xff] %vm269, %v5184
      %5221 = vst.msk [vmem:[#allocation2 + $0x50] sm:$0xff] %vm269, %v5185
      %5222 = vst.msk [vmem:[#allocation2 + $0x58] sm:$0xff] %vm269, %v5186
      %5223 = vst.msk [vmem:[#allocation2 + $0x60] sm:$0xff] %vm269, %v5187
      %5224 = vst.msk [vmem:[#allocation2 + $0x68] sm:$0xff] %vm269, %v5188
      %5225 = vst.msk [vmem:[#allocation2 + $0x70] sm:$0xff] %vm269, %v5189
      %5226 = vst.msk [vmem:[#allocation2 + $0x78] sm:$0xff] %vm269, %v5190
      %5227 = vst.msk [vmem:[#allocation2 + $0x80] sm:$0xff] %vm269, %v5191
      %5228 = vst.msk [vmem:[#allocation2 + $0x88] sm:$0xff] %vm269, %v5192
      %5229 = vst.msk [vmem:[#allocation2 + $0x90] sm:$0xff] %vm269, %v5193
      %5230 = vst.msk [vmem:[#allocation2 + $0x98] sm:$0xff] %vm269, %v5194
      %5231 = vst.msk [vmem:[#allocation2 + $0xa0] sm:$0xff] %vm269, %v5195
      %5232 = vst.msk [vmem:[#allocation2 + $0xa8] sm:$0xff] %vm269, %v5196
      %5233 = vst.msk [vmem:[#allocation2 + $0xb0] sm:$0xff] %vm269, %v5197
      %5234 = vst.msk [vmem:[#allocation2 + $0xb8] sm:$0xff] %vm269, %v5198
      %5235 = vst.msk [vmem:[#allocation2 + $0xc0] sm:$0xff] %vm269, %v5199
      %5236 = vst.msk [vmem:[#allocation2 + $0xc8] sm:$0xff] %vm269, %v5200
      %5237 = vst.msk [vmem:[#allocation2 + $0xd0] sm:$0xff] %vm269, %v5201
      %5238 = vst.msk [vmem:[#allocation2 + $0xd8] sm:$0xff] %vm269, %v5202
      %5239 = vst.msk [vmem:[#allocation2 + $0xe0] sm:$0xff] %vm269, %v5203
      %5240 = vst.msk [vmem:[#allocation2 + $0xe8] sm:$0xff] %vm269, %v5204
      %5241 = vst.msk [vmem:[#allocation2 + $0xf0] sm:$0xff] %vm269, %v5205
      %5242 = vst.msk [vmem:[#allocation2 + $0xf8] sm:$0xff] %vm269, %v5206
      %5243 = vst.msk [vmem:[#allocation2 + $0x100] sm:$0xff] %vm269, %v5207
      %5244 = vst.msk [vmem:[#allocation2 + $0x108] sm:$0xff] %vm269, %v5208
      %5245 = vst.msk [vmem:[#allocation2 + $0x110] sm:$0xff] %vm269, %v5209
      %5246 = vst.msk [vmem:[#allocation2 + $0x118] sm:$0xff] %vm269, %v5210
      %v5247 = vld [vmem:[#allocation2] sm:$0xff]
      %v5248 = vld [vmem:[#allocation2 + $0x8] sm:$0xff]
      %v5249 = vld [vmem:[#allocation2 + $0x10] sm:$0xff]
      %v5250 = vld [vmem:[#allocation2 + $0x18] sm:$0xff]
      %v5251 = vld [vmem:[#allocation2 + $0x20] sm:$0xff]
      %v5252 = vld [vmem:[#allocation2 + $0x28] sm:$0xff]
      %v5253 = vld [vmem:[#allocation2 + $0x30] sm:$0xff]
      %v5254 = vld [vmem:[#allocation2 + $0x38] sm:$0xff]
      %v5255 = vld [vmem:[#allocation2 + $0x40] sm:$0xff]
      %v5256 = vld [vmem:[#allocation2 + $0x48] sm:$0xff]
      %v5257 = vld [vmem:[#allocation2 + $0x50] sm:$0xff]
      %v5258 = vld [vmem:[#allocation2 + $0x58] sm:$0xff]
      %v5259 = vld [vmem:[#allocation2 + $0x60] sm:$0xff]
      %v5260 = vld [vmem:[#allocation2 + $0x68] sm:$0xff]
      %v5261 = vld [vmem:[#allocation2 + $0x70] sm:$0xff]
      %v5262 = vld [vmem:[#allocation2 + $0x78] sm:$0xff]
      %v5263 = vld [vmem:[#allocation2 + $0x80] sm:$0xff]
      %v5264 = vld [vmem:[#allocation2 + $0x88] sm:$0xff]
      %v5265 = vld [vmem:[#allocation2 + $0x90] sm:$0xff]
      %v5266 = vld [vmem:[#allocation2 + $0x98] sm:$0xff]
      %v5267 = vld [vmem:[#allocation2 + $0xa0] sm:$0xff]
      %v5268 = vld [vmem:[#allocation2 + $0xa8] sm:$0xff]
      %v5269 = vld [vmem:[#allocation2 + $0xb0] sm:$0xff]
      %v5270 = vld [vmem:[#allocation2 + $0xb8] sm:$0xff]
      %v5271 = vld [vmem:[#allocation2 + $0xc0] sm:$0xff]
      %v5272 = vld [vmem:[#allocation2 + $0xc8] sm:$0xff]
      %v5273 = vld [vmem:[#allocation2 + $0xd0] sm:$0xff]
      %v5274 = vld [vmem:[#allocation2 + $0xd8] sm:$0xff]
      %v5275 = vld [vmem:[#allocation2 + $0xe0] sm:$0xff]
      %v5276 = vld [vmem:[#allocation2 + $0xe8] sm:$0xff]
      %v5277 = vld [vmem:[#allocation2 + $0xf0] sm:$0xff]
      %v5278 = vld [vmem:[#allocation2 + $0xf8] sm:$0xff]
      %v5279 = vld [vmem:[#allocation2 + $0x100] sm:$0xff]
      %v5280 = vld [vmem:[#allocation2 + $0x108] sm:$0xff]
      %v5281 = vld [vmem:[#allocation2 + $0x110] sm:$0xff]
      %v5282 = vld [vmem:[#allocation2 + $0x118] sm:$0xff]
      %v5283 = vmax.f32 %v5247, 0.0
      %v5284 = vmax.f32 %v5248, 0.0
      %v5285 = vmax.f32 %v5249, 0.0
      %v5286 = vmax.f32 %v5250, 0.0
      %v5287 = vmax.f32 %v5251, 0.0
      %v5288 = vmax.f32 %v5252, 0.0
      %v5289 = vmax.f32 %v5253, 0.0
      %v5290 = vmax.f32 %v5254, 0.0
      %v5291 = vmax.f32 %v5255, 0.0
      %v5292 = vmax.f32 %v5256, 0.0
      %v5293 = vmax.f32 %v5257, 0.0
      %v5294 = vmax.f32 %v5258, 0.0
      %v5295 = vmax.f32 %v5259, 0.0
      %v5296 = vmax.f32 %v5260, 0.0
      %v5297 = vmax.f32 %v5261, 0.0
      %v5298 = vmax.f32 %v5262, 0.0
      %v5299 = vmax.f32 %v5263, 0.0
      %v5300 = vmax.f32 %v5264, 0.0
      %v5301 = vmax.f32 %v5265, 0.0
      %v5302 = vmax.f32 %v5266, 0.0
      %v5303 = vmax.f32 %v5267, 0.0
      %v5304 = vmax.f32 %v5268, 0.0
      %v5305 = vmax.f32 %v5269, 0.0
      %v5306 = vmax.f32 %v5270, 0.0
      %v5307 = vmax.f32 %v5271, 0.0
      %v5308 = vmax.f32 %v5272, 0.0
      %v5309 = vmax.f32 %v5273, 0.0
      %v5310 = vmax.f32 %v5274, 0.0
      %v5311 = vmax.f32 %v5275, 0.0
      %v5312 = vmax.f32 %v5276, 0.0
      %v5313 = vmax.f32 %v5277, 0.0
      %v5314 = vmax.f32 %v5278, 0.0
      %v5315 = vmax.f32 %v5279, 0.0
      %v5316 = vmax.f32 %v5280, 0.0
      %v5317 = vmax.f32 %v5281, 0.0
      %v5318 = vmax.f32 %v5282, 0.0
      %v5319 = vpack.c.bf16 %v5284, %v5283
      %v5320 = vpack.c.bf16 %v5286, %v5285
      %v5321 = vpack.c.bf16 %v5288, %v5287
      %v5322 = vpack.c.bf16 %v5290, %v5289
      %v5323 = vpack.c.bf16 %v5292, %v5291
      %v5324 = vpack.c.bf16 %v5294, %v5293
      %v5325 = vpack.c.bf16 %v5296, %v5295
      %v5326 = vpack.c.bf16 %v5298, %v5297
      %v5327 = vpack.c.bf16 %v5300, %v5299
      %v5328 = vpack.c.bf16 %v5302, %v5301
      %v5329 = vpack.c.bf16 %v5304, %v5303
      %v5330 = vpack.c.bf16 %v5306, %v5305
      %v5331 = vpack.c.bf16 %v5308, %v5307
      %v5332 = vpack.c.bf16 %v5310, %v5309
      %v5333 = vpack.c.bf16 %v5312, %v5311
      %v5334 = vpack.c.bf16 %v5314, %v5313
      %v5335 = vpack.c.bf16 %v5316, %v5315
      %v5336 = vpack.c.bf16 %v5318, %v5317
      %v5337 = vld [vmem:[%s3] sm:$0x3]
      %v5338 = vld [vmem:[%s4] sm:$0x1]
      %v5340 = vlaneseq
      %v5341 = vshrl.u32 %v5340, 7
      %v5342 = vsub.s32 0, %v5341
      %v5343 = vrot.slane %v5338, %v5342
      %v5346 = vsel %vm269, %v5319, 0
      %v5349 = vsel %vm269, %v5320, 0
      %v5352 = vsel %vm269, %v5321, 0
      %v5355 = vsel %vm269, %v5322, 0
      %v5358 = vsel %vm269, %v5323, 0
      %v5361 = vsel %vm269, %v5324, 0
      %v5364 = vsel %vm269, %v5325, 0
      %v5367 = vsel %vm269, %v5326, 0
      %v5370 = vsel %vm269, %v5327, 0
      %v5373 = vsel %vm269, %v5328, 0
      %v5376 = vsel %vm269, %v5329, 0
      %v5379 = vsel %vm269, %v5330, 0
      %v5382 = vsel %vm269, %v5331, 0
      %v5385 = vsel %vm269, %v5332, 0
      %v5388 = vsel %vm269, %v5333, 0
      %v5391 = vsel %vm269, %v5334, 0
      %v5394 = vsel %vm269, %v5335, 0
      %v5397 = vsel %vm269, %v5336, 0
      %v5400 = vsel %vm523, %v5337, 0
      %5402 = vmatprep.subr.bf16.mxu0 0
      %5403 = vmatpush1.bf16.msra.mxu0 %v5400
      %5404 = vmatprep.subr.bf16.mxu0 0
      %5405 = vmatpush1.bf16.msra.mxu0 0
      %5406 = vmatprep.subr.bf16.mxu0 0
      %5407 = vmatpush1.bf16.msra.mxu0 0
      %5408 = vmatprep.subr.bf16.mxu0 0
      %5409 = vmatpush1.bf16.msra.mxu0 0
      %5410 = vmatprep.subr.bf16.mxu0 0
      %5411 = vmatpush1.bf16.msra.mxu0 0
      %5412 = vmatprep.subr.bf16.mxu0 0
      %5413 = vmatpush1.bf16.msra.mxu0 0
      %5414 = vmatprep.subr.bf16.mxu0 0
      %5415 = vmatpush1.bf16.msra.mxu0 0
      %5416 = vmatprep.subr.bf16.mxu0 0
      %5417 = vmatpush1.bf16.msra.mxu0 0
      %5418 = vmatprep.subr.bf16.mxu0 0
      %5419 = vmatpush1.bf16.msra.mxu0 0
      %5420 = vmatprep.subr.bf16.mxu0 0
      %5421 = vmatpush1.bf16.msra.mxu0 0
      %5422 = vmatprep.subr.bf16.mxu0 0
      %5423 = vmatpush1.bf16.msra.mxu0 0
      %5424 = vmatprep.subr.bf16.mxu0 0
      %5425 = vmatpush1.bf16.msra.mxu0 0
      %5426 = vmatprep.subr.bf16.mxu0 0
      %5427 = vmatpush1.bf16.msra.mxu0 0
      %5428 = vmatprep.subr.bf16.mxu0 0
      %5429 = vmatpush1.bf16.msra.mxu0 0
      %5430 = vmatprep.subr.bf16.mxu0 0
      %5431 = vmatpush1.bf16.msra.mxu0 0
      %5432 = vmatprep.subr.bf16.mxu0 0
      %5433 = vmatpush1.bf16.msra.mxu0 0
      %5434 = vmatprep.mubr.bf16.mxu0 0
      %5435 = vmatmul.mubr.bf16.gmra.mrb[0].mxu0 %v5346
      %v5436 = vpop.f32.mrb[0].mxu0
      %v5437 = vadd.f32 %v5343, %v5436
      %v5438 = vpop.f32.mrb[0].mxu0
      %v5439 = vpop.f32.mrb[0].mxu0
      %v5440 = vadd.f32 %v5343, %v5439
      %v5441 = vpop.f32.mrb[0].mxu0
      %5442 = vmatprep.mubr.bf16.mxu0 0
      %5443 = vmatmul.mubr.bf16.gmra.mrb[0].mxu0 %v5349
      %v5444 = vpop.f32.mrb[0].mxu0
      %v5445 = vadd.f32 %v5343, %v5444
      %v5446 = vpop.f32.mrb[0].mxu0
      %v5447 = vpop.f32.mrb[0].mxu0
      %v5448 = vadd.f32 %v5343, %v5447
      %v5449 = vpop.f32.mrb[0].mxu0
      %5450 = vmatprep.mubr.bf16.mxu0 0
      %5451 = vmatmul.mubr.bf16.gmra.mrb[0].mxu0 %v5352
      %v5452 = vpop.f32.mrb[0].mxu0
      %v5453 = vadd.f32 %v5343, %v5452
      %v5454 = vpop.f32.mrb[0].mxu0
      %v5455 = vpop.f32.mrb[0].mxu0
      %v5456 = vadd.f32 %v5343, %v5455
      %v5457 = vpop.f32.mrb[0].mxu0
      %5458 = vmatprep.mubr.bf16.mxu0 0
      %5459 = vmatmul.mubr.bf16.gmra.mrb[0].mxu0 %v5355
      %v5460 = vpop.f32.mrb[0].mxu0
      %v5461 = vadd.f32 %v5343, %v5460
      %v5462 = vpop.f32.mrb[0].mxu0
      %v5463 = vpop.f32.mrb[0].mxu0
      %v5464 = vadd.f32 %v5343, %v5463
      %v5465 = vpop.f32.mrb[0].mxu0
      %5466 = vmatprep.mubr.bf16.mxu0 0
      %5467 = vmatmul.mubr.bf16.gmra.mrb[0].mxu0 %v5358
      %v5468 = vpop.f32.mrb[0].mxu0
      %v5469 = vadd.f32 %v5343, %v5468
      %v5470 = vpop.f32.mrb[0].mxu0
      %v5471 = vpop.f32.mrb[0].mxu0
      %v5472 = vadd.f32 %v5343, %v5471
      %v5473 = vpop.f32.mrb[0].mxu0
      %5474 = vmatprep.mubr.bf16.mxu0 0
      %5475 = vmatmul.mubr.bf16.gmra.mrb[0].mxu0 %v5361
      %v5476 = vpop.f32.mrb[0].mxu0
      %v5477 = vadd.f32 %v5343, %v5476
      %v5478 = vpop.f32.mrb[0].mxu0
      %v5479 = vpop.f32.mrb[0].mxu0
      %v5480 = vadd.f32 %v5343, %v5479
      %v5481 = vpop.f32.mrb[0].mxu0
      %5482 = vmatprep.mubr.bf16.mxu0 0
      %5483 = vmatmul.mubr.bf16.gmra.mrb[0].mxu0 %v5364
      %v5484 = vpop.f32.mrb[0].mxu0
      %v5485 = vadd.f32 %v5343, %v5484
      %v5486 = vpop.f32.mrb[0].mxu0
      %v5487 = vpop.f32.mrb[0].mxu0
      %v5488 = vadd.f32 %v5343, %v5487
      %v5489 = vpop.f32.mrb[0].mxu0
      %5490 = vmatprep.mubr.bf16.mxu0 0
      %5491 = vmatmul.mubr.bf16.gmra.mrb[0].mxu0 %v5367
      %v5492 = vpop.f32.mrb[0].mxu0
      %v5493 = vadd.f32 %v5343, %v5492
      %v5494 = vpop.f32.mrb[0].mxu0
      %v5495 = vpop.f32.mrb[0].mxu0
      %v5496 = vadd.f32 %v5343, %v5495
      %v5497 = vpop.f32.mrb[0].mxu0
      %5498 = vmatprep.mubr.bf16.mxu0 0
      %5499 = vmatmul.mubr.bf16.gmra.mrb[0].mxu0 %v5370
      %v5500 = vpop.f32.mrb[0].mxu0
      %v5501 = vadd.f32 %v5343, %v5500
      %v5502 = vpop.f32.mrb[0].mxu0
      %v5503 = vpop.f32.mrb[0].mxu0
      %v5504 = vadd.f32 %v5343, %v5503
      %v5505 = vpop.f32.mrb[0].mxu0
      %5506 = vmatprep.mubr.bf16.mxu0 0
      %5507 = vmatmul.mubr.bf16.gmra.mrb[0].mxu0 %v5373
      %v5508 = vpop.f32.mrb[0].mxu0
      %v5509 = vadd.f32 %v5343, %v5508
      %v5510 = vpop.f32.mrb[0].mxu0
      %v5511 = vpop.f32.mrb[0].mxu0
      %v5512 = vadd.f32 %v5343, %v5511
      %v5513 = vpop.f32.mrb[0].mxu0
      %5514 = vmatprep.mubr.bf16.mxu0 0
      %5515 = vmatmul.mubr.bf16.gmra.mrb[0].mxu0 %v5376
      %v5516 = vpop.f32.mrb[0].mxu0
      %v5517 = vadd.f32 %v5343, %v5516
      %v5518 = vpop.f32.mrb[0].mxu0
      %v5519 = vpop.f32.mrb[0].mxu0
      %v5520 = vadd.f32 %v5343, %v5519
      %v5521 = vpop.f32.mrb[0].mxu0
      %5522 = vmatprep.mubr.bf16.mxu0 0
      %5523 = vmatmul.mubr.bf16.gmra.mrb[0].mxu0 %v5379
      %v5524 = vpop.f32.mrb[0].mxu0
      %v5525 = vadd.f32 %v5343, %v5524
      %v5526 = vpop.f32.mrb[0].mxu0
      %v5527 = vpop.f32.mrb[0].mxu0
      %v5528 = vadd.f32 %v5343, %v5527
      %v5529 = vpop.f32.mrb[0].mxu0
      %5530 = vmatprep.mubr.bf16.mxu0 0
      %5531 = vmatmul.mubr.bf16.gmra.mrb[0].mxu0 %v5382
      %v5532 = vpop.f32.mrb[0].mxu0
      %v5533 = vadd.f32 %v5343, %v5532
      %v5534 = vpop.f32.mrb[0].mxu0
      %v5535 = vpop.f32.mrb[0].mxu0
      %v5536 = vadd.f32 %v5343, %v5535
      %v5537 = vpop.f32.mrb[0].mxu0
      %5538 = vmatprep.mubr.bf16.mxu0 0
      %5539 = vmatmul.mubr.bf16.gmra.mrb[0].mxu0 %v5385
      %v5540 = vpop.f32.mrb[0].mxu0
      %v5541 = vadd.f32 %v5343, %v5540
      %v5542 = vpop.f32.mrb[0].mxu0
      %v5543 = vpop.f32.mrb[0].mxu0
      %v5544 = vadd.f32 %v5343, %v5543
      %v5545 = vpop.f32.mrb[0].mxu0
      %5546 = vmatprep.mubr.bf16.mxu0 0
      %5547 = vmatmul.mubr.bf16.gmra.mrb[0].mxu0 %v5388
      %v5548 = vpop.f32.mrb[0].mxu0
      %v5549 = vadd.f32 %v5343, %v5548
      %v5550 = vpop.f32.mrb[0].mxu0
      %v5551 = vpop.f32.mrb[0].mxu0
      %v5552 = vadd.f32 %v5343, %v5551
      %v5553 = vpop.f32.mrb[0].mxu0
      %5554 = vmatprep.mubr.bf16.mxu0 0
      %5555 = vmatmul.mubr.bf16.gmra.mrb[0].mxu0 %v5391
      %v5556 = vpop.f32.mrb[0].mxu0
      %v5557 = vadd.f32 %v5343, %v5556
      %v5558 = vpop.f32.mrb[0].mxu0
      %v5559 = vpop.f32.mrb[0].mxu0
      %v5560 = vadd.f32 %v5343, %v5559
      %v5561 = vpop.f32.mrb[0].mxu0
      %5562 = vmatprep.mubr.bf16.mxu0 0
      %5563 = vmatmul.mubr.bf16.gmra.mrb[0].mxu0 %v5394
      %v5564 = vpop.f32.mrb[0].mxu0
      %v5565 = vadd.f32 %v5343, %v5564
      %v5566 = vpop.f32.mrb[0].mxu0
      %v5567 = vpop.f32.mrb[0].mxu0
      %v5568 = vadd.f32 %v5343, %v5567
      %v5569 = vpop.f32.mrb[0].mxu0
      %5570 = vmatprep.mubr.bf16.mxu0 0
      %5571 = vmatmul.mubr.bf16.gmra.mrb[0].mxu0 %v5397
      %v5572 = vpop.f32.mrb[0].mxu0
      %v5573 = vadd.f32 %v5343, %v5572
      %v5574 = vpop.f32.mrb[0].mxu0
      %v5575 = vpop.f32.mrb[0].mxu0
      %v5576 = vadd.f32 %v5343, %v5575
      %v5577 = vpop.f32.mrb[0].mxu0
      %5578 = vdwg.mxu0
      %5579 = vst [vmem:[%s260] sm:$0xff] %v5437
      %5580 = vst [vmem:[%s260 + $0x8] sm:$0xff] %v5440
      %5581 = vst [vmem:[%s260 + $0x10] sm:$0xff] %v5445
      %5582 = vst [vmem:[%s260 + $0x18] sm:$0xff] %v5448
      %5583 = vst [vmem:[%s260 + $0x20] sm:$0xff] %v5453
      %5584 = vst [vmem:[%s260 + $0x28] sm:$0xff] %v5456
      %5585 = vst [vmem:[%s260 + $0x30] sm:$0xff] %v5461
      %5586 = vst [vmem:[%s260 + $0x38] sm:$0xff] %v5464
      %5587 = vst [vmem:[%s260 + $0x40] sm:$0xff] %v5469
      %5588 = vst [vmem:[%s260 + $0x48] sm:$0xff] %v5472
      %5589 = vst [vmem:[%s260 + $0x50] sm:$0xff] %v5477
      %5590 = vst [vmem:[%s260 + $0x58] sm:$0xff] %v5480
      %5591 = vst [vmem:[%s260 + $0x60] sm:$0xff] %v5485
      %5592 = vst [vmem:[%s260 + $0x68] sm:$0xff] %v5488
      %5593 = vst [vmem:[%s260 + $0x70] sm:$0xff] %v5493
      %5594 = vst [vmem:[%s260 + $0x78] sm:$0xff] %v5496
      %5595 = vst [vmem:[%s260 + $0x80] sm:$0xff] %v5501
      %5596 = vst [vmem:[%s260 + $0x88] sm:$0xff] %v5504
      %5597 = vst [vmem:[%s260 + $0x90] sm:$0xff] %v5509
      %5598 = vst [vmem:[%s260 + $0x98] sm:$0xff] %v5512
      %5599 = vst [vmem:[%s260 + $0xa0] sm:$0xff] %v5517
      %5600 = vst [vmem:[%s260 + $0xa8] sm:$0xff] %v5520
      %5601 = vst [vmem:[%s260 + $0xb0] sm:$0xff] %v5525
      %5602 = vst [vmem:[%s260 + $0xb8] sm:$0xff] %v5528
      %5603 = vst [vmem:[%s260 + $0xc0] sm:$0xff] %v5533
      %5604 = vst [vmem:[%s260 + $0xc8] sm:$0xff] %v5536
      %5605 = vst [vmem:[%s260 + $0xd0] sm:$0xff] %v5541
      %5606 = vst [vmem:[%s260 + $0xd8] sm:$0xff] %v5544
      %5607 = vst [vmem:[%s260 + $0xe0] sm:$0xff] %v5549
      %5608 = vst [vmem:[%s260 + $0xe8] sm:$0xff] %v5552
      %5609 = vst [vmem:[%s260 + $0xf0] sm:$0xff] %v5557
      %5610 = vst [vmem:[%s260 + $0xf8] sm:$0xff] %v5560
      %5611 = vst [vmem:[%s260 + $0x100] sm:$0xff] %v5565
      %5612 = vst [vmem:[%s260 + $0x108] sm:$0xff] %v5568
      %5613 = vst [vmem:[%s260 + $0x110] sm:$0xff] %v5573
      %5614 = vst [vmem:[%s260 + $0x118] sm:$0xff] %v5576
      %p5615 = scmp.lt.s32.totalorder %s20, 1
      %s5616 = scalar_select %p5615, %s20, 1
      %p5617 = scmp.lt.s32.totalorder %s21, 0
      %s5618 = scalar_select %p5617, %s21, 0
      %s5619 = smul.addr %s5618, 36
      %s5620 = smul.addr %s5616, 36
      %s5621 = sadd.s32 %s5619, %s5620
      %s5622 = smul.addr %s5621, 8
      %s5623 = scalar_lea.vmem %s5, %s5622
      // Predicated region
      $region41: #{rpn_head_single_level.1} parent=39 // pred_check
        %p5624 = pneg %p160
      $region42: #{rpn_head_single_level.1} parent=39 // pred_check_branch
        %5626 = sbr.rel (%p5624) target = $region44
      $region43: #{rpn_head_single_level.1} parent=39 // pred_region
        _
      $region44: #{rpn_head_single_level.1} parent=39 // pred_fallthru
        _
    $region40: #{rpn_head_single_level.1} parent=5 // pred_fallthru
      _
    %p5627 = scmp.le.s32.totalorder 2, %s11
    // Predicated region
    $region45: #{rpn_head_single_level.1} parent=5 // pred_check
      %p5628 = pneg %p5627
    $region46: #{rpn_head_single_level.1} parent=5 // pred_check_branch
      %5630 = sbr.rel (%p5628) target = $region48
    $region47: #{rpn_head_single_level.1} parent=5 // pred_region
      %s5631 = ssub.s32 %s11, 2
      // Predicated region
      $region49: #{rpn_head_single_level.1} parent=47 // pred_check
        %p5632 = pneg %p166
      $region50: #{rpn_head_single_level.1} parent=47 // pred_check_branch
        %5634 = sbr.rel (%p5632) target = $region52
      $region51: #{rpn_head_single_level.1} parent=47 // pred_region
        %p5635 = scmp.lt.s32.totalorder %s22, 1
        %s5636 = scalar_select %p5635, %s22, 1
        %p5637 = scmp.lt.s32.totalorder %s23, 0
        %s5638 = scalar_select %p5637, %s23, 0
        %s5639 = smul.addr %s5638, 36
        %s5640 = smul.addr %s5636, 36
        %s5641 = sadd.s32 %s5639, %s5640
        %s5642 = smul.addr %s5641, 8
        %s5643 = scalar_lea.vmem %s5, %s5642
      $region52: #{rpn_head_single_level.1} parent=47 // pred_fallthru
        _
    $region48: #{rpn_head_single_level.1} parent=5 // pred_fallthru
      _
  $region6: #{rpn_head_single_level.1} parent=0 // loop_footer
    %s15 = sadd.s32 1, %s11
  $region7: #{rpn_head_single_level.1} parent=0 // loop_footer_branch
    %10 = sbr.rel target = $region3
  $region8: #{rpn_head_single_level.1} parent=0 // loop_exit
    _

</llo_original>
